<compile_context>
chip_gen: v5e
topology: v5e:2x2
jax: 0.10.0
libtpu: 0.0.40
codegen_flags: <defaults>
</compile_context>

<pallas_src>
import numpy as np
import jax
import jax.numpy as jnp
from jax.experimental import pallas as pl
from jax.experimental.pallas import tpu as pltpu


# ----------------------------------------------------------------------------
# Shared in-kernel math: fused (count-sketch + half-spectrum DFT) matmuls,
# complex product, packed inverse rDFT.  3 MXU launches per pixel tile.
# ----------------------------------------------------------------------------
def _cbp_tile(x1, x2, sf1, sf2, inv_packed, p_ref):
    """x1:[tn,C1] bf16, x2:[tn,C2] bf16, sf*: [C*,2*Dh] bf16,
    inv_packed:[2*Dh,Dp] bf16, p_ref: persistent VMEM scratch [tn,2*Dh] bf16.
    Returns the f32 [tn, Dp] circular-convolution tile (already * output_dim)."""
    dh = p_ref.shape[-1] // 2

    # Forward: count-sketch + half-spectrum DFT fused -> [tn, 2*Dh] = [Re | Im]
    f1 = jnp.dot(x1, sf1, preferred_element_type=jnp.float32)
    f2 = jnp.dot(x2, sf2, preferred_element_type=jnp.float32)
    f1r, f1i = f1[:, :dh], f1[:, dh:]
    f2r, f2i = f2[:, :dh], f2[:, dh:]

    # Complex elementwise product in the frequency domain (f32 on the VPU).
    pr = f1r * f2r - f1i * f2i
    pi_ = f1r * f2i + f1i * f2r

    # Pack [Re | Im] into the persistent bf16 scratch (no lane-axis concat temp).
    p_ref[:, :dh] = pr.astype(jnp.bfloat16)
    p_ref[:, dh:] = pi_.astype(jnp.bfloat16)

    # Packed inverse rDFT; Hermitian bin weights are folded into inv_packed and
    # the ifft's 1/D cancels the module's trailing "* output_dim".
    return jnp.dot(p_ref[...], inv_packed, preferred_element_type=jnp.float32)


def cbp_kernel(x1_ref, x2_ref, sf1_ref, sf2_ref, inv_ref, o_ref, p_ref):
    y = _cbp_tile(x1_ref[...], x2_ref[...], sf1_ref[...], sf2_ref[...],
                  inv_ref[...], p_ref)
    o_ref[...] = y.astype(o_ref.dtype)


def cbp_sum_kernel(x1_ref, x2_ref, sf1_ref, sf2_ref, inv_ref, o_ref,
                   p_ref, acc_ref):
    t = pl.program_id(1)

    @pl.when(t == 0)
    def _():
        acc_ref[...] = jnp.zeros_like(acc_ref)

    y = _cbp_tile(x1_ref[0], x2_ref[0], sf1_ref[...], sf2_ref[...],
                  inv_ref[...], p_ref)
    acc_ref[...] += jnp.sum(y, axis=0, keepdims=True)
    # Write every step (standard accumulator pattern); HBM writeback happens
    # only when the per-batch output block is done.
    o_ref[0] = acc_ref[...].astype(o_ref.dtype)


# ----------------------------------------------------------------------------
# Parameter construction (deterministic, mirrors the PyTorch __init__ seeds)
# ----------------------------------------------------------------------------
def _sketch_matrix(rand_h, rand_s, output_dim):
    input_dim = len(rand_h)
    m = np.zeros((input_dim, output_dim), dtype=np.float32)
    # duplicate indices accumulate, matching torch.sparse -> to_dense()
    np.add.at(m, (np.arange(input_dim), np.asarray(rand_h)),
              np.asarray(rand_s, dtype=np.float32))
    return m


def make_params(input_dim1, input_dim2, output_dim, lane=128):
    np.random.seed(1)
    rand_h_1 = np.random.randint(output_dim, size=input_dim1)
    np.random.seed(3)
    rand_s_1 = 2 * np.random.randint(2, size=input_dim1) - 1
    np.random.seed(5)
    rand_h_2 = np.random.randint(output_dim, size=input_dim2)
    np.random.seed(7)
    rand_s_2 = 2 * np.random.randint(2, size=input_dim2) - 1

    S1 = _sketch_matrix(rand_h_1, rand_s_1, output_dim)
    S2 = _sketch_matrix(rand_h_2, rand_s_2, output_dim)

    D = int(output_dim)
    Kh = D // 2 + 1                               # rFFT bins (Hermitian symmetry)
    Dh = ((Kh + lane - 1) // lane) * lane         # lane-padded half spectrum
    Dp = ((D + lane - 1) // lane) * lane          # lane-padded output_dim

    n = np.arange(D)
    k = np.arange(Kh)
    ang = 2.0 * np.pi * np.outer(n, k) / D        # [D, Kh]
    cosF = np.cos(ang).astype(np.float32)
    sinF = np.sin(ang).astype(np.float32)

    # Packed forward operator per input (count-sketch fused with half-DFT):
    # [C, 2*Dh] = S @ [cos | -sin], zero-padded per half on the lane axis.
    def pack_fwd(S):
        C = S.shape[0]
        out = np.zeros((C, 2 * Dh), dtype=np.float32)
        out[:, :Kh] = S @ cosF
        out[:, Dh:Dh + Kh] = S @ (-sinF)
        return out

    SF1 = pack_fwd(S1)
    SF2 = pack_fwd(S2)

    # Hermitian weights: non-DC (and non-Nyquist for even D) bins count twice.
    w = np.full((Kh,), 2.0, dtype=np.float32)
    w[0] = 1.0
    if D % 2 == 0:
        w[-1] = 1.0

    # Packed inverse operator (real output, unnormalized): [2*Dh, Dp].
    #   out[n] = sum_k w_k * (Pr[k] cos(2*pi*k*n/D) - Pi[k] sin(2*pi*k*n/D))
    Inv = np.zeros((2 * Dh, Dp), dtype=np.float32)
    Inv[:Kh, :D] = w[:, None] * cosF.T
    Inv[Dh:Dh + Kh, :D] = -(w[:, None] * sinF.T)

    return dict(
        SF1=jnp.asarray(SF1, dtype=jnp.bfloat16),
        SF2=jnp.asarray(SF2, dtype=jnp.bfloat16),
        Inv=jnp.asarray(Inv, dtype=jnp.bfloat16),
        # exact f32 sketch matrices kept only for the pure-JAX reference
        S1=jnp.asarray(S1), S2=jnp.asarray(S2),
        D=D, Dp=Dp, Dh=Dh)


# ----------------------------------------------------------------------------
# Wrapper: NCHW glue, padding, per-generation tiling, pallas_call
# ----------------------------------------------------------------------------
def _tpu_vmem_bytes():
    try:
        return int(getattr(pltpu.get_tpu_info(), "vmem_capacity_bytes", 64 << 20))
    except Exception:
        return 64 << 20    # conservative (v7x-sized) fallback


def _round_up(x, m):
    return ((x + m - 1) // m) * m


def compact_bilinear_pooling(bottom1, bottom2, params, sum_pool=False,
                             tile_n=None):
    B, C1, H, W = bottom1.shape
    _, C2, _, _ = bottom2.shape
    SF1, SF2, Inv = params["SF1"], params["SF2"], params["Inv"]
    D, Dp, Dh = params["D"], params["Dp"], params["Dh"]

    # Per-generation tiling: v5e/v6e (>=128 MiB VMEM, 1 TC) -> big pixel tiles;
    # v7x (64 MiB, 2 TCs) -> smaller tiles so the "parallel" axis has >=2
    # programs to feed both TensorCores.
    vmem_phys = _tpu_vmem_bytes()
    big_vmem = vmem_phys >= (100 << 20)
    if tile_n is None:
        tile_n = 512 if big_vmem else 256
    vmem_cap = (96 << 20) if big_vmem else (48 << 20)

    # NCHW -> [N, C] pixel rows (matches permute(0,2,3,1).view(-1, C)); bf16 in.
    # TODO(synk): accept NHWC directly to drop these relayout passes on v5e.
    x1 = jnp.transpose(bottom1, (0, 2, 3, 1)).reshape(-1, C1).astype(jnp.bfloat16)
    x2 = jnp.transpose(bottom2, (0, 2, 3, 1)).reshape(-1, C2).astype(jnp.bfloat16)
    N = x1.shape[0]
    HW = H * W

    rows_per_block = HW if sum_pool else N
    tile_n = min(tile_n, _round_up(rows_per_block, 8))

    # Explicit VMEM budget (weights counted double-buffered to stay valid even
    # when the single-buffer fallback path is taken).
    weight_bytes = 2 * 2 * (C1 * 2 * Dh + C2 * 2 * Dh + 2 * Dh * Dp)
    work = (weight_bytes
            + 2 * tile_n * (C1 + C2) * 2            # x tiles (bf16, 2-buffered)
            + 2 * tile_n * Dp * 2                   # out tile (bf16, 2-buffered)
            + tile_n * 2 * Dh * 2                   # packed [Re|Im] scratch
            + 3 * tile_n * 2 * Dh * 4)              # f32 intermediates f1/f2/pr/pi
    vmem_limit = int(min(vmem_cap, max(32 << 20, int(1.4 * work))))
    # TODO(synk): for production Dp (>= ~2K) chunk the Inv columns with a second
    # grid axis instead of relying on a single resident [2*Dh, Dp] slab.

    compiler_flat = pltpu.CompilerParams(
        dimension_semantics=("parallel",), vmem_limit_bytes=vmem_limit)
    compiler_sum = pltpu.CompilerParams(
        dimension_semantics=("parallel", "arbitrary"),
        vmem_limit_bytes=vmem_limit)

    def run_flat(single_buffer_weights):
        wkw = dict(pipeline_mode=pl.Buffered(1)) if single_buffer_weights else {}
        n_tiles = pl.cdiv(N, tile_n)
        Np = n_tiles * tile_n
        x1p = jnp.pad(x1, ((0, Np - N), (0, 0))) if Np != N else x1
        x2p = jnp.pad(x2, ((0, Np - N), (0, 0))) if Np != N else x2
        out = pl.pallas_call(
            cbp_kernel,
            out_shape=jax.ShapeDtypeStruct((Np, Dp), jnp.bfloat16),
            grid_spec=pltpu.PrefetchScalarGridSpec(
                num_scalar_prefetch=0,
                grid=(n_tiles,),
                in_specs=[
                    pl.BlockSpec((tile_n, C1), lambda i: (i, 0)),
                    pl.BlockSpec((tile_n, C2), lambda i: (i, 0)),
                    # grid-invariant packed rDFT weights (constant index_map)
                    pl.BlockSpec((C1, 2 * Dh), lambda i: (0, 0), **wkw),
                    pl.BlockSpec((C2, 2 * Dh), lambda i: (0, 0), **wkw),
                    pl.BlockSpec((2 * Dh, Dp), lambda i: (0, 0), **wkw),
                ],
                out_specs=pl.BlockSpec((tile_n, Dp), lambda i: (i, 0)),
                scratch_shapes=[pltpu.VMEM((tile_n, 2 * Dh), jnp.bfloat16)],
            ),
            compiler_params=compiler_flat,
            cost_estimate=pl.CostEstimate(
                flops=2 * Np * 2 * Dh * (C1 + C2 + Dp) + 6 * Np * Dh,
                transcendentals=0,
                bytes_accessed=(Np * (C1 + C2) * 2 + Np * Dp * 2
                                + (C1 + C2 + Dp) * 2 * Dh * 2)),
        )(x1p, x2p, SF1, SF2, Inv)
        return out[:N, :D]

    def run_sum(single_buffer_weights):
        wkw = dict(pipeline_mode=pl.Buffered(1)) if single_buffer_weights else {}
        n_t = pl.cdiv(HW, tile_n)
        Tp = n_t * tile_n
        x1b = x1.reshape(B, HW, C1)
        x2b = x2.reshape(B, HW, C2)
        if Tp != HW:
            x1b = jnp.pad(x1b, ((0, 0), (0, Tp - HW), (0, 0)))
            x2b = jnp.pad(x2b, ((0, 0), (0, Tp - HW), (0, 0)))
        out = pl.pallas_call(
            cbp_sum_kernel,
            out_shape=jax.ShapeDtypeStruct((B, 1, Dp), jnp.bfloat16),
            grid_spec=pltpu.PrefetchScalarGridSpec(
                num_scalar_prefetch=0,
                grid=(B, n_t),
                in_specs=[
                    pl.BlockSpec((1, tile_n, C1), lambda b, t: (b, t, 0)),
                    pl.BlockSpec((1, tile_n, C2), lambda b, t: (b, t, 0)),
                    pl.BlockSpec((C1, 2 * Dh), lambda b, t: (0, 0), **wkw),
                    pl.BlockSpec((C2, 2 * Dh), lambda b, t: (0, 0), **wkw),
                    pl.BlockSpec((2 * Dh, Dp), lambda b, t: (0, 0), **wkw),
                ],
                # per-batch accumulator block (constant over the tile axis)
                out_specs=pl.BlockSpec((1, 1, Dp), lambda b, t: (b, 0, 0)),
                scratch_shapes=[pltpu.VMEM((tile_n, 2 * Dh), jnp.bfloat16),
                                pltpu.VMEM((1, Dp), jnp.float32)],
            ),
            compiler_params=compiler_sum,
        )(x1b, x2b, SF1, SF2, Inv)
        return out[:, 0, :D]

    run = run_sum if sum_pool else run_flat
    try:
        out = run(True)     # single-buffer the grid-invariant weights
    except Exception:
        # pipeline_mode=pl.Buffered(1) not supported by this jax/libtpu build:
        # fall back to default double-buffered weights (identical results).
        out = run(False)

    if sum_pool:
        return out.astype(bottom1.dtype)                       # [B, D]
    cbp = out.reshape(B, H, W, D)                              # bf16, cheap
    # NCHW output to match the module; the relayout runs on bf16 data, then the
    # final cast restores the caller-facing dtype.
    return jnp.transpose(cbp, (0, 3, 1, 2)).astype(bottom1.dtype)


# ----------------------------------------------------------------------------
# Pure-JAX reference (exact f32 math via jnp.fft) for the sanity check
# ----------------------------------------------------------------------------
def reference(bottom1, bottom2, params, sum_pool=False):
    B, C1, H, W = bottom1.shape
    _, C2, _, _ = bottom2.shape
    D = params["D"]
    x1 = jnp.transpose(bottom1, (0, 2, 3, 1)).reshape(-1, C1)
    x2 = jnp.transpose(bottom2, (0, 2, 3, 1)).reshape(-1, C2)
    s1 = x1 @ params["S1"]
    s2 = x2 @ params["S2"]
    cbp = jnp.real(jnp.fft.ifft(jnp.fft.fft(s1, axis=-1) *
                                jnp.fft.fft(s2, axis=-1), axis=-1)) * D
    cbp = cbp.reshape(B, H, W, D)
    if sum_pool:
        return cbp.sum(axis=(1, 2))
    return jnp.transpose(cbp, (0, 3, 1, 2))


if __name__ == "__main__":
    B, H, W = 2, 16, 16
    input_dim1, input_dim2, output_dim = 8, 8, 64   # D=64 exercises lane padding

    key = jax.random.PRNGKey(0)
    k1, k2 = jax.random.split(key)
    bottom1 = jax.random.normal(k1, (B, input_dim1, H, W), dtype=jnp.float32)
    bottom2 = jax.random.normal(k2, (B, input_dim2, H, W), dtype=jnp.float32)

    params = make_params(input_dim1, input_dim2, output_dim)

    # --- no spatial pooling (module default) ---------------------------------
    out = compact_bilinear_pooling(bottom1, bottom2, params, sum_pool=False)
    out = jax.block_until_ready(out)
    assert out.shape == (B, output_dim, H, W), out.shape

    ref = np.asarray(reference(bottom1, bottom2, params, sum_pool=False))
    got = np.asarray(out, dtype=np.float32)
    # bf16 operands/output with f32 accumulation: normalized max error check
    err = np.max(np.abs(got - ref)) / (np.max(np.abs(ref)) + 1e-6)
    assert err < 3e-2, f"normalized max error too large: {err:.4g}"

    # --- fused in-kernel sum pooling ------------------------------------------
    out_s = compact_bilinear_pooling(bottom1, bottom2, params, sum_pool=True)
    out_s = jax.block_until_ready(out_s)
    assert out_s.shape == (B, output_dim), out_s.shape

    ref_s = np.asarray(reference(bottom1, bottom2, params, sum_pool=True))
    got_s = np.asarray(out_s, dtype=np.float32)
    err_s = np.max(np.abs(got_s - ref_s)) / (np.max(np.abs(ref_s)) + 1e-6)
    assert err_s < 5e-2, f"sum_pool normalized max error too large: {err_s:.4g}"

    print("KERNEL_OK")
</pallas_src>

<mosaic_0001>
module attributes {stable_mosaic.version = 11 : i64} {
  func.func @cbp_kernel(%arg0: i32, %arg1: memref<256x8xbf16, #tpu.memory_space<vmem>>, %arg2: memref<256x8xbf16, #tpu.memory_space<vmem>>, %arg3: memref<8x256xbf16, #tpu.memory_space<vmem>>, %arg4: memref<8x256xbf16, #tpu.memory_space<vmem>>, %arg5: memref<256x128xbf16, #tpu.memory_space<vmem>>, %arg6: memref<256x128xbf16, #tpu.memory_space<vmem>>, %arg7: memref<256x256xbf16, #tpu.memory_space<vmem>>) attributes {dimension_semantics = [#tpu.dimension_semantics<parallel>], iteration_bounds = array<i64: 2>, scalar_prefetch = 0 : i64, scratch_operands = 1 : i64, tpu.core_type = #tpu.core_type<tc>, window_params = [{transform_indices = @transform_0, window_bounds = array<i64: 256, 8>}, {transform_indices = @transform_1, window_bounds = array<i64: 256, 8>}, {pipeline_mode = #tpu.pipeline_mode<synchronous>, transform_indices = @transform_2, window_bounds = array<i64: 8, 256>}, {pipeline_mode = #tpu.pipeline_mode<synchronous>, transform_indices = @transform_3, window_bounds = array<i64: 8, 256>}, {pipeline_mode = #tpu.pipeline_mode<synchronous>, transform_indices = @transform_4, window_bounds = array<i64: 256, 128>}, {transform_indices = @transform_5, window_bounds = array<i64: 256, 128>}]} {
    %c0 = arith.constant 0 : index
    %c0_0 = arith.constant 0 : index
    %0 = vector.load %arg1[%c0, %c0_0] : memref<256x8xbf16, #tpu.memory_space<vmem>>, vector<256x8xbf16>
    %c0_1 = arith.constant 0 : index
    %c0_2 = arith.constant 0 : index
    %1 = vector.load %arg2[%c0_1, %c0_2] : memref<256x8xbf16, #tpu.memory_space<vmem>>, vector<256x8xbf16>
    %c0_3 = arith.constant 0 : index
    %c0_4 = arith.constant 0 : index
    %2 = vector.load %arg3[%c0_3, %c0_4] : memref<8x256xbf16, #tpu.memory_space<vmem>>, vector<8x256xbf16>
    %c0_5 = arith.constant 0 : index
    %c0_6 = arith.constant 0 : index
    %3 = vector.load %arg4[%c0_5, %c0_6] : memref<8x256xbf16, #tpu.memory_space<vmem>>, vector<8x256xbf16>
    %c0_7 = arith.constant 0 : index
    %c0_8 = arith.constant 0 : index
    %4 = vector.load %arg5[%c0_7, %c0_8] : memref<256x128xbf16, #tpu.memory_space<vmem>>, vector<256x128xbf16>
    %cst = arith.constant dense<0.000000e+00> : vector<256x256xf32>
    %5 = tpu.matmul %0, %2, %cst {dimension_numbers = #tpu.dot_dimension_numbers<[1], [0], [0], [1], [0, 0, 1, 1], [], []>} : vector<256x8xbf16>, vector<8x256xbf16>, vector<256x256xf32> -> vector<256x256xf32>
    %cst_9 = arith.constant dense<0.000000e+00> : vector<256x256xf32>
    %6 = tpu.matmul %1, %3, %cst_9 {dimension_numbers = #tpu.dot_dimension_numbers<[1], [0], [0], [1], [0, 0, 1, 1], [], []>} : vector<256x8xbf16>, vector<8x256xbf16>, vector<256x256xf32> -> vector<256x256xf32>
    %7 = vector.extract_strided_slice %5 {offsets = [0, 0], sizes = [256, 128], strides = [1, 1]} : vector<256x256xf32> to vector<256x128xf32>
    %8 = vector.extract_strided_slice %5 {offsets = [0, 128], sizes = [256, 128], strides = [1, 1]} : vector<256x256xf32> to vector<256x128xf32>
    %9 = vector.extract_strided_slice %6 {offsets = [0, 0], sizes = [256, 128], strides = [1, 1]} : vector<256x256xf32> to vector<256x128xf32>
    %10 = vector.extract_strided_slice %6 {offsets = [0, 128], sizes = [256, 128], strides = [1, 1]} : vector<256x256xf32> to vector<256x128xf32>
    %11 = arith.mulf %7, %9 : vector<256x128xf32>
    %12 = arith.mulf %8, %10 : vector<256x128xf32>
    %13 = arith.subf %11, %12 : vector<256x128xf32>
    %14 = arith.mulf %7, %10 : vector<256x128xf32>
    %15 = arith.mulf %8, %9 : vector<256x128xf32>
    %16 = arith.addf %14, %15 : vector<256x128xf32>
    %17 = arith.truncf %13 : vector<256x128xf32> to vector<256x128xbf16>
    %c0_10 = arith.constant 0 : index
    %c0_11 = arith.constant 0 : index
    %18 = vector.load %arg7[%c0_10, %c0_11] : memref<256x256xbf16, #tpu.memory_space<vmem>>, vector<256x128xbf16>
    tpu.vector_store %arg7[%c0_10, %c0_11], %17 {strides = array<i32>} : memref<256x256xbf16, #tpu.memory_space<vmem>>, vector<256x128xbf16>,
    %19 = arith.truncf %16 : vector<256x128xf32> to vector<256x128xbf16>
    %c0_12 = arith.constant 0 : index
    %c128 = arith.constant 128 : index
    %20 = vector.load %arg7[%c0_12, %c128] : memref<256x256xbf16, #tpu.memory_space<vmem>>, vector<256x128xbf16>
    tpu.vector_store %arg7[%c0_12, %c128], %19 {strides = array<i32>} : memref<256x256xbf16, #tpu.memory_space<vmem>>, vector<256x128xbf16>,
    %c0_13 = arith.constant 0 : index
    %c0_14 = arith.constant 0 : index
    %21 = vector.load %arg7[%c0_13, %c0_14] : memref<256x256xbf16, #tpu.memory_space<vmem>>, vector<256x256xbf16>
    %cst_15 = arith.constant dense<0.000000e+00> : vector<256x128xf32>
    %22 = tpu.matmul %21, %4, %cst_15 {dimension_numbers = #tpu.dot_dimension_numbers<[1], [0], [0], [1], [0, 0, 1, 1], [], []>} : vector<256x256xbf16>, vector<256x128xbf16>, vector<256x128xf32> -> vector<256x128xf32>
    %23 = arith.truncf %22 : vector<256x128xf32> to vector<256x128xbf16>
    %c0_16 = arith.constant 0 : index
    %c0_17 = arith.constant 0 : index
    %24 = vector.load %arg6[%c0_16, %c0_17] : memref<256x128xbf16, #tpu.memory_space<vmem>>, vector<256x128xbf16>
    tpu.vector_store %arg6[%c0_16, %c0_17], %23 {strides = array<i32>} : memref<256x128xbf16, #tpu.memory_space<vmem>>, vector<256x128xbf16>,
    return
  }
  func.func @transform_0(%arg0: i32) -> (i32, i32) {
    %c0_i32 = arith.constant 0 : i32
    %c0_i32_0 = arith.constant 0 : i32
    return %arg0, %c0_i32 : i32, i32
  }
  func.func @transform_1(%arg0: i32) -> (i32, i32) {
    %c0_i32 = arith.constant 0 : i32
    %c0_i32_0 = arith.constant 0 : i32
    return %arg0, %c0_i32 : i32, i32
  }
  func.func @transform_2(%arg0: i32) -> (i32, i32) {
    %c0_i32 = arith.constant 0 : i32
    %c0_i32_0 = arith.constant 0 : i32
    %c0_i32_1 = arith.constant 0 : i32
    return %c0_i32, %c0_i32_0 : i32, i32
  }
  func.func @transform_3(%arg0: i32) -> (i32, i32) {
    %c0_i32 = arith.constant 0 : i32
    %c0_i32_0 = arith.constant 0 : i32
    %c0_i32_1 = arith.constant 0 : i32
    return %c0_i32, %c0_i32_0 : i32, i32
  }
  func.func @transform_4(%arg0: i32) -> (i32, i32) {
    %c0_i32 = arith.constant 0 : i32
    %c0_i32_0 = arith.constant 0 : i32
    %c0_i32_1 = arith.constant 0 : i32
    return %c0_i32, %c0_i32_0 : i32, i32
  }
  func.func @transform_5(%arg0: i32) -> (i32, i32) {
    %c0_i32 = arith.constant 0 : i32
    %c0_i32_0 = arith.constant 0 : i32
    return %arg0, %c0_i32 : i32, i32
  }
}

module attributes {stable_mosaic.version = 11 : i64} {
  func.func @cbp_kernel(%arg0: i32, %arg1: memref<256x8xbf16, #tpu.memory_space<vmem>>, %arg2: memref<256x8xbf16, #tpu.memory_space<vmem>>, %arg3: memref<8x256xbf16, #tpu.memory_space<vmem>>, %arg4: memref<8x256xbf16, #tpu.memory_space<vmem>>, %arg5: memref<256x128xbf16, #tpu.memory_space<vmem>>, %arg6: memref<256x128xbf16, #tpu.memory_space<vmem>>, %arg7: memref<256x256xbf16, #tpu.memory_space<vmem>>) attributes {dimension_semantics = [#tpu.dimension_semantics<parallel>], iteration_bounds = array<i64: 2>, scalar_prefetch = 0 : i64, scratch_operands = 1 : i64, tpu.core_type = #tpu.core_type<tc>, window_params = [{transform_indices = @transform_0, window_bounds = array<i64: 256, 8>}, {transform_indices = @transform_1, window_bounds = array<i64: 256, 8>}, {pipeline_mode = #tpu.pipeline_mode<synchronous>, transform_indices = @transform_2, window_bounds = array<i64: 8, 256>}, {pipeline_mode = #tpu.pipeline_mode<synchronous>, transform_indices = @transform_3, window_bounds = array<i64: 8, 256>}, {pipeline_mode = #tpu.pipeline_mode<synchronous>, transform_indices = @transform_4, window_bounds = array<i64: 256, 128>}, {transform_indices = @transform_5, window_bounds = array<i64: 256, 128>}]} {
    %c0 = arith.constant 0 : index
    %c0_0 = arith.constant 0 : index
    %0 = vector.load %arg1[%c0, %c0_0] : memref<256x8xbf16, #tpu.memory_space<vmem>>, vector<256x8xbf16>
    %c0_1 = arith.constant 0 : index
    %c0_2 = arith.constant 0 : index
    %1 = vector.load %arg2[%c0_1, %c0_2] : memref<256x8xbf16, #tpu.memory_space<vmem>>, vector<256x8xbf16>
    %c0_3 = arith.constant 0 : index
    %c0_4 = arith.constant 0 : index
    %2 = vector.load %arg3[%c0_3, %c0_4] : memref<8x256xbf16, #tpu.memory_space<vmem>>, vector<8x256xbf16>
    %c0_5 = arith.constant 0 : index
    %c0_6 = arith.constant 0 : index
    %3 = vector.load %arg4[%c0_5, %c0_6] : memref<8x256xbf16, #tpu.memory_space<vmem>>, vector<8x256xbf16>
    %c0_7 = arith.constant 0 : index
    %c0_8 = arith.constant 0 : index
    %4 = vector.load %arg5[%c0_7, %c0_8] : memref<256x128xbf16, #tpu.memory_space<vmem>>, vector<256x128xbf16>
    %cst = arith.constant dense<0.000000e+00> : vector<256x256xf32>
    %5 = tpu.matmul %0, %2, %cst {dimension_numbers = #tpu.dot_dimension_numbers<[1], [0], [0], [1], [0, 0, 1, 1], [], []>} : vector<256x8xbf16>, vector<8x256xbf16>, vector<256x256xf32> -> vector<256x256xf32>
    %cst_9 = arith.constant dense<0.000000e+00> : vector<256x256xf32>
    %6 = tpu.matmul %1, %3, %cst_9 {dimension_numbers = #tpu.dot_dimension_numbers<[1], [0], [0], [1], [0, 0, 1, 1], [], []>} : vector<256x8xbf16>, vector<8x256xbf16>, vector<256x256xf32> -> vector<256x256xf32>
    %7 = vector.extract_strided_slice %5 {offsets = [0, 0], sizes = [256, 128], strides = [1, 1]} : vector<256x256xf32> to vector<256x128xf32>
    %8 = vector.extract_strided_slice %5 {offsets = [0, 128], sizes = [256, 128], strides = [1, 1]} : vector<256x256xf32> to vector<256x128xf32>
    %9 = vector.extract_strided_slice %6 {offsets = [0, 0], sizes = [256, 128], strides = [1, 1]} : vector<256x256xf32> to vector<256x128xf32>
    %10 = vector.extract_strided_slice %6 {offsets = [0, 128], sizes = [256, 128], strides = [1, 1]} : vector<256x256xf32> to vector<256x128xf32>
    %11 = arith.mulf %7, %9 : vector<256x128xf32>
    %12 = arith.mulf %8, %10 : vector<256x128xf32>
    %13 = arith.subf %11, %12 : vector<256x128xf32>
    %14 = arith.mulf %7, %10 : vector<256x128xf32>
    %15 = arith.mulf %8, %9 : vector<256x128xf32>
    %16 = arith.addf %14, %15 : vector<256x128xf32>
    %17 = arith.truncf %13 : vector<256x128xf32> to vector<256x128xbf16>
    %c0_10 = arith.constant 0 : index
    %c0_11 = arith.constant 0 : index
    %18 = vector.load %arg7[%c0_10, %c0_11] : memref<256x256xbf16, #tpu.memory_space<vmem>>, vector<256x128xbf16>
    tpu.vector_store %arg7[%c0_10, %c0_11], %17 {strides = array<i32>} : memref<256x256xbf16, #tpu.memory_space<vmem>>, vector<256x128xbf16>,
    %19 = arith.truncf %16 : vector<256x128xf32> to vector<256x128xbf16>
    %c0_12 = arith.constant 0 : index
    %c128 = arith.constant 128 : index
    %20 = vector.load %arg7[%c0_12, %c128] : memref<256x256xbf16, #tpu.memory_space<vmem>>, vector<256x128xbf16>
    tpu.vector_store %arg7[%c0_12, %c128], %19 {strides = array<i32>} : memref<256x256xbf16, #tpu.memory_space<vmem>>, vector<256x128xbf16>,
    %c0_13 = arith.constant 0 : index
    %c0_14 = arith.constant 0 : index
    %21 = vector.load %arg7[%c0_13, %c0_14] : memref<256x256xbf16, #tpu.memory_space<vmem>>, vector<256x256xbf16>
    %cst_15 = arith.constant dense<0.000000e+00> : vector<256x128xf32>
    %22 = tpu.matmul %21, %4, %cst_15 {dimension_numbers = #tpu.dot_dimension_numbers<[1], [0], [0], [1], [0, 0, 1, 1], [], []>} : vector<256x256xbf16>, vector<256x128xbf16>, vector<256x128xf32> -> vector<256x128xf32>
    %23 = arith.truncf %22 : vector<256x128xf32> to vector<256x128xbf16>
    %c0_16 = arith.constant 0 : index
    %c0_17 = arith.constant 0 : index
    %24 = vector.load %arg6[%c0_16, %c0_17] : memref<256x128xbf16, #tpu.memory_space<vmem>>, vector<256x128xbf16>
    tpu.vector_store %arg6[%c0_16, %c0_17], %23 {strides = array<i32>} : memref<256x128xbf16, #tpu.memory_space<vmem>>, vector<256x128xbf16>,
    return
  }
  func.func @transform_0(%arg0: i32) -> (i32, i32) {
    %c0_i32 = arith.constant 0 : i32
    %c0_i32_0 = arith.constant 0 : i32
    return %arg0, %c0_i32 : i32, i32
  }
  func.func @transform_1(%arg0: i32) -> (i32, i32) {
    %c0_i32 = arith.constant 0 : i32
    %c0_i32_0 = arith.constant 0 : i32
    return %arg0, %c0_i32 : i32, i32
  }
  func.func @transform_2(%arg0: i32) -> (i32, i32) {
    %c0_i32 = arith.constant 0 : i32
    %c0_i32_0 = arith.constant 0 : i32
    %c0_i32_1 = arith.constant 0 : i32
    return %c0_i32, %c0_i32_0 : i32, i32
  }
  func.func @transform_3(%arg0: i32) -> (i32, i32) {
    %c0_i32 = arith.constant 0 : i32
    %c0_i32_0 = arith.constant 0 : i32
    %c0_i32_1 = arith.constant 0 : i32
    return %c0_i32, %c0_i32_0 : i32, i32
  }
  func.func @transform_4(%arg0: i32) -> (i32, i32) {
    %c0_i32 = arith.constant 0 : i32
    %c0_i32_0 = arith.constant 0 : i32
    %c0_i32_1 = arith.constant 0 : i32
    return %c0_i32, %c0_i32_0 : i32, i32
  }
  func.func @transform_5(%arg0: i32) -> (i32, i32) {
    %c0_i32 = arith.constant 0 : i32
    %c0_i32_0 = arith.constant 0 : i32
    return %arg0, %c0_i32 : i32, i32
  }
}

</mosaic_0001>

<llo_original>
// kernel: tpu_custom_call.1
$region0: #{tpu_custom_call.1}
  #allocation0 [shape = 'u32[]', space=smem, size = 0x4, offset = 0x4, fixed_abs, tag = 'smem constant byte address 0x4 - core index']
  #allocation1 [shape = 'u32[72,128]{1,0:T(1,128)}', space=vmem, size = 0x9000, scoped, tag = 'internal scratch']
  #allocation2 [shape = 'bf16[256,256]{1,0:T(8,128)(2,1)}', space=vmem, size = 0x20000, scoped, tag = 'scratch operand']
  %s0 = inlined_call_operand.vmem [shape: bf16[512,8], index: 0, kind: input, shape index: {}]
  %s1 = inlined_call_operand.vmem [shape: bf16[512,8], index: 1, kind: input, shape index: {}]
  %s2 = inlined_call_operand.vmem [shape: bf16[8,256], index: 2, kind: input, shape index: {}]
  %s3 = inlined_call_operand.vmem [shape: bf16[8,256], index: 3, kind: input, shape index: {}]
  %s4 = inlined_call_operand.vmem [shape: bf16[256,128], index: 4, kind: input, shape index: {}]
  %s5 = inlined_call_operand.hbm [shape: bf16[512,128], index: 5, kind: output, shape index: {}]
  %s6 = sld [smem:[#allocation0]]
  $region53: #{tpu_custom_call.1} parent=0
    _
  %s8 = ssub.s32 1, %s6
  %s9 = scalar_select 0, %s8, %s6
  $region1: #{tpu_custom_call.1} parent=0
    #allocation3 [shape = 'u8[131072]{0}', space=vmem, size = 0x20000, scoped, tag = 'output window, operand 0']
    #allocation4 [shape = 's32[2]{0}', space=sflag, size = 0x8, scoped, tag = 'scoped memory for tpu_custom_call.1']
    %10 = vsyncpa [#allocation4], 0
    %s11 = scalar_lea.sflag [#allocation4], 1
    %12 = vsyncpa %s11, 0
    loop: start=0, step=1, limit=4
    $region2: #{tpu_custom_call.1} parent=1 // loop_pre_header
      _
    $region3: #{tpu_custom_call.1} parent=1 // loop_header
      %s14 = sphi 0, %s18
      %p15 = scmp.ge.s32.totalorder %s14, 4
      %s24 = sphi 0, %s26
      %s27 = sphi 0, %s24
      %s28 = sphi 0, %s27
      %s44 = sphi 0, %s28
      %s50 = sphi 0, %s52
      %s53 = sphi 0, %s50
      %s54 = sphi 0, %s53
      %s70 = sphi 0, %s54
      %s74 = sphi 0, %s74
      %s76 = sphi 0, %s74
      %s77 = sphi 0, %s76
      %s91 = sphi 0, %s77
      %s95 = sphi 0, %s95
      %s97 = sphi 0, %s95
      %s98 = sphi 0, %s97
      %s112 = sphi 0, %s98
      %s116 = sphi 0, %s116
      %s118 = sphi 0, %s116
      %s119 = sphi 0, %s118
      %s133 = sphi 0, %s119
      %s139 = sphi 0, %s141
      %s142 = sphi 0, %s139
      %s143 = sphi 0, %s142
      %s159 = sphi 0, %s143
    $region4: #{tpu_custom_call.1} parent=1 // loop_header_branch
      %17 = sbr.rel (%p15) target = $region8
    $region5: #{tpu_custom_call.1} parent=1 // loop_body
      %s19 = ssub.s32 %s14, 1
      %s20 = ssub.s32 %s14, 2
      %s21 = sadd.s32 %s14, 1
      %s22 = ssub.s32 %s14, %s21
      %p23 = scmp.eq.s32.totalorder %s22, 0
      %s25 = sadd.s32 %s24, 1
      %s26 = scalar_select %p23, %s24, %s25
      %p29 = pneg %p23
      %p30 = scmp.eq.s32.totalorder %s14, 1
      %p31 = por %p29, %p30
      %p32 = scmp.ne.s32.totalorder %s24, %s27
      %p33 = scmp.eq.s32.totalorder %s14, 0
      %p34 = por %p32, %p33
      %p35 = scmp.ne.s32.totalorder %s24, %s27
      %p36 = scmp.eq.s32.totalorder %s19, 1
      %p37 = por %p35, %p36
      %p38 = scmp.ne.s32.totalorder %s27, %s28
      %p39 = scmp.eq.s32.totalorder %s19, 0
      %p40 = por %p38, %p39
      %p41 = scmp.ne.s32.totalorder %s27, %s28
      %p42 = scmp.eq.s32.totalorder %s20, 1
      %p43 = por %p41, %p42
      %p45 = scmp.ne.s32.totalorder %s28, %s44
      %p46 = scmp.eq.s32.totalorder %s20, 0
      %p47 = por %p45, %p46
      %s48 = ssub.s32 %s14, %s21
      %p49 = scmp.eq.s32.totalorder %s48, 0
      %s51 = sadd.s32 %s50, 1
      %s52 = scalar_select %p49, %s50, %s51
      %p55 = pneg %p49
      %p56 = scmp.eq.s32.totalorder %s14, 1
      %p57 = por %p55, %p56
      %p58 = scmp.ne.s32.totalorder %s50, %s53
      %p59 = scmp.eq.s32.totalorder %s14, 0
      %p60 = por %p58, %p59
      %p61 = scmp.ne.s32.totalorder %s50, %s53
      %p62 = scmp.eq.s32.totalorder %s19, 1
      %p63 = por %p61, %p62
      %p64 = scmp.ne.s32.totalorder %s53, %s54
      %p65 = scmp.eq.s32.totalorder %s19, 0
      %p66 = por %p64, %p65
      %p67 = scmp.ne.s32.totalorder %s53, %s54
      %p68 = scmp.eq.s32.totalorder %s20, 1
      %p69 = por %p67, %p68
      %p71 = scmp.ne.s32.totalorder %s54, %s70
      %p72 = scmp.eq.s32.totalorder %s20, 0
      %p73 = por %p71, %p72
      %s75 = sadd.s32 %s74, 1
      %p78 = scmp.eq.s32.totalorder %s14, 1
      %p79 = scmp.ne.s32.totalorder %s74, %s76
      %p80 = scmp.eq.s32.totalorder %s14, 0
      %p81 = por %p79, %p80
      %p82 = scmp.ne.s32.totalorder %s74, %s76
      %p83 = scmp.eq.s32.totalorder %s19, 1
      %p84 = por %p82, %p83
      %p85 = scmp.ne.s32.totalorder %s76, %s77
      %p86 = scmp.eq.s32.totalorder %s19, 0
      %p87 = por %p85, %p86
      %p88 = scmp.ne.s32.totalorder %s76, %s77
      %p89 = scmp.eq.s32.totalorder %s20, 1
      %p90 = por %p88, %p89
      %p92 = scmp.ne.s32.totalorder %s77, %s91
      %p93 = scmp.eq.s32.totalorder %s20, 0
      %p94 = por %p92, %p93
      %s96 = sadd.s32 %s95, 1
      %p99 = scmp.eq.s32.totalorder %s14, 1
      %p100 = scmp.ne.s32.totalorder %s95, %s97
      %p101 = scmp.eq.s32.totalorder %s14, 0
      %p102 = por %p100, %p101
      %p103 = scmp.ne.s32.totalorder %s95, %s97
      %p104 = scmp.eq.s32.totalorder %s19, 1
      %p105 = por %p103, %p104
      %p106 = scmp.ne.s32.totalorder %s97, %s98
      %p107 = scmp.eq.s32.totalorder %s19, 0
      %p108 = por %p106, %p107
      %p109 = scmp.ne.s32.totalorder %s97, %s98
      %p110 = scmp.eq.s32.totalorder %s20, 1
      %p111 = por %p109, %p110
      %p113 = scmp.ne.s32.totalorder %s98, %s112
      %p114 = scmp.eq.s32.totalorder %s20, 0
      %p115 = por %p113, %p114
      %s117 = sadd.s32 %s116, 1
      %p120 = scmp.eq.s32.totalorder %s14, 1
      %p121 = scmp.ne.s32.totalorder %s116, %s118
      %p122 = scmp.eq.s32.totalorder %s14, 0
      %p123 = por %p121, %p122
      %p124 = scmp.ne.s32.totalorder %s116, %s118
      %p125 = scmp.eq.s32.totalorder %s19, 1
      %p126 = por %p124, %p125
      %p127 = scmp.ne.s32.totalorder %s118, %s119
      %p128 = scmp.eq.s32.totalorder %s19, 0
      %p129 = por %p127, %p128
      %p130 = scmp.ne.s32.totalorder %s118, %s119
      %p131 = scmp.eq.s32.totalorder %s20, 1
      %p132 = por %p130, %p131
      %p134 = scmp.ne.s32.totalorder %s119, %s133
      %p135 = scmp.eq.s32.totalorder %s20, 0
      %p136 = por %p134, %p135
      %s137 = ssub.s32 %s14, %s21
      %p138 = scmp.eq.s32.totalorder %s137, 0
      %s140 = sadd.s32 %s139, 1
      %s141 = scalar_select %p138, %s139, %s140
      %p144 = pneg %p138
      %p145 = scmp.eq.s32.totalorder %s14, 1
      %p146 = por %p144, %p145
      %p147 = scmp.ne.s32.totalorder %s139, %s142
      %p148 = scmp.eq.s32.totalorder %s14, 0
      %p149 = por %p147, %p148
      %p150 = scmp.ne.s32.totalorder %s139, %s142
      %p151 = scmp.eq.s32.totalorder %s19, 1
      %p152 = por %p150, %p151
      %p153 = scmp.ne.s32.totalorder %s142, %s143
      %p154 = scmp.eq.s32.totalorder %s19, 0
      %p155 = por %p153, %p154
      %p156 = scmp.ne.s32.totalorder %s142, %s143
      %p157 = scmp.eq.s32.totalorder %s20, 1
      %p158 = por %p156, %p157
      %p160 = scmp.ne.s32.totalorder %s143, %s159
      %p161 = scmp.eq.s32.totalorder %s20, 0
      %p162 = por %p160, %p161
      %p163 = scmp.le.s32.totalorder 1, %s14
      %p164 = scmp.lt.s32.totalorder %s14, 3
      %p165 = pnand %p163, %p164
      %p166 = pneg %p165
      // Predicated region
      $region9: #{tpu_custom_call.1} parent=5 // pred_check
        _
      $region10: #{tpu_custom_call.1} parent=5 // pred_check_branch
        %168 = sbr.rel (%p165) target = $region12
      $region11: #{tpu_custom_call.1} parent=5 // pred_region
        %s169 = ssub.s32 %s14, 1
        // Predicated region
        $region13: #{tpu_custom_call.1} parent=11 // pred_check
          %p170 = pneg %p87
        $region14: #{tpu_custom_call.1} parent=11 // pred_check_branch
          %172 = sbr.rel (%p170) target = $region16
        $region15: #{tpu_custom_call.1} parent=11 // pred_region
          _
        $region16: #{tpu_custom_call.1} parent=11 // pred_fallthru
          _
        // Predicated region
        $region17: #{tpu_custom_call.1} parent=11 // pred_check
          %p173 = pneg %p108
        $region18: #{tpu_custom_call.1} parent=11 // pred_check_branch
          %175 = sbr.rel (%p173) target = $region20
        $region19: #{tpu_custom_call.1} parent=11 // pred_region
          _
        $region20: #{tpu_custom_call.1} parent=11 // pred_fallthru
          _
        // Predicated region
        $region21: #{tpu_custom_call.1} parent=11 // pred_check
          %p176 = pneg %p129
        $region22: #{tpu_custom_call.1} parent=11 // pred_check_branch
          %178 = sbr.rel (%p176) target = $region24
        $region23: #{tpu_custom_call.1} parent=11 // pred_region
          _
        $region24: #{tpu_custom_call.1} parent=11 // pred_fallthru
          _
      $region12: #{tpu_custom_call.1} parent=5 // pred_fallthru
        _
      %p179 = scmp.lt.s32.totalorder %s14, 2
      // Predicated region
      $region25: #{tpu_custom_call.1} parent=5 // pred_check
        %p180 = pneg %p179
      $region26: #{tpu_custom_call.1} parent=5 // pred_check_branch
        %182 = sbr.rel (%p180) target = $region28
      $region27: #{tpu_custom_call.1} parent=5 // pred_region
        // Predicated region
        $region29: #{tpu_custom_call.1} parent=27 // pred_check
          %p183 = pneg %p34
        $region30: #{tpu_custom_call.1} parent=27 // pred_check_branch
          %185 = sbr.rel (%p183) target = $region32
        $region31: #{tpu_custom_call.1} parent=27 // pred_region
          %s186 = smul.u32 32, %s14
          %p187 = scmp.lt.s32.totalorder %s186, 63
          %s188 = scalar_select %p187, %s186, 63
          %s189 = smul.addr %s188, 4
          %s190 = scalar_lea.vmem %s0, %s189
          %s191 = smul.u32 32, %s14
        $region32: #{tpu_custom_call.1} parent=27 // pred_fallthru
          _
        // Predicated region
        $region33: #{tpu_custom_call.1} parent=27 // pred_check
          %p192 = pneg %p60
        $region34: #{tpu_custom_call.1} parent=27 // pred_check_branch
          %194 = sbr.rel (%p192) target = $region36
        $region35: #{tpu_custom_call.1} parent=27 // pred_region
          %s195 = smul.u32 32, %s14
          %p196 = scmp.lt.s32.totalorder %s195, 63
          %s197 = scalar_select %p196, %s195, 63
          %s198 = smul.addr %s197, 4
          %s199 = scalar_lea.vmem %s1, %s198
          %s200 = smul.u32 32, %s14
        $region36: #{tpu_custom_call.1} parent=27 // pred_fallthru
          _
      $region28: #{tpu_custom_call.1} parent=5 // pred_fallthru
        _
      %p201 = scmp.le.s32.totalorder 1, %s14
      %p202 = scmp.lt.s32.totalorder %s14, 3
      %p203 = pnand %p201, %p202
      %p204 = pneg %p203
      // Predicated region
      $region37: #{tpu_custom_call.1} parent=5 // pred_check
        _
      $region38: #{tpu_custom_call.1} parent=5 // pred_check_branch
        %206 = sbr.rel (%p203) target = $region40
      $region39: #{tpu_custom_call.1} parent=5 // pred_region
        %s207 = ssub.s32 %s14, 1
        %s208 = smul.u32 32, %s19
        %p209 = scmp.lt.s32.totalorder %s208, 63
        %s210 = scalar_select %p209, %s208, 63
        %s211 = smul.addr %s210, 4
        %s212 = scalar_lea.vmem %s0, %s211
        %p213 = pneg %p40
        %p214 = pneg %p37
        %s215 = smul.u32 32, %s19
        %p216 = scmp.lt.s32.totalorder %s215, 63
        %s217 = scalar_select %p216, %s215, 63
        %s218 = smul.addr %s217, 4
        %s219 = scalar_lea.vmem %s1, %s218
        %p220 = pneg %p66
        %p221 = pneg %p63
        %p222 = pneg %p87
        %p223 = pneg %p84
        %p224 = pneg %p108
        %p225 = pneg %p105
        %p226 = pneg %p129
        %p227 = pneg %p126
        %p228 = pneg %p155
        %p229 = pneg %p152
        %s230 = sand.u32 %s142, 1
        %s231 = scalar_lea.sflag [#allocation4], %s230
        %s232 = sand.u32 %s142, 1
        %s233 = smul.addr %s232, 128
        %s234 = scalar_lea.vmem [#allocation3], %s233
        %s235 = smul.u32 32, %s19
        %p236 = scmp.lt.s32.totalorder %s235, 63
        %s237 = scalar_select %p236, %s235, 63
        %s238 = smul.addr %s237, 4
        %s239 = scalar_lea.vmem %s0, %s238
        %s240 = smul.u32 32, %s19
        %s241 = smul.u32 32, %s19
        %p242 = scmp.lt.s32.totalorder %s241, 63
        %s243 = scalar_select %p242, %s241, 63
        %s244 = smul.addr %s243, 4
        %s245 = scalar_lea.vmem %s1, %s244
        %s246 = smul.u32 32, %s19
        %s247 = smul.u32 32, %s19
        %v249 = vld [vmem:[%s239] sm:$0xf]
        %v250 = vld [vmem:[%s239 + $0x4] sm:$0xf]
        %v251 = vld [vmem:[%s239 + $0x8] sm:$0xf]
        %v252 = vld [vmem:[%s239 + $0xc] sm:$0xf]
        %v253 = vld [vmem:[%s239 + $0x10] sm:$0xf]
        %v254 = vld [vmem:[%s239 + $0x14] sm:$0xf]
        %v255 = vld [vmem:[%s239 + $0x18] sm:$0xf]
        %v256 = vld [vmem:[%s239 + $0x1c] sm:$0xf]
        %v257 = vld [vmem:[%s239 + $0x20] sm:$0xf]
        %v258 = vld [vmem:[%s239 + $0x24] sm:$0xf]
        %v259 = vld [vmem:[%s239 + $0x28] sm:$0xf]
        %v260 = vld [vmem:[%s239 + $0x2c] sm:$0xf]
        %v261 = vld [vmem:[%s239 + $0x30] sm:$0xf]
        %v262 = vld [vmem:[%s239 + $0x34] sm:$0xf]
        %v263 = vld [vmem:[%s239 + $0x38] sm:$0xf]
        %v264 = vld [vmem:[%s239 + $0x3c] sm:$0xf]
        %v265 = vld [vmem:[%s239 + $0x40] sm:$0xf]
        %v266 = vld [vmem:[%s239 + $0x44] sm:$0xf]
        %v267 = vld [vmem:[%s239 + $0x48] sm:$0xf]
        %v268 = vld [vmem:[%s239 + $0x4c] sm:$0xf]
        %v269 = vld [vmem:[%s239 + $0x50] sm:$0xf]
        %v270 = vld [vmem:[%s239 + $0x54] sm:$0xf]
        %v271 = vld [vmem:[%s239 + $0x58] sm:$0xf]
        %v272 = vld [vmem:[%s239 + $0x5c] sm:$0xf]
        %v273 = vld [vmem:[%s239 + $0x60] sm:$0xf]
        %v274 = vld [vmem:[%s239 + $0x64] sm:$0xf]
        %v275 = vld [vmem:[%s239 + $0x68] sm:$0xf]
        %v276 = vld [vmem:[%s239 + $0x6c] sm:$0xf]
        %v277 = vld [vmem:[%s239 + $0x70] sm:$0xf]
        %v278 = vld [vmem:[%s239 + $0x74] sm:$0xf]
        %v279 = vld [vmem:[%s239 + $0x78] sm:$0xf]
        %v280 = vld [vmem:[%s239 + $0x7c] sm:$0xf]
        %v281 = vld [vmem:[%s245] sm:$0xf]
        %v282 = vld [vmem:[%s245 + $0x4] sm:$0xf]
        %v283 = vld [vmem:[%s245 + $0x8] sm:$0xf]
        %v284 = vld [vmem:[%s245 + $0xc] sm:$0xf]
        %v285 = vld [vmem:[%s245 + $0x10] sm:$0xf]
        %v286 = vld [vmem:[%s245 + $0x14] sm:$0xf]
        %v287 = vld [vmem:[%s245 + $0x18] sm:$0xf]
        %v288 = vld [vmem:[%s245 + $0x1c] sm:$0xf]
        %v289 = vld [vmem:[%s245 + $0x20] sm:$0xf]
        %v290 = vld [vmem:[%s245 + $0x24] sm:$0xf]
        %v291 = vld [vmem:[%s245 + $0x28] sm:$0xf]
        %v292 = vld [vmem:[%s245 + $0x2c] sm:$0xf]
        %v293 = vld [vmem:[%s245 + $0x30] sm:$0xf]
        %v294 = vld [vmem:[%s245 + $0x34] sm:$0xf]
        %v295 = vld [vmem:[%s245 + $0x38] sm:$0xf]
        %v296 = vld [vmem:[%s245 + $0x3c] sm:$0xf]
        %v297 = vld [vmem:[%s245 + $0x40] sm:$0xf]
        %v298 = vld [vmem:[%s245 + $0x44] sm:$0xf]
        %v299 = vld [vmem:[%s245 + $0x48] sm:$0xf]
        %v300 = vld [vmem:[%s245 + $0x4c] sm:$0xf]
        %v301 = vld [vmem:[%s245 + $0x50] sm:$0xf]
        %v302 = vld [vmem:[%s245 + $0x54] sm:$0xf]
        %v303 = vld [vmem:[%s245 + $0x58] sm:$0xf]
        %v304 = vld [vmem:[%s245 + $0x5c] sm:$0xf]
        %v305 = vld [vmem:[%s245 + $0x60] sm:$0xf]
        %v306 = vld [vmem:[%s245 + $0x64] sm:$0xf]
        %v307 = vld [vmem:[%s245 + $0x68] sm:$0xf]
        %v308 = vld [vmem:[%s245 + $0x6c] sm:$0xf]
        %v309 = vld [vmem:[%s245 + $0x70] sm:$0xf]
        %v310 = vld [vmem:[%s245 + $0x74] sm:$0xf]
        %v311 = vld [vmem:[%s245 + $0x78] sm:$0xf]
        %v312 = vld [vmem:[%s245 + $0x7c] sm:$0xf]
        %v313 = vld [vmem:[%s2] sm:$0xff]
        %v314 = vld [vmem:[%s3] sm:$0xff]
        %v315 = vld [vmem:[%s4] sm:$0xf]
        %v316 = vld [vmem:[%s4 + $0x4] sm:$0xf]
        %v317 = vld [vmem:[%s4 + $0x8] sm:$0xf]
        %v318 = vld [vmem:[%s4 + $0xc] sm:$0xf]
        %v319 = vld [vmem:[%s4 + $0x10] sm:$0xf]
        %v320 = vld [vmem:[%s4 + $0x14] sm:$0xf]
        %v321 = vld [vmem:[%s4 + $0x18] sm:$0xf]
        %v322 = vld [vmem:[%s4 + $0x1c] sm:$0xf]
        %v323 = vld [vmem:[%s4 + $0x20] sm:$0xf]
        %v324 = vld [vmem:[%s4 + $0x24] sm:$0xf]
        %v325 = vld [vmem:[%s4 + $0x28] sm:$0xf]
        %v326 = vld [vmem:[%s4 + $0x2c] sm:$0xf]
        %v327 = vld [vmem:[%s4 + $0x30] sm:$0xf]
        %v328 = vld [vmem:[%s4 + $0x34] sm:$0xf]
        %v329 = vld [vmem:[%s4 + $0x38] sm:$0xf]
        %v330 = vld [vmem:[%s4 + $0x3c] sm:$0xf]
        %v331 = vld [vmem:[%s4 + $0x40] sm:$0xf]
        %v332 = vld [vmem:[%s4 + $0x44] sm:$0xf]
        %v333 = vld [vmem:[%s4 + $0x48] sm:$0xf]
        %v334 = vld [vmem:[%s4 + $0x4c] sm:$0xf]
        %v335 = vld [vmem:[%s4 + $0x50] sm:$0xf]
        %v336 = vld [vmem:[%s4 + $0x54] sm:$0xf]
        %v337 = vld [vmem:[%s4 + $0x58] sm:$0xf]
        %v338 = vld [vmem:[%s4 + $0x5c] sm:$0xf]
        %v339 = vld [vmem:[%s4 + $0x60] sm:$0xf]
        %v340 = vld [vmem:[%s4 + $0x64] sm:$0xf]
        %v341 = vld [vmem:[%s4 + $0x68] sm:$0xf]
        %v342 = vld [vmem:[%s4 + $0x6c] sm:$0xf]
        %v343 = vld [vmem:[%s4 + $0x70] sm:$0xf]
        %v344 = vld [vmem:[%s4 + $0x74] sm:$0xf]
        %v345 = vld [vmem:[%s4 + $0x78] sm:$0xf]
        %v346 = vld [vmem:[%s4 + $0x7c] sm:$0xf]
        %v379 = vunpack.c.l.b16 %v249
        %v380 = vunpack.c.l.b16 %v250
        %v381 = vunpack.c.l.b16 %v251
        %v382 = vunpack.c.l.b16 %v252
        %v383 = vunpack.c.l.b16 %v253
        %v384 = vunpack.c.l.b16 %v254
        %v385 = vunpack.c.l.b16 %v255
        %v386 = vunpack.c.l.b16 %v256
        %v387 = vunpack.c.l.b16 %v257
        %v388 = vunpack.c.l.b16 %v258
        %v389 = vunpack.c.l.b16 %v259
        %v390 = vunpack.c.l.b16 %v260
        %v391 = vunpack.c.l.b16 %v261
        %v392 = vunpack.c.l.b16 %v262
        %v393 = vunpack.c.l.b16 %v263
        %v394 = vunpack.c.l.b16 %v264
        %v395 = vunpack.c.l.b16 %v265
        %v396 = vunpack.c.l.b16 %v266
        %v397 = vunpack.c.l.b16 %v267
        %v398 = vunpack.c.l.b16 %v268
        %v399 = vunpack.c.l.b16 %v269
        %v400 = vunpack.c.l.b16 %v270
        %v401 = vunpack.c.l.b16 %v271
        %v402 = vunpack.c.l.b16 %v272
        %v403 = vunpack.c.l.b16 %v273
        %v404 = vunpack.c.l.b16 %v274
        %v405 = vunpack.c.l.b16 %v275
        %v406 = vunpack.c.l.b16 %v276
        %v407 = vunpack.c.l.b16 %v277
        %v408 = vunpack.c.l.b16 %v278
        %v409 = vunpack.c.l.b16 %v279
        %v410 = vunpack.c.l.b16 %v280
        %v411 = vpack.c.b16 %v380, %v379
        %v412 = vpack.c.b16 %v382, %v381
        %v413 = vpack.c.b16 %v384, %v383
        %v414 = vpack.c.b16 %v386, %v385
        %v415 = vpack.c.b16 %v388, %v387
        %v416 = vpack.c.b16 %v390, %v389
        %v417 = vpack.c.b16 %v392, %v391
        %v418 = vpack.c.b16 %v394, %v393
        %v419 = vpack.c.b16 %v396, %v395
        %v420 = vpack.c.b16 %v398, %v397
        %v421 = vpack.c.b16 %v400, %v399
        %v422 = vpack.c.b16 %v402, %v401
        %v423 = vpack.c.b16 %v404, %v403
        %v424 = vpack.c.b16 %v406, %v405
        %v425 = vpack.c.b16 %v408, %v407
        %v426 = vpack.c.b16 %v410, %v409
        %v428 = vunpack.c.l.b16 %v313
        %v429 = vunpack.c.h.b16 %v313
        %v430 = vpack.c.b16 %v428, %v428
        %v431 = vpack.c.b16 %v429, %v429
        %vm432 = vcmask 64512
        %v434 = vsel %vm432, %v411, 0
        %v437 = vsel %vm432, %v412, 0
        %v440 = vsel %vm432, %v413, 0
        %v443 = vsel %vm432, %v414, 0
        %v446 = vsel %vm432, %v415, 0
        %v449 = vsel %vm432, %v416, 0
        %v452 = vsel %vm432, %v417, 0
        %v455 = vsel %vm432, %v418, 0
        %v458 = vsel %vm432, %v419, 0
        %v461 = vsel %vm432, %v420, 0
        %v464 = vsel %vm432, %v421, 0
        %v467 = vsel %vm432, %v422, 0
        %v470 = vsel %vm432, %v423, 0
        %v473 = vsel %vm432, %v424, 0
        %v476 = vsel %vm432, %v425, 0
        %v479 = vsel %vm432, %v426, 0
        %vm481 = vcmask 1043456
        %v483 = vsel %vm481, %v430, 0
        %v486 = vsel %vm481, %v431, 0
        %488 = vmatpush.bf16.msra.mxu0 0
        %489 = vmatpush.bf16.msra.mxu0 0
        %490 = vmatpush.bf16.msra.mxu0 0
        %491 = vmatpush.bf16.msra.mxu0 0
        %492 = vmatpush.bf16.msra.mxu0 0
        %493 = vmatpush.bf16.msra.mxu0 0
        %494 = vmatpush.bf16.msra.mxu0 0
        %495 = vmatpush.bf16.msra.mxu0 %v483
        %496 = vmatmul.bf16.gmra.mxu0 %v434
        %v497 = vpop.f32.mrf.mxu0
        %v498 = vadd.f32 0.0, %v497
        %v499 = vpop.f32.mrf.mxu0
        %v500 = vadd.f32 0.0, %v499
        %501 = vmatmul.bf16.gmra.mxu0 %v437
        %v502 = vpop.f32.mrf.mxu0
        %v503 = vadd.f32 0.0, %v502
        %v504 = vpop.f32.mrf.mxu0
        %v505 = vadd.f32 0.0, %v504
        %506 = vmatmul.bf16.gmra.mxu0 %v440
        %v507 = vpop.f32.mrf.mxu0
        %v508 = vadd.f32 0.0, %v507
        %v509 = vpop.f32.mrf.mxu0
        %v510 = vadd.f32 0.0, %v509
        %511 = vmatmul.bf16.gmra.mxu0 %v443
        %v512 = vpop.f32.mrf.mxu0
        %v513 = vadd.f32 0.0, %v512
        %v514 = vpop.f32.mrf.mxu0
        %v515 = vadd.f32 0.0, %v514
        %516 = vmatmul.bf16.gmra.mxu0 %v446
        %v517 = vpop.f32.mrf.mxu0
        %v518 = vadd.f32 0.0, %v517
        %v519 = vpop.f32.mrf.mxu0
        %v520 = vadd.f32 0.0, %v519
        %521 = vmatmul.bf16.gmra.mxu0 %v449
        %v522 = vpop.f32.mrf.mxu0
        %v523 = vadd.f32 0.0, %v522
        %v524 = vpop.f32.mrf.mxu0
        %v525 = vadd.f32 0.0, %v524
        %526 = vmatmul.bf16.gmra.mxu0 %v452
        %v527 = vpop.f32.mrf.mxu0
        %v528 = vadd.f32 0.0, %v527
        %v529 = vpop.f32.mrf.mxu0
        %v530 = vadd.f32 0.0, %v529
        %531 = vmatmul.bf16.gmra.mxu0 %v455
        %v532 = vpop.f32.mrf.mxu0
        %v533 = vadd.f32 0.0, %v532
        %v534 = vpop.f32.mrf.mxu0
        %v535 = vadd.f32 0.0, %v534
        %536 = vmatmul.bf16.gmra.mxu0 %v458
        %v537 = vpop.f32.mrf.mxu0
        %v538 = vadd.f32 0.0, %v537
        %v539 = vpop.f32.mrf.mxu0
        %v540 = vadd.f32 0.0, %v539
        %541 = vmatmul.bf16.gmra.mxu0 %v461
        %v542 = vpop.f32.mrf.mxu0
        %v543 = vadd.f32 0.0, %v542
        %v544 = vpop.f32.mrf.mxu0
        %v545 = vadd.f32 0.0, %v544
        %546 = vmatmul.bf16.gmra.mxu0 %v464
        %v547 = vpop.f32.mrf.mxu0
        %v548 = vadd.f32 0.0, %v547
        %v549 = vpop.f32.mrf.mxu0
        %v550 = vadd.f32 0.0, %v549
        %551 = vmatmul.bf16.gmra.mxu0 %v467
        %v552 = vpop.f32.mrf.mxu0
        %v553 = vadd.f32 0.0, %v552
        %v554 = vpop.f32.mrf.mxu0
        %v555 = vadd.f32 0.0, %v554
        %556 = vmatmul.bf16.gmra.mxu0 %v470
        %v557 = vpop.f32.mrf.mxu0
        %v558 = vadd.f32 0.0, %v557
        %v559 = vpop.f32.mrf.mxu0
        %v560 = vadd.f32 0.0, %v559
        %561 = vmatmul.bf16.gmra.mxu0 %v473
        %v562 = vpop.f32.mrf.mxu0
        %v563 = vadd.f32 0.0, %v562
        %v564 = vpop.f32.mrf.mxu0
        %v565 = vadd.f32 0.0, %v564
        %566 = vmatmul.bf16.gmra.mxu0 %v476
        %v567 = vpop.f32.mrf.mxu0
        %v568 = vadd.f32 0.0, %v567
        %v569 = vpop.f32.mrf.mxu0
        %v570 = vadd.f32 0.0, %v569
        %571 = vmatmul.bf16.gmra.mxu0 %v479
        %v572 = vpop.f32.mrf.mxu0
        %v573 = vadd.f32 0.0, %v572
        %v574 = vpop.f32.mrf.mxu0
        %v575 = vadd.f32 0.0, %v574
        %576 = vdwg.mxu0
        %577 = vmatpush.bf16.msra.mxu0 0
        %578 = vmatpush.bf16.msra.mxu0 0
        %579 = vmatpush.bf16.msra.mxu0 0
        %580 = vmatpush.bf16.msra.mxu0 0
        %581 = vmatpush.bf16.msra.mxu0 0
        %582 = vmatpush.bf16.msra.mxu0 0
        %583 = vmatpush.bf16.msra.mxu0 0
        %584 = vmatpush.bf16.msra.mxu0 %v486
        %585 = vmatmul.bf16.gmra.mxu0 %v434
        %v586 = vpop.f32.mrf.mxu0
        %v587 = vadd.f32 0.0, %v586
        %v588 = vpop.f32.mrf.mxu0
        %v589 = vadd.f32 0.0, %v588
        %590 = vmatmul.bf16.gmra.mxu0 %v437
        %v591 = vpop.f32.mrf.mxu0
        %v592 = vadd.f32 0.0, %v591
        %v593 = vpop.f32.mrf.mxu0
        %v594 = vadd.f32 0.0, %v593
        %595 = vmatmul.bf16.gmra.mxu0 %v440
        %v596 = vpop.f32.mrf.mxu0
        %v597 = vadd.f32 0.0, %v596
        %v598 = vpop.f32.mrf.mxu0
        %v599 = vadd.f32 0.0, %v598
        %600 = vmatmul.bf16.gmra.mxu0 %v443
        %v601 = vpop.f32.mrf.mxu0
        %v602 = vadd.f32 0.0, %v601
        %v603 = vpop.f32.mrf.mxu0
        %v604 = vadd.f32 0.0, %v603
        %605 = vmatmul.bf16.gmra.mxu0 %v446
        %v606 = vpop.f32.mrf.mxu0
        %v607 = vadd.f32 0.0, %v606
        %v608 = vpop.f32.mrf.mxu0
        %v609 = vadd.f32 0.0, %v608
        %610 = vmatmul.bf16.gmra.mxu0 %v449
        %v611 = vpop.f32.mrf.mxu0
        %v612 = vadd.f32 0.0, %v611
        %v613 = vpop.f32.mrf.mxu0
        %v614 = vadd.f32 0.0, %v613
        %615 = vmatmul.bf16.gmra.mxu0 %v452
        %v616 = vpop.f32.mrf.mxu0
        %v617 = vadd.f32 0.0, %v616
        %v618 = vpop.f32.mrf.mxu0
        %v619 = vadd.f32 0.0, %v618
        %620 = vmatmul.bf16.gmra.mxu0 %v455
        %v621 = vpop.f32.mrf.mxu0
        %v622 = vadd.f32 0.0, %v621
        %v623 = vpop.f32.mrf.mxu0
        %v624 = vadd.f32 0.0, %v623
        %625 = vmatmul.bf16.gmra.mxu0 %v458
        %v626 = vpop.f32.mrf.mxu0
        %v627 = vadd.f32 0.0, %v626
        %v628 = vpop.f32.mrf.mxu0
        %v629 = vadd.f32 0.0, %v628
        %630 = vmatmul.bf16.gmra.mxu0 %v461
        %v631 = vpop.f32.mrf.mxu0
        %v632 = vadd.f32 0.0, %v631
        %v633 = vpop.f32.mrf.mxu0
        %v634 = vadd.f32 0.0, %v633
        %635 = vmatmul.bf16.gmra.mxu0 %v464
        %v636 = vpop.f32.mrf.mxu0
        %v637 = vadd.f32 0.0, %v636
        %v638 = vpop.f32.mrf.mxu0
        %v639 = vadd.f32 0.0, %v638
        %640 = vmatmul.bf16.gmra.mxu0 %v467
        %v641 = vpop.f32.mrf.mxu0
        %v642 = vadd.f32 0.0, %v641
        %v643 = vpop.f32.mrf.mxu0
        %v644 = vadd.f32 0.0, %v643
        %645 = vmatmul.bf16.gmra.mxu0 %v470
        %v646 = vpop.f32.mrf.mxu0
        %v647 = vadd.f32 0.0, %v646
        %v648 = vpop.f32.mrf.mxu0
        %v649 = vadd.f32 0.0, %v648
        %650 = vmatmul.bf16.gmra.mxu0 %v473
        %v651 = vpop.f32.mrf.mxu0
        %v652 = vadd.f32 0.0, %v651
        %v653 = vpop.f32.mrf.mxu0
        %v654 = vadd.f32 0.0, %v653
        %655 = vmatmul.bf16.gmra.mxu0 %v476
        %v656 = vpop.f32.mrf.mxu0
        %v657 = vadd.f32 0.0, %v656
        %v658 = vpop.f32.mrf.mxu0
        %v659 = vadd.f32 0.0, %v658
        %660 = vmatmul.bf16.gmra.mxu0 %v479
        %v661 = vpop.f32.mrf.mxu0
        %v662 = vadd.f32 0.0, %v661
        %v663 = vpop.f32.mrf.mxu0
        %v664 = vadd.f32 0.0, %v663
        %665 = vdwg.mxu0
        %v698 = vunpack.c.l.b16 %v281
        %v699 = vunpack.c.l.b16 %v282
        %v700 = vunpack.c.l.b16 %v283
        %v701 = vunpack.c.l.b16 %v284
        %v702 = vunpack.c.l.b16 %v285
        %v703 = vunpack.c.l.b16 %v286
        %v704 = vunpack.c.l.b16 %v287
        %v705 = vunpack.c.l.b16 %v288
        %v706 = vunpack.c.l.b16 %v289
        %v707 = vunpack.c.l.b16 %v290
        %v708 = vunpack.c.l.b16 %v291
        %v709 = vunpack.c.l.b16 %v292
        %v710 = vunpack.c.l.b16 %v293
        %v711 = vunpack.c.l.b16 %v294
        %v712 = vunpack.c.l.b16 %v295
        %v713 = vunpack.c.l.b16 %v296
        %v714 = vunpack.c.l.b16 %v297
        %v715 = vunpack.c.l.b16 %v298
        %v716 = vunpack.c.l.b16 %v299
        %v717 = vunpack.c.l.b16 %v300
        %v718 = vunpack.c.l.b16 %v301
        %v719 = vunpack.c.l.b16 %v302
        %v720 = vunpack.c.l.b16 %v303
        %v721 = vunpack.c.l.b16 %v304
        %v722 = vunpack.c.l.b16 %v305
        %v723 = vunpack.c.l.b16 %v306
        %v724 = vunpack.c.l.b16 %v307
        %v725 = vunpack.c.l.b16 %v308
        %v726 = vunpack.c.l.b16 %v309
        %v727 = vunpack.c.l.b16 %v310
        %v728 = vunpack.c.l.b16 %v311
        %v729 = vunpack.c.l.b16 %v312
        %v730 = vpack.c.b16 %v699, %v698
        %v731 = vpack.c.b16 %v701, %v700
        %v732 = vpack.c.b16 %v703, %v702
        %v733 = vpack.c.b16 %v705, %v704
        %v734 = vpack.c.b16 %v707, %v706
        %v735 = vpack.c.b16 %v709, %v708
        %v736 = vpack.c.b16 %v711, %v710
        %v737 = vpack.c.b16 %v713, %v712
        %v738 = vpack.c.b16 %v715, %v714
        %v739 = vpack.c.b16 %v717, %v716
        %v740 = vpack.c.b16 %v719, %v718
        %v741 = vpack.c.b16 %v721, %v720
        %v742 = vpack.c.b16 %v723, %v722
        %v743 = vpack.c.b16 %v725, %v724
        %v744 = vpack.c.b16 %v727, %v726
        %v745 = vpack.c.b16 %v729, %v728
        %v747 = vunpack.c.l.b16 %v314
        %v748 = vunpack.c.h.b16 %v314
        %v749 = vpack.c.b16 %v747, %v747
        %v750 = vpack.c.b16 %v748, %v748
        %v752 = vsel %vm432, %v730, 0
        %v755 = vsel %vm432, %v731, 0
        %v758 = vsel %vm432, %v732, 0
        %v761 = vsel %vm432, %v733, 0
        %v764 = vsel %vm432, %v734, 0
        %v767 = vsel %vm432, %v735, 0
        %v770 = vsel %vm432, %v736, 0
        %v773 = vsel %vm432, %v737, 0
        %v776 = vsel %vm432, %v738, 0
        %v779 = vsel %vm432, %v739, 0
        %v782 = vsel %vm432, %v740, 0
        %v785 = vsel %vm432, %v741, 0
        %v788 = vsel %vm432, %v742, 0
        %v791 = vsel %vm432, %v743, 0
        %v794 = vsel %vm432, %v744, 0
        %v797 = vsel %vm432, %v745, 0
        %v800 = vsel %vm481, %v749, 0
        %v803 = vsel %vm481, %v750, 0
        %805 = vmatpush.bf16.msra.mxu0 0
        %806 = vmatpush.bf16.msra.mxu0 0
        %807 = vmatpush.bf16.msra.mxu0 0
        %808 = vmatpush.bf16.msra.mxu0 0
        %809 = vmatpush.bf16.msra.mxu0 0
        %810 = vmatpush.bf16.msra.mxu0 0
        %811 = vmatpush.bf16.msra.mxu0 0
        %812 = vmatpush.bf16.msra.mxu0 %v800
        %813 = vmatmul.bf16.gmra.mxu0 %v752
        %v814 = vpop.f32.mrf.mxu0
        %v815 = vadd.f32 0.0, %v814
        %v816 = vpop.f32.mrf.mxu0
        %v817 = vadd.f32 0.0, %v816
        %818 = vmatmul.bf16.gmra.mxu0 %v755
        %v819 = vpop.f32.mrf.mxu0
        %v820 = vadd.f32 0.0, %v819
        %v821 = vpop.f32.mrf.mxu0
        %v822 = vadd.f32 0.0, %v821
        %823 = vmatmul.bf16.gmra.mxu0 %v758
        %v824 = vpop.f32.mrf.mxu0
        %v825 = vadd.f32 0.0, %v824
        %v826 = vpop.f32.mrf.mxu0
        %v827 = vadd.f32 0.0, %v826
        %828 = vmatmul.bf16.gmra.mxu0 %v761
        %v829 = vpop.f32.mrf.mxu0
        %v830 = vadd.f32 0.0, %v829
        %v831 = vpop.f32.mrf.mxu0
        %v832 = vadd.f32 0.0, %v831
        %833 = vmatmul.bf16.gmra.mxu0 %v764
        %v834 = vpop.f32.mrf.mxu0
        %v835 = vadd.f32 0.0, %v834
        %v836 = vpop.f32.mrf.mxu0
        %v837 = vadd.f32 0.0, %v836
        %838 = vmatmul.bf16.gmra.mxu0 %v767
        %v839 = vpop.f32.mrf.mxu0
        %v840 = vadd.f32 0.0, %v839
        %v841 = vpop.f32.mrf.mxu0
        %v842 = vadd.f32 0.0, %v841
        %843 = vmatmul.bf16.gmra.mxu0 %v770
        %v844 = vpop.f32.mrf.mxu0
        %v845 = vadd.f32 0.0, %v844
        %v846 = vpop.f32.mrf.mxu0
        %v847 = vadd.f32 0.0, %v846
        %848 = vmatmul.bf16.gmra.mxu0 %v773
        %v849 = vpop.f32.mrf.mxu0
        %v850 = vadd.f32 0.0, %v849
        %v851 = vpop.f32.mrf.mxu0
        %v852 = vadd.f32 0.0, %v851
        %853 = vmatmul.bf16.gmra.mxu0 %v776
        %v854 = vpop.f32.mrf.mxu0
        %v855 = vadd.f32 0.0, %v854
        %v856 = vpop.f32.mrf.mxu0
        %v857 = vadd.f32 0.0, %v856
        %858 = vmatmul.bf16.gmra.mxu0 %v779
        %v859 = vpop.f32.mrf.mxu0
        %v860 = vadd.f32 0.0, %v859
        %v861 = vpop.f32.mrf.mxu0
        %v862 = vadd.f32 0.0, %v861
        %863 = vmatmul.bf16.gmra.mxu0 %v782
        %v864 = vpop.f32.mrf.mxu0
        %v865 = vadd.f32 0.0, %v864
        %v866 = vpop.f32.mrf.mxu0
        %v867 = vadd.f32 0.0, %v866
        %868 = vmatmul.bf16.gmra.mxu0 %v785
        %v869 = vpop.f32.mrf.mxu0
        %v870 = vadd.f32 0.0, %v869
        %v871 = vpop.f32.mrf.mxu0
        %v872 = vadd.f32 0.0, %v871
        %873 = vmatmul.bf16.gmra.mxu0 %v788
        %v874 = vpop.f32.mrf.mxu0
        %v875 = vadd.f32 0.0, %v874
        %v876 = vpop.f32.mrf.mxu0
        %v877 = vadd.f32 0.0, %v876
        %878 = vmatmul.bf16.gmra.mxu0 %v791
        %v879 = vpop.f32.mrf.mxu0
        %v880 = vadd.f32 0.0, %v879
        %v881 = vpop.f32.mrf.mxu0
        %v882 = vadd.f32 0.0, %v881
        %883 = vmatmul.bf16.gmra.mxu0 %v794
        %v884 = vpop.f32.mrf.mxu0
        %v885 = vadd.f32 0.0, %v884
        %v886 = vpop.f32.mrf.mxu0
        %v887 = vadd.f32 0.0, %v886
        %888 = vmatmul.bf16.gmra.mxu0 %v797
        %v889 = vpop.f32.mrf.mxu0
        %v890 = vadd.f32 0.0, %v889
        %v891 = vpop.f32.mrf.mxu0
        %v892 = vadd.f32 0.0, %v891
        %893 = vdwg.mxu0
        %894 = vmatpush.bf16.msra.mxu0 0
        %895 = vmatpush.bf16.msra.mxu0 0
        %896 = vmatpush.bf16.msra.mxu0 0
        %897 = vmatpush.bf16.msra.mxu0 0
        %898 = vmatpush.bf16.msra.mxu0 0
        %899 = vmatpush.bf16.msra.mxu0 0
        %900 = vmatpush.bf16.msra.mxu0 0
        %901 = vmatpush.bf16.msra.mxu0 %v803
        %902 = vmatmul.bf16.gmra.mxu0 %v752
        %v903 = vpop.f32.mrf.mxu0
        %v904 = vadd.f32 0.0, %v903
        %v905 = vpop.f32.mrf.mxu0
        %v906 = vadd.f32 0.0, %v905
        %907 = vmatmul.bf16.gmra.mxu0 %v755
        %v908 = vpop.f32.mrf.mxu0
        %v909 = vadd.f32 0.0, %v908
        %v910 = vpop.f32.mrf.mxu0
        %v911 = vadd.f32 0.0, %v910
        %912 = vmatmul.bf16.gmra.mxu0 %v758
        %v913 = vpop.f32.mrf.mxu0
        %v914 = vadd.f32 0.0, %v913
        %v915 = vpop.f32.mrf.mxu0
        %v916 = vadd.f32 0.0, %v915
        %917 = vmatmul.bf16.gmra.mxu0 %v761
        %v918 = vpop.f32.mrf.mxu0
        %v919 = vadd.f32 0.0, %v918
        %v920 = vpop.f32.mrf.mxu0
        %v921 = vadd.f32 0.0, %v920
        %922 = vmatmul.bf16.gmra.mxu0 %v764
        %v923 = vpop.f32.mrf.mxu0
        %v924 = vadd.f32 0.0, %v923
        %v925 = vpop.f32.mrf.mxu0
        %v926 = vadd.f32 0.0, %v925
        %927 = vmatmul.bf16.gmra.mxu0 %v767
        %v928 = vpop.f32.mrf.mxu0
        %v929 = vadd.f32 0.0, %v928
        %v930 = vpop.f32.mrf.mxu0
        %v931 = vadd.f32 0.0, %v930
        %932 = vmatmul.bf16.gmra.mxu0 %v770
        %v933 = vpop.f32.mrf.mxu0
        %v934 = vadd.f32 0.0, %v933
        %v935 = vpop.f32.mrf.mxu0
        %v936 = vadd.f32 0.0, %v935
        %937 = vmatmul.bf16.gmra.mxu0 %v773
        %v938 = vpop.f32.mrf.mxu0
        %v939 = vadd.f32 0.0, %v938
        %v940 = vpop.f32.mrf.mxu0
        %v941 = vadd.f32 0.0, %v940
        %942 = vmatmul.bf16.gmra.mxu0 %v776
        %v943 = vpop.f32.mrf.mxu0
        %v944 = vadd.f32 0.0, %v943
        %v945 = vpop.f32.mrf.mxu0
        %v946 = vadd.f32 0.0, %v945
        %947 = vmatmul.bf16.gmra.mxu0 %v779
        %v948 = vpop.f32.mrf.mxu0
        %v949 = vadd.f32 0.0, %v948
        %v950 = vpop.f32.mrf.mxu0
        %v951 = vadd.f32 0.0, %v950
        %952 = vmatmul.bf16.gmra.mxu0 %v782
        %v953 = vpop.f32.mrf.mxu0
        %v954 = vadd.f32 0.0, %v953
        %v955 = vpop.f32.mrf.mxu0
        %v956 = vadd.f32 0.0, %v955
        %957 = vmatmul.bf16.gmra.mxu0 %v785
        %v958 = vpop.f32.mrf.mxu0
        %v959 = vadd.f32 0.0, %v958
        %v960 = vpop.f32.mrf.mxu0
        %v961 = vadd.f32 0.0, %v960
        %962 = vmatmul.bf16.gmra.mxu0 %v788
        %v963 = vpop.f32.mrf.mxu0
        %v964 = vadd.f32 0.0, %v963
        %v965 = vpop.f32.mrf.mxu0
        %v966 = vadd.f32 0.0, %v965
        %967 = vmatmul.bf16.gmra.mxu0 %v791
        %v968 = vpop.f32.mrf.mxu0
        %v969 = vadd.f32 0.0, %v968
        %v970 = vpop.f32.mrf.mxu0
        %v971 = vadd.f32 0.0, %v970
        %972 = vmatmul.bf16.gmra.mxu0 %v794
        %v973 = vpop.f32.mrf.mxu0
        %v974 = vadd.f32 0.0, %v973
        %v975 = vpop.f32.mrf.mxu0
        %v976 = vadd.f32 0.0, %v975
        %977 = vmatmul.bf16.gmra.mxu0 %v797
        %v978 = vpop.f32.mrf.mxu0
        %v979 = vadd.f32 0.0, %v978
        %v980 = vpop.f32.mrf.mxu0
        %v981 = vadd.f32 0.0, %v980
        %982 = vdwg.mxu0
        %v983 = vmul.f32 %v498, %v815
        %v984 = vmul.f32 %v500, %v817
        %v985 = vmul.f32 %v503, %v820
        %v986 = vmul.f32 %v505, %v822
        %v987 = vmul.f32 %v508, %v825
        %v988 = vmul.f32 %v510, %v827
        %v989 = vmul.f32 %v513, %v830
        %v990 = vmul.f32 %v515, %v832
        %v991 = vmul.f32 %v518, %v835
        %v992 = vmul.f32 %v520, %v837
        %v993 = vmul.f32 %v523, %v840
        %v994 = vmul.f32 %v525, %v842
        %v995 = vmul.f32 %v528, %v845
        %v996 = vmul.f32 %v530, %v847
        %v997 = vmul.f32 %v533, %v850
        %v998 = vmul.f32 %v535, %v852
        %v999 = vmul.f32 %v538, %v855
        %v1000 = vmul.f32 %v540, %v857
        %v1001 = vmul.f32 %v543, %v860
        %v1002 = vmul.f32 %v545, %v862
        %v1003 = vmul.f32 %v548, %v865
        %v1004 = vmul.f32 %v550, %v867
        %v1005 = vmul.f32 %v553, %v870
        %v1006 = vmul.f32 %v555, %v872
        %v1007 = vmul.f32 %v558, %v875
        %v1008 = vmul.f32 %v560, %v877
        %v1009 = vmul.f32 %v563, %v880
        %v1010 = vmul.f32 %v565, %v882
        %v1011 = vmul.f32 %v568, %v885
        %v1012 = vmul.f32 %v570, %v887
        %v1013 = vmul.f32 %v573, %v890
        %v1014 = vmul.f32 %v575, %v892
        %v1015 = vmul.f32 %v587, %v904
        %v1016 = vmul.f32 %v589, %v906
        %v1017 = vmul.f32 %v592, %v909
        %v1018 = vmul.f32 %v594, %v911
        %v1019 = vmul.f32 %v597, %v914
        %v1020 = vmul.f32 %v599, %v916
        %v1021 = vmul.f32 %v602, %v919
        %v1022 = vmul.f32 %v604, %v921
        %v1023 = vmul.f32 %v607, %v924
        %v1024 = vmul.f32 %v609, %v926
        %v1025 = vmul.f32 %v612, %v929
        %v1026 = vmul.f32 %v614, %v931
        %v1027 = vmul.f32 %v617, %v934
        %v1028 = vmul.f32 %v619, %v936
        %v1029 = vmul.f32 %v622, %v939
        %v1030 = vmul.f32 %v624, %v941
        %v1031 = vmul.f32 %v627, %v944
        %v1032 = vmul.f32 %v629, %v946
        %v1033 = vmul.f32 %v632, %v949
        %v1034 = vmul.f32 %v634, %v951
        %v1035 = vmul.f32 %v637, %v954
        %v1036 = vmul.f32 %v639, %v956
        %v1037 = vmul.f32 %v642, %v959
        %v1038 = vmul.f32 %v644, %v961
        %v1039 = vmul.f32 %v647, %v964
        %v1040 = vmul.f32 %v649, %v966
        %v1041 = vmul.f32 %v652, %v969
        %v1042 = vmul.f32 %v654, %v971
        %v1043 = vmul.f32 %v657, %v974
        %v1044 = vmul.f32 %v659, %v976
        %v1045 = vmul.f32 %v662, %v979
        %v1046 = vmul.f32 %v664, %v981
        %v1047 = vsub.f32 %v983, %v1015
        %v1048 = vsub.f32 %v984, %v1016
        %v1049 = vsub.f32 %v985, %v1017
        %v1050 = vsub.f32 %v986, %v1018
        %v1051 = vsub.f32 %v987, %v1019
        %v1052 = vsub.f32 %v988, %v1020
        %v1053 = vsub.f32 %v989, %v1021
        %v1054 = vsub.f32 %v990, %v1022
        %v1055 = vsub.f32 %v991, %v1023
        %v1056 = vsub.f32 %v992, %v1024
        %v1057 = vsub.f32 %v993, %v1025
        %v1058 = vsub.f32 %v994, %v1026
        %v1059 = vsub.f32 %v995, %v1027
        %v1060 = vsub.f32 %v996, %v1028
        %v1061 = vsub.f32 %v997, %v1029
        %v1062 = vsub.f32 %v998, %v1030
        %v1063 = vsub.f32 %v999, %v1031
        %v1064 = vsub.f32 %v1000, %v1032
        %v1065 = vsub.f32 %v1001, %v1033
        %v1066 = vsub.f32 %v1002, %v1034
        %v1067 = vsub.f32 %v1003, %v1035
        %v1068 = vsub.f32 %v1004, %v1036
        %v1069 = vsub.f32 %v1005, %v1037
        %v1070 = vsub.f32 %v1006, %v1038
        %v1071 = vsub.f32 %v1007, %v1039
        %v1072 = vsub.f32 %v1008, %v1040
        %v1073 = vsub.f32 %v1009, %v1041
        %v1074 = vsub.f32 %v1010, %v1042
        %v1075 = vsub.f32 %v1011, %v1043
        %v1076 = vsub.f32 %v1012, %v1044
        %v1077 = vsub.f32 %v1013, %v1045
        %v1078 = vsub.f32 %v1014, %v1046
        %v1079 = vmul.f32 %v498, %v904
        %v1080 = vmul.f32 %v500, %v906
        %v1081 = vmul.f32 %v503, %v909
        %v1082 = vmul.f32 %v505, %v911
        %v1083 = vmul.f32 %v508, %v914
        %v1084 = vmul.f32 %v510, %v916
        %v1085 = vmul.f32 %v513, %v919
        %v1086 = vmul.f32 %v515, %v921
        %v1087 = vmul.f32 %v518, %v924
        %v1088 = vmul.f32 %v520, %v926
        %v1089 = vmul.f32 %v523, %v929
        %v1090 = vmul.f32 %v525, %v931
        %v1091 = vmul.f32 %v528, %v934
        %v1092 = vmul.f32 %v530, %v936
        %v1093 = vmul.f32 %v533, %v939
        %v1094 = vmul.f32 %v535, %v941
        %v1095 = vmul.f32 %v538, %v944
        %v1096 = vmul.f32 %v540, %v946
        %v1097 = vmul.f32 %v543, %v949
        %v1098 = vmul.f32 %v545, %v951
        %v1099 = vmul.f32 %v548, %v954
        %v1100 = vmul.f32 %v550, %v956
        %v1101 = vmul.f32 %v553, %v959
        %v1102 = vmul.f32 %v555, %v961
        %v1103 = vmul.f32 %v558, %v964
        %v1104 = vmul.f32 %v560, %v966
        %v1105 = vmul.f32 %v563, %v969
        %v1106 = vmul.f32 %v565, %v971
        %v1107 = vmul.f32 %v568, %v974
        %v1108 = vmul.f32 %v570, %v976
        %v1109 = vmul.f32 %v573, %v979
        %v1110 = vmul.f32 %v575, %v981
        %v1111 = vmul.f32 %v587, %v815
        %v1112 = vmul.f32 %v589, %v817
        %v1113 = vmul.f32 %v592, %v820
        %v1114 = vmul.f32 %v594, %v822
        %v1115 = vmul.f32 %v597, %v825
        %v1116 = vmul.f32 %v599, %v827
        %v1117 = vmul.f32 %v602, %v830
        %v1118 = vmul.f32 %v604, %v832
        %v1119 = vmul.f32 %v607, %v835
        %v1120 = vmul.f32 %v609, %v837
        %v1121 = vmul.f32 %v612, %v840
        %v1122 = vmul.f32 %v614, %v842
        %v1123 = vmul.f32 %v617, %v845
        %v1124 = vmul.f32 %v619, %v847
        %v1125 = vmul.f32 %v622, %v850
        %v1126 = vmul.f32 %v624, %v852
        %v1127 = vmul.f32 %v627, %v855
        %v1128 = vmul.f32 %v629, %v857
        %v1129 = vmul.f32 %v632, %v860
        %v1130 = vmul.f32 %v634, %v862
        %v1131 = vmul.f32 %v637, %v865
        %v1132 = vmul.f32 %v639, %v867
        %v1133 = vmul.f32 %v642, %v870
        %v1134 = vmul.f32 %v644, %v872
        %v1135 = vmul.f32 %v647, %v875
        %v1136 = vmul.f32 %v649, %v877
        %v1137 = vmul.f32 %v652, %v880
        %v1138 = vmul.f32 %v654, %v882
        %v1139 = vmul.f32 %v657, %v885
        %v1140 = vmul.f32 %v659, %v887
        %v1141 = vmul.f32 %v662, %v890
        %v1142 = vmul.f32 %v664, %v892
        %v1143 = vadd.f32 %v1079, %v1111
        %v1144 = vadd.f32 %v1080, %v1112
        %v1145 = vadd.f32 %v1081, %v1113
        %v1146 = vadd.f32 %v1082, %v1114
        %v1147 = vadd.f32 %v1083, %v1115
        %v1148 = vadd.f32 %v1084, %v1116
        %v1149 = vadd.f32 %v1085, %v1117
        %v1150 = vadd.f32 %v1086, %v1118
        %v1151 = vadd.f32 %v1087, %v1119
        %v1152 = vadd.f32 %v1088, %v1120
        %v1153 = vadd.f32 %v1089, %v1121
        %v1154 = vadd.f32 %v1090, %v1122
        %v1155 = vadd.f32 %v1091, %v1123
        %v1156 = vadd.f32 %v1092, %v1124
        %v1157 = vadd.f32 %v1093, %v1125
        %v1158 = vadd.f32 %v1094, %v1126
        %v1159 = vadd.f32 %v1095, %v1127
        %v1160 = vadd.f32 %v1096, %v1128
        %v1161 = vadd.f32 %v1097, %v1129
        %v1162 = vadd.f32 %v1098, %v1130
        %v1163 = vadd.f32 %v1099, %v1131
        %v1164 = vadd.f32 %v1100, %v1132
        %v1165 = vadd.f32 %v1101, %v1133
        %v1166 = vadd.f32 %v1102, %v1134
        %v1167 = vadd.f32 %v1103, %v1135
        %v1168 = vadd.f32 %v1104, %v1136
        %v1169 = vadd.f32 %v1105, %v1137
        %v1170 = vadd.f32 %v1106, %v1138
        %v1171 = vadd.f32 %v1107, %v1139
        %v1172 = vadd.f32 %v1108, %v1140
        %v1173 = vadd.f32 %v1109, %v1141
        %v1174 = vadd.f32 %v1110, %v1142
        %v1175 = vpack.c.bf16 %v1047, %v1047
        %v1176 = vpack.c.bf16 %v1048, %v1048
        %v1177 = vpack.c.bf16 %v1049, %v1049
        %v1178 = vpack.c.bf16 %v1050, %v1050
        %v1179 = vpack.c.bf16 %v1051, %v1051
        %v1180 = vpack.c.bf16 %v1052, %v1052
        %v1181 = vpack.c.bf16 %v1053, %v1053
        %v1182 = vpack.c.bf16 %v1054, %v1054
        %v1183 = vpack.c.bf16 %v1055, %v1055
        %v1184 = vpack.c.bf16 %v1056, %v1056
        %v1185 = vpack.c.bf16 %v1057, %v1057
        %v1186 = vpack.c.bf16 %v1058, %v1058
        %v1187 = vpack.c.bf16 %v1059, %v1059
        %v1188 = vpack.c.bf16 %v1060, %v1060
        %v1189 = vpack.c.bf16 %v1061, %v1061
        %v1190 = vpack.c.bf16 %v1062, %v1062
        %v1191 = vpack.c.bf16 %v1063, %v1063
        %v1192 = vpack.c.bf16 %v1064, %v1064
        %v1193 = vpack.c.bf16 %v1065, %v1065
        %v1194 = vpack.c.bf16 %v1066, %v1066
        %v1195 = vpack.c.bf16 %v1067, %v1067
        %v1196 = vpack.c.bf16 %v1068, %v1068
        %v1197 = vpack.c.bf16 %v1069, %v1069
        %v1198 = vpack.c.bf16 %v1070, %v1070
        %v1199 = vpack.c.bf16 %v1071, %v1071
        %v1200 = vpack.c.bf16 %v1072, %v1072
        %v1201 = vpack.c.bf16 %v1073, %v1073
        %v1202 = vpack.c.bf16 %v1074, %v1074
        %v1203 = vpack.c.bf16 %v1075, %v1075
        %v1204 = vpack.c.bf16 %v1076, %v1076
        %v1205 = vpack.c.bf16 %v1077, %v1077
        %v1206 = vpack.c.bf16 %v1078, %v1078
        %1207 = vst [vmem:[#allocation2] sm:$0xf] %v1175
        %1208 = vst [vmem:[#allocation2 + $0x8] sm:$0xf] %v1176
        %1209 = vst [vmem:[#allocation2 + $0x10] sm:$0xf] %v1177
        %1210 = vst [vmem:[#allocation2 + $0x18] sm:$0xf] %v1178
        %1211 = vst [vmem:[#allocation2 + $0x20] sm:$0xf] %v1179
        %1212 = vst [vmem:[#allocation2 + $0x28] sm:$0xf] %v1180
        %1213 = vst [vmem:[#allocation2 + $0x30] sm:$0xf] %v1181
        %1214 = vst [vmem:[#allocation2 + $0x38] sm:$0xf] %v1182
        %1215 = vst [vmem:[#allocation2 + $0x40] sm:$0xf] %v1183
        %1216 = vst [vmem:[#allocation2 + $0x48] sm:$0xf] %v1184
        %1217 = vst [vmem:[#allocation2 + $0x50] sm:$0xf] %v1185
        %1218 = vst [vmem:[#allocation2 + $0x58] sm:$0xf] %v1186
        %1219 = vst [vmem:[#allocation2 + $0x60] sm:$0xf] %v1187
        %1220 = vst [vmem:[#allocation2 + $0x68] sm:$0xf] %v1188
        %1221 = vst [vmem:[#allocation2 + $0x70] sm:$0xf] %v1189
        %1222 = vst [vmem:[#allocation2 + $0x78] sm:$0xf] %v1190
        %1223 = vst [vmem:[#allocation2 + $0x80] sm:$0xf] %v1191
        %1224 = vst [vmem:[#allocation2 + $0x88] sm:$0xf] %v1192
        %1225 = vst [vmem:[#allocation2 + $0x90] sm:$0xf] %v1193
        %1226 = vst [vmem:[#allocation2 + $0x98] sm:$0xf] %v1194
        %1227 = vst [vmem:[#allocation2 + $0xa0] sm:$0xf] %v1195
        %1228 = vst [vmem:[#allocation2 + $0xa8] sm:$0xf] %v1196
        %1229 = vst [vmem:[#allocation2 + $0xb0] sm:$0xf] %v1197
        %1230 = vst [vmem:[#allocation2 + $0xb8] sm:$0xf] %v1198
        %1231 = vst [vmem:[#allocation2 + $0xc0] sm:$0xf] %v1199
        %1232 = vst [vmem:[#allocation2 + $0xc8] sm:$0xf] %v1200
        %1233 = vst [vmem:[#allocation2 + $0xd0] sm:$0xf] %v1201
        %1234 = vst [vmem:[#allocation2 + $0xd8] sm:$0xf] %v1202
        %1235 = vst [vmem:[#allocation2 + $0xe0] sm:$0xf] %v1203
        %1236 = vst [vmem:[#allocation2 + $0xe8] sm:$0xf] %v1204
        %1237 = vst [vmem:[#allocation2 + $0xf0] sm:$0xf] %v1205
        %1238 = vst [vmem:[#allocation2 + $0xf8] sm:$0xf] %v1206
        %v1239 = vpack.c.bf16 %v1143, %v1143
        %v1240 = vpack.c.bf16 %v1144, %v1144
        %v1241 = vpack.c.bf16 %v1145, %v1145
        %v1242 = vpack.c.bf16 %v1146, %v1146
        %v1243 = vpack.c.bf16 %v1147, %v1147
        %v1244 = vpack.c.bf16 %v1148, %v1148
        %v1245 = vpack.c.bf16 %v1149, %v1149
        %v1246 = vpack.c.bf16 %v1150, %v1150
        %v1247 = vpack.c.bf16 %v1151, %v1151
        %v1248 = vpack.c.bf16 %v1152, %v1152
        %v1249 = vpack.c.bf16 %v1153, %v1153
        %v1250 = vpack.c.bf16 %v1154, %v1154
        %v1251 = vpack.c.bf16 %v1155, %v1155
        %v1252 = vpack.c.bf16 %v1156, %v1156
        %v1253 = vpack.c.bf16 %v1157, %v1157
        %v1254 = vpack.c.bf16 %v1158, %v1158
        %v1255 = vpack.c.bf16 %v1159, %v1159
        %v1256 = vpack.c.bf16 %v1160, %v1160
        %v1257 = vpack.c.bf16 %v1161, %v1161
        %v1258 = vpack.c.bf16 %v1162, %v1162
        %v1259 = vpack.c.bf16 %v1163, %v1163
        %v1260 = vpack.c.bf16 %v1164, %v1164
        %v1261 = vpack.c.bf16 %v1165, %v1165
        %v1262 = vpack.c.bf16 %v1166, %v1166
        %v1263 = vpack.c.bf16 %v1167, %v1167
        %v1264 = vpack.c.bf16 %v1168, %v1168
        %v1265 = vpack.c.bf16 %v1169, %v1169
        %v1266 = vpack.c.bf16 %v1170, %v1170
        %v1267 = vpack.c.bf16 %v1171, %v1171
        %v1268 = vpack.c.bf16 %v1172, %v1172
        %v1269 = vpack.c.bf16 %v1173, %v1173
        %v1270 = vpack.c.bf16 %v1174, %v1174
        %1271 = vst [vmem:[#allocation2 + $0x4] sm:$0xf] %v1239
        %1272 = vst [vmem:[#allocation2 + $0xc] sm:$0xf] %v1240
        %1273 = vst [vmem:[#allocation2 + $0x14] sm:$0xf] %v1241
        %1274 = vst [vmem:[#allocation2 + $0x1c] sm:$0xf] %v1242
        %1275 = vst [vmem:[#allocation2 + $0x24] sm:$0xf] %v1243
        %1276 = vst [vmem:[#allocation2 + $0x2c] sm:$0xf] %v1244
        %1277 = vst [vmem:[#allocation2 + $0x34] sm:$0xf] %v1245
        %1278 = vst [vmem:[#allocation2 + $0x3c] sm:$0xf] %v1246
        %1279 = vst [vmem:[#allocation2 + $0x44] sm:$0xf] %v1247
        %1280 = vst [vmem:[#allocation2 + $0x4c] sm:$0xf] %v1248
        %1281 = vst [vmem:[#allocation2 + $0x54] sm:$0xf] %v1249
        %1282 = vst [vmem:[#allocation2 + $0x5c] sm:$0xf] %v1250
        %1283 = vst [vmem:[#allocation2 + $0x64] sm:$0xf] %v1251
        %1284 = vst [vmem:[#allocation2 + $0x6c] sm:$0xf] %v1252
        %1285 = vst [vmem:[#allocation2 + $0x74] sm:$0xf] %v1253
        %1286 = vst [vmem:[#allocation2 + $0x7c] sm:$0xf] %v1254
        %1287 = vst [vmem:[#allocation2 + $0x84] sm:$0xf] %v1255
        %1288 = vst [vmem:[#allocation2 + $0x8c] sm:$0xf] %v1256
        %1289 = vst [vmem:[#allocation2 + $0x94] sm:$0xf] %v1257
        %1290 = vst [vmem:[#allocation2 + $0x9c] sm:$0xf] %v1258
        %1291 = vst [vmem:[#allocation2 + $0xa4] sm:$0xf] %v1259
        %1292 = vst [vmem:[#allocation2 + $0xac] sm:$0xf] %v1260
        %1293 = vst [vmem:[#allocation2 + $0xb4] sm:$0xf] %v1261
        %1294 = vst [vmem:[#allocation2 + $0xbc] sm:$0xf] %v1262
        %1295 = vst [vmem:[#allocation2 + $0xc4] sm:$0xf] %v1263
        %1296 = vst [vmem:[#allocation2 + $0xcc] sm:$0xf] %v1264
        %1297 = vst [vmem:[#allocation2 + $0xd4] sm:$0xf] %v1265
        %1298 = vst [vmem:[#allocation2 + $0xdc] sm:$0xf] %v1266
        %1299 = vst [vmem:[#allocation2 + $0xe4] sm:$0xf] %v1267
        %1300 = vst [vmem:[#allocation2 + $0xec] sm:$0xf] %v1268
        %1301 = vst [vmem:[#allocation2 + $0xf4] sm:$0xf] %v1269
        %1302 = vst [vmem:[#allocation2 + $0xfc] sm:$0xf] %v1270
        %v1303 = vld [vmem:[#allocation2] sm:$0xff]
        %v1304 = vld [vmem:[#allocation2 + $0x8] sm:$0xff]
        %v1305 = vld [vmem:[#allocation2 + $0x10] sm:$0xff]
        %v1306 = vld [vmem:[#allocation2 + $0x18] sm:$0xff]
        %v1307 = vld [vmem:[#allocation2 + $0x20] sm:$0xff]
        %v1308 = vld [vmem:[#allocation2 + $0x28] sm:$0xff]
        %v1309 = vld [vmem:[#allocation2 + $0x30] sm:$0xff]
        %v1310 = vld [vmem:[#allocation2 + $0x38] sm:$0xff]
        %v1311 = vld [vmem:[#allocation2 + $0x40] sm:$0xff]
        %v1312 = vld [vmem:[#allocation2 + $0x48] sm:$0xff]
        %v1313 = vld [vmem:[#allocation2 + $0x50] sm:$0xff]
        %v1314 = vld [vmem:[#allocation2 + $0x58] sm:$0xff]
        %v1315 = vld [vmem:[#allocation2 + $0x60] sm:$0xff]
        %v1316 = vld [vmem:[#allocation2 + $0x68] sm:$0xff]
        %v1317 = vld [vmem:[#allocation2 + $0x70] sm:$0xff]
        %v1318 = vld [vmem:[#allocation2 + $0x78] sm:$0xff]
        %v1319 = vld [vmem:[#allocation2 + $0x80] sm:$0xff]
        %v1320 = vld [vmem:[#allocation2 + $0x88] sm:$0xff]
        %v1321 = vld [vmem:[#allocation2 + $0x90] sm:$0xff]
        %v1322 = vld [vmem:[#allocation2 + $0x98] sm:$0xff]
        %v1323 = vld [vmem:[#allocation2 + $0xa0] sm:$0xff]
        %v1324 = vld [vmem:[#allocation2 + $0xa8] sm:$0xff]
        %v1325 = vld [vmem:[#allocation2 + $0xb0] sm:$0xff]
        %v1326 = vld [vmem:[#allocation2 + $0xb8] sm:$0xff]
        %v1327 = vld [vmem:[#allocation2 + $0xc0] sm:$0xff]
        %v1328 = vld [vmem:[#allocation2 + $0xc8] sm:$0xff]
        %v1329 = vld [vmem:[#allocation2 + $0xd0] sm:$0xff]
        %v1330 = vld [vmem:[#allocation2 + $0xd8] sm:$0xff]
        %v1331 = vld [vmem:[#allocation2 + $0xe0] sm:$0xff]
        %v1332 = vld [vmem:[#allocation2 + $0xe8] sm:$0xff]
        %v1333 = vld [vmem:[#allocation2 + $0xf0] sm:$0xff]
        %v1334 = vld [vmem:[#allocation2 + $0xf8] sm:$0xff]
        %v1367 = vunpack.c.l.b16 %v1303
        %v1368 = vunpack.c.h.b16 %v1303
        %v1369 = vunpack.c.l.b16 %v1304
        %v1370 = vunpack.c.h.b16 %v1304
        %v1371 = vunpack.c.l.b16 %v1305
        %v1372 = vunpack.c.h.b16 %v1305
        %v1373 = vunpack.c.l.b16 %v1306
        %v1374 = vunpack.c.h.b16 %v1306
        %v1375 = vunpack.c.l.b16 %v1307
        %v1376 = vunpack.c.h.b16 %v1307
        %v1377 = vunpack.c.l.b16 %v1308
        %v1378 = vunpack.c.h.b16 %v1308
        %v1379 = vunpack.c.l.b16 %v1309
        %v1380 = vunpack.c.h.b16 %v1309
        %v1381 = vunpack.c.l.b16 %v1310
        %v1382 = vunpack.c.h.b16 %v1310
        %v1383 = vunpack.c.l.b16 %v1311
        %v1384 = vunpack.c.h.b16 %v1311
        %v1385 = vunpack.c.l.b16 %v1312
        %v1386 = vunpack.c.h.b16 %v1312
        %v1387 = vunpack.c.l.b16 %v1313
        %v1388 = vunpack.c.h.b16 %v1313
        %v1389 = vunpack.c.l.b16 %v1314
        %v1390 = vunpack.c.h.b16 %v1314
        %v1391 = vunpack.c.l.b16 %v1315
        %v1392 = vunpack.c.h.b16 %v1315
        %v1393 = vunpack.c.l.b16 %v1316
        %v1394 = vunpack.c.h.b16 %v1316
        %v1395 = vunpack.c.l.b16 %v1317
        %v1396 = vunpack.c.h.b16 %v1317
        %v1397 = vunpack.c.l.b16 %v1318
        %v1398 = vunpack.c.h.b16 %v1318
        %v1399 = vunpack.c.l.b16 %v1319
        %v1400 = vunpack.c.h.b16 %v1319
        %v1401 = vunpack.c.l.b16 %v1320
        %v1402 = vunpack.c.h.b16 %v1320
        %v1403 = vunpack.c.l.b16 %v1321
        %v1404 = vunpack.c.h.b16 %v1321
        %v1405 = vunpack.c.l.b16 %v1322
        %v1406 = vunpack.c.h.b16 %v1322
        %v1407 = vunpack.c.l.b16 %v1323
        %v1408 = vunpack.c.h.b16 %v1323
        %v1409 = vunpack.c.l.b16 %v1324
        %v1410 = vunpack.c.h.b16 %v1324
        %v1411 = vunpack.c.l.b16 %v1325
        %v1412 = vunpack.c.h.b16 %v1325
        %v1413 = vunpack.c.l.b16 %v1326
        %v1414 = vunpack.c.h.b16 %v1326
        %v1415 = vunpack.c.l.b16 %v1327
        %v1416 = vunpack.c.h.b16 %v1327
        %v1417 = vunpack.c.l.b16 %v1328
        %v1418 = vunpack.c.h.b16 %v1328
        %v1419 = vunpack.c.l.b16 %v1329
        %v1420 = vunpack.c.h.b16 %v1329
        %v1421 = vunpack.c.l.b16 %v1330
        %v1422 = vunpack.c.h.b16 %v1330
        %v1423 = vunpack.c.l.b16 %v1331
        %v1424 = vunpack.c.h.b16 %v1331
        %v1425 = vunpack.c.l.b16 %v1332
        %v1426 = vunpack.c.h.b16 %v1332
        %v1427 = vunpack.c.l.b16 %v1333
        %v1428 = vunpack.c.h.b16 %v1333
        %v1429 = vunpack.c.l.b16 %v1334
        %v1430 = vunpack.c.h.b16 %v1334
        %v1431 = vpack.c.b16 %v1369, %v1367
        %v1432 = vpack.c.b16 %v1370, %v1368
        %v1433 = vpack.c.b16 %v1373, %v1371
        %v1434 = vpack.c.b16 %v1374, %v1372
        %v1435 = vpack.c.b16 %v1377, %v1375
        %v1436 = vpack.c.b16 %v1378, %v1376
        %v1437 = vpack.c.b16 %v1381, %v1379
        %v1438 = vpack.c.b16 %v1382, %v1380
        %v1439 = vpack.c.b16 %v1385, %v1383
        %v1440 = vpack.c.b16 %v1386, %v1384
        %v1441 = vpack.c.b16 %v1389, %v1387
        %v1442 = vpack.c.b16 %v1390, %v1388
        %v1443 = vpack.c.b16 %v1393, %v1391
        %v1444 = vpack.c.b16 %v1394, %v1392
        %v1445 = vpack.c.b16 %v1397, %v1395
        %v1446 = vpack.c.b16 %v1398, %v1396
        %v1447 = vpack.c.b16 %v1401, %v1399
        %v1448 = vpack.c.b16 %v1402, %v1400
        %v1449 = vpack.c.b16 %v1405, %v1403
        %v1450 = vpack.c.b16 %v1406, %v1404
        %v1451 = vpack.c.b16 %v1409, %v1407
        %v1452 = vpack.c.b16 %v1410, %v1408
        %v1453 = vpack.c.b16 %v1413, %v1411
        %v1454 = vpack.c.b16 %v1414, %v1412
        %v1455 = vpack.c.b16 %v1417, %v1415
        %v1456 = vpack.c.b16 %v1418, %v1416
        %v1457 = vpack.c.b16 %v1421, %v1419
        %v1458 = vpack.c.b16 %v1422, %v1420
        %v1459 = vpack.c.b16 %v1425, %v1423
        %v1460 = vpack.c.b16 %v1426, %v1424
        %v1461 = vpack.c.b16 %v1429, %v1427
        %v1462 = vpack.c.b16 %v1430, %v1428
        %v1527 = vunpack.c.l.b16 %v315
        %v1528 = vunpack.c.l.b16 %v316
        %v1529 = vunpack.c.l.b16 %v317
        %v1530 = vunpack.c.l.b16 %v318
        %v1531 = vunpack.c.l.b16 %v319
        %v1532 = vunpack.c.l.b16 %v320
        %v1533 = vunpack.c.l.b16 %v321
        %v1534 = vunpack.c.l.b16 %v322
        %v1535 = vunpack.c.l.b16 %v323
        %v1536 = vunpack.c.l.b16 %v324
        %v1537 = vunpack.c.l.b16 %v325
        %v1538 = vunpack.c.l.b16 %v326
        %v1539 = vunpack.c.l.b16 %v327
        %v1540 = vunpack.c.l.b16 %v328
        %v1541 = vunpack.c.l.b16 %v329
        %v1542 = vunpack.c.l.b16 %v330
        %v1543 = vunpack.c.l.b16 %v331
        %v1544 = vunpack.c.l.b16 %v332
        %v1545 = vunpack.c.l.b16 %v333
        %v1546 = vunpack.c.l.b16 %v334
        %v1547 = vunpack.c.l.b16 %v335
        %v1548 = vunpack.c.l.b16 %v336
        %v1549 = vunpack.c.l.b16 %v337
        %v1550 = vunpack.c.l.b16 %v338
        %v1551 = vunpack.c.l.b16 %v339
        %v1552 = vunpack.c.l.b16 %v340
        %v1553 = vunpack.c.l.b16 %v341
        %v1554 = vunpack.c.l.b16 %v342
        %v1555 = vunpack.c.l.b16 %v343
        %v1556 = vunpack.c.l.b16 %v344
        %v1557 = vunpack.c.l.b16 %v345
        %v1558 = vunpack.c.l.b16 %v346
        %v1559 = vpack.c.b16 %v1528, %v1527
        %v1560 = vpack.c.b16 %v1530, %v1529
        %v1561 = vpack.c.b16 %v1532, %v1531
        %v1562 = vpack.c.b16 %v1534, %v1533
        %v1563 = vpack.c.b16 %v1536, %v1535
        %v1564 = vpack.c.b16 %v1538, %v1537
        %v1565 = vpack.c.b16 %v1540, %v1539
        %v1566 = vpack.c.b16 %v1542, %v1541
        %v1567 = vpack.c.b16 %v1544, %v1543
        %v1568 = vpack.c.b16 %v1546, %v1545
        %v1569 = vpack.c.b16 %v1548, %v1547
        %v1570 = vpack.c.b16 %v1550, %v1549
        %v1571 = vpack.c.b16 %v1552, %v1551
        %v1572 = vpack.c.b16 %v1554, %v1553
        %v1573 = vpack.c.b16 %v1556, %v1555
        %v1574 = vpack.c.b16 %v1558, %v1557
        %1591 = vmatpush.bf16.msra.mxu0 %v1566
        %1592 = vmatpush.bf16.msra.mxu0 %v1565
        %1593 = vmatpush.bf16.msra.mxu0 %v1564
        %1594 = vmatpush.bf16.msra.mxu0 %v1563
        %1595 = vmatpush.bf16.msra.mxu0 %v1562
        %1596 = vmatpush.bf16.msra.mxu0 %v1561
        %1597 = vmatpush.bf16.msra.mxu0 %v1560
        %1598 = vmatpush.bf16.msra.mxu0 %v1559
        %1599 = vmatmul.bf16.gmra.mxu0 %v1431
        %v1600 = vpop.f32.mrf.mxu0
        %v1601 = vadd.f32 0.0, %v1600
        %v1602 = vpop.f32.mrf.mxu0
        %v1603 = vadd.f32 0.0, %v1602
        %1604 = vmatmul.bf16.gmra.mxu0 %v1433
        %v1605 = vpop.f32.mrf.mxu0
        %v1606 = vadd.f32 0.0, %v1605
        %v1607 = vpop.f32.mrf.mxu0
        %v1608 = vadd.f32 0.0, %v1607
        %1609 = vmatmul.bf16.gmra.mxu0 %v1435
        %v1610 = vpop.f32.mrf.mxu0
        %v1611 = vadd.f32 0.0, %v1610
        %v1612 = vpop.f32.mrf.mxu0
        %v1613 = vadd.f32 0.0, %v1612
        %1614 = vmatmul.bf16.gmra.mxu0 %v1437
        %v1615 = vpop.f32.mrf.mxu0
        %v1616 = vadd.f32 0.0, %v1615
        %v1617 = vpop.f32.mrf.mxu0
        %v1618 = vadd.f32 0.0, %v1617
        %1619 = vmatmul.bf16.gmra.mxu0 %v1439
        %v1620 = vpop.f32.mrf.mxu0
        %v1621 = vadd.f32 0.0, %v1620
        %v1622 = vpop.f32.mrf.mxu0
        %v1623 = vadd.f32 0.0, %v1622
        %1624 = vmatmul.bf16.gmra.mxu0 %v1441
        %v1625 = vpop.f32.mrf.mxu0
        %v1626 = vadd.f32 0.0, %v1625
        %v1627 = vpop.f32.mrf.mxu0
        %v1628 = vadd.f32 0.0, %v1627
        %1629 = vmatmul.bf16.gmra.mxu0 %v1443
        %v1630 = vpop.f32.mrf.mxu0
        %v1631 = vadd.f32 0.0, %v1630
        %v1632 = vpop.f32.mrf.mxu0
        %v1633 = vadd.f32 0.0, %v1632
        %1634 = vmatmul.bf16.gmra.mxu0 %v1445
        %v1635 = vpop.f32.mrf.mxu0
        %v1636 = vadd.f32 0.0, %v1635
        %v1637 = vpop.f32.mrf.mxu0
        %v1638 = vadd.f32 0.0, %v1637
        %1639 = vmatmul.bf16.gmra.mxu0 %v1447
        %v1640 = vpop.f32.mrf.mxu0
        %v1641 = vadd.f32 0.0, %v1640
        %v1642 = vpop.f32.mrf.mxu0
        %v1643 = vadd.f32 0.0, %v1642
        %1644 = vmatmul.bf16.gmra.mxu0 %v1449
        %v1645 = vpop.f32.mrf.mxu0
        %v1646 = vadd.f32 0.0, %v1645
        %v1647 = vpop.f32.mrf.mxu0
        %v1648 = vadd.f32 0.0, %v1647
        %1649 = vmatmul.bf16.gmra.mxu0 %v1451
        %v1650 = vpop.f32.mrf.mxu0
        %v1651 = vadd.f32 0.0, %v1650
        %v1652 = vpop.f32.mrf.mxu0
        %v1653 = vadd.f32 0.0, %v1652
        %1654 = vmatmul.bf16.gmra.mxu0 %v1453
        %v1655 = vpop.f32.mrf.mxu0
        %v1656 = vadd.f32 0.0, %v1655
        %v1657 = vpop.f32.mrf.mxu0
        %v1658 = vadd.f32 0.0, %v1657
        %1659 = vmatmul.bf16.gmra.mxu0 %v1455
        %v1660 = vpop.f32.mrf.mxu0
        %v1661 = vadd.f32 0.0, %v1660
        %v1662 = vpop.f32.mrf.mxu0
        %v1663 = vadd.f32 0.0, %v1662
        %1664 = vmatmul.bf16.gmra.mxu0 %v1457
        %v1665 = vpop.f32.mrf.mxu0
        %v1666 = vadd.f32 0.0, %v1665
        %v1667 = vpop.f32.mrf.mxu0
        %v1668 = vadd.f32 0.0, %v1667
        %1669 = vmatmul.bf16.gmra.mxu0 %v1459
        %v1670 = vpop.f32.mrf.mxu0
        %v1671 = vadd.f32 0.0, %v1670
        %v1672 = vpop.f32.mrf.mxu0
        %v1673 = vadd.f32 0.0, %v1672
        %1674 = vmatmul.bf16.gmra.mxu0 %v1461
        %v1675 = vpop.f32.mrf.mxu0
        %v1676 = vadd.f32 0.0, %v1675
        %v1677 = vpop.f32.mrf.mxu0
        %v1678 = vadd.f32 0.0, %v1677
        %1679 = vdwg.mxu0
        %1680 = vmatpush.bf16.msra.mxu0 %v1574
        %1681 = vmatpush.bf16.msra.mxu0 %v1573
        %1682 = vmatpush.bf16.msra.mxu0 %v1572
        %1683 = vmatpush.bf16.msra.mxu0 %v1571
        %1684 = vmatpush.bf16.msra.mxu0 %v1570
        %1685 = vmatpush.bf16.msra.mxu0 %v1569
        %1686 = vmatpush.bf16.msra.mxu0 %v1568
        %1687 = vmatpush.bf16.msra.mxu0 %v1567
        %1688 = vmatmul.bf16.gmra.mxu0 %v1432
        %v1689 = vpop.f32.mrf.mxu0
        %v1690 = vadd.f32 %v1601, %v1689
        %v1691 = vpop.f32.mrf.mxu0
        %v1692 = vadd.f32 %v1603, %v1691
        %1693 = vmatmul.bf16.gmra.mxu0 %v1434
        %v1694 = vpop.f32.mrf.mxu0
        %v1695 = vadd.f32 %v1606, %v1694
        %v1696 = vpop.f32.mrf.mxu0
        %v1697 = vadd.f32 %v1608, %v1696
        %1698 = vmatmul.bf16.gmra.mxu0 %v1436
        %v1699 = vpop.f32.mrf.mxu0
        %v1700 = vadd.f32 %v1611, %v1699
        %v1701 = vpop.f32.mrf.mxu0
        %v1702 = vadd.f32 %v1613, %v1701
        %1703 = vmatmul.bf16.gmra.mxu0 %v1438
        %v1704 = vpop.f32.mrf.mxu0
        %v1705 = vadd.f32 %v1616, %v1704
        %v1706 = vpop.f32.mrf.mxu0
        %v1707 = vadd.f32 %v1618, %v1706
        %1708 = vmatmul.bf16.gmra.mxu0 %v1440
        %v1709 = vpop.f32.mrf.mxu0
        %v1710 = vadd.f32 %v1621, %v1709
        %v1711 = vpop.f32.mrf.mxu0
        %v1712 = vadd.f32 %v1623, %v1711
        %1713 = vmatmul.bf16.gmra.mxu0 %v1442
        %v1714 = vpop.f32.mrf.mxu0
        %v1715 = vadd.f32 %v1626, %v1714
        %v1716 = vpop.f32.mrf.mxu0
        %v1717 = vadd.f32 %v1628, %v1716
        %1718 = vmatmul.bf16.gmra.mxu0 %v1444
        %v1719 = vpop.f32.mrf.mxu0
        %v1720 = vadd.f32 %v1631, %v1719
        %v1721 = vpop.f32.mrf.mxu0
        %v1722 = vadd.f32 %v1633, %v1721
        %1723 = vmatmul.bf16.gmra.mxu0 %v1446
        %v1724 = vpop.f32.mrf.mxu0
        %v1725 = vadd.f32 %v1636, %v1724
        %v1726 = vpop.f32.mrf.mxu0
        %v1727 = vadd.f32 %v1638, %v1726
        %1728 = vmatmul.bf16.gmra.mxu0 %v1448
        %v1729 = vpop.f32.mrf.mxu0
        %v1730 = vadd.f32 %v1641, %v1729
        %v1731 = vpop.f32.mrf.mxu0
        %v1732 = vadd.f32 %v1643, %v1731
        %1733 = vmatmul.bf16.gmra.mxu0 %v1450
        %v1734 = vpop.f32.mrf.mxu0
        %v1735 = vadd.f32 %v1646, %v1734
        %v1736 = vpop.f32.mrf.mxu0
        %v1737 = vadd.f32 %v1648, %v1736
        %1738 = vmatmul.bf16.gmra.mxu0 %v1452
        %v1739 = vpop.f32.mrf.mxu0
        %v1740 = vadd.f32 %v1651, %v1739
        %v1741 = vpop.f32.mrf.mxu0
        %v1742 = vadd.f32 %v1653, %v1741
        %1743 = vmatmul.bf16.gmra.mxu0 %v1454
        %v1744 = vpop.f32.mrf.mxu0
        %v1745 = vadd.f32 %v1656, %v1744
        %v1746 = vpop.f32.mrf.mxu0
        %v1747 = vadd.f32 %v1658, %v1746
        %1748 = vmatmul.bf16.gmra.mxu0 %v1456
        %v1749 = vpop.f32.mrf.mxu0
        %v1750 = vadd.f32 %v1661, %v1749
        %v1751 = vpop.f32.mrf.mxu0
        %v1752 = vadd.f32 %v1663, %v1751
        %1753 = vmatmul.bf16.gmra.mxu0 %v1458
        %v1754 = vpop.f32.mrf.mxu0
        %v1755 = vadd.f32 %v1666, %v1754
        %v1756 = vpop.f32.mrf.mxu0
        %v1757 = vadd.f32 %v1668, %v1756
        %1758 = vmatmul.bf16.gmra.mxu0 %v1460
        %v1759 = vpop.f32.mrf.mxu0
        %v1760 = vadd.f32 %v1671, %v1759
        %v1761 = vpop.f32.mrf.mxu0
        %v1762 = vadd.f32 %v1673, %v1761
        %1763 = vmatmul.bf16.gmra.mxu0 %v1462
        %v1764 = vpop.f32.mrf.mxu0
        %v1765 = vadd.f32 %v1676, %v1764
        %v1766 = vpop.f32.mrf.mxu0
        %v1767 = vadd.f32 %v1678, %v1766
        %1768 = vdwg.mxu0
        %v1769 = vpack.c.bf16 %v1690, %v1690
        %v1770 = vpack.c.bf16 %v1692, %v1692
        %v1771 = vpack.c.bf16 %v1695, %v1695
        %v1772 = vpack.c.bf16 %v1697, %v1697
        %v1773 = vpack.c.bf16 %v1700, %v1700
        %v1774 = vpack.c.bf16 %v1702, %v1702
        %v1775 = vpack.c.bf16 %v1705, %v1705
        %v1776 = vpack.c.bf16 %v1707, %v1707
        %v1777 = vpack.c.bf16 %v1710, %v1710
        %v1778 = vpack.c.bf16 %v1712, %v1712
        %v1779 = vpack.c.bf16 %v1715, %v1715
        %v1780 = vpack.c.bf16 %v1717, %v1717
        %v1781 = vpack.c.bf16 %v1720, %v1720
        %v1782 = vpack.c.bf16 %v1722, %v1722
        %v1783 = vpack.c.bf16 %v1725, %v1725
        %v1784 = vpack.c.bf16 %v1727, %v1727
        %v1785 = vpack.c.bf16 %v1730, %v1730
        %v1786 = vpack.c.bf16 %v1732, %v1732
        %v1787 = vpack.c.bf16 %v1735, %v1735
        %v1788 = vpack.c.bf16 %v1737, %v1737
        %v1789 = vpack.c.bf16 %v1740, %v1740
        %v1790 = vpack.c.bf16 %v1742, %v1742
        %v1791 = vpack.c.bf16 %v1745, %v1745
        %v1792 = vpack.c.bf16 %v1747, %v1747
        %v1793 = vpack.c.bf16 %v1750, %v1750
        %v1794 = vpack.c.bf16 %v1752, %v1752
        %v1795 = vpack.c.bf16 %v1755, %v1755
        %v1796 = vpack.c.bf16 %v1757, %v1757
        %v1797 = vpack.c.bf16 %v1760, %v1760
        %v1798 = vpack.c.bf16 %v1762, %v1762
        %v1799 = vpack.c.bf16 %v1765, %v1765
        %v1800 = vpack.c.bf16 %v1767, %v1767
        %1801 = vst [vmem:[%s234] sm:$0xf] %v1769
        %1802 = vst [vmem:[%s234 + $0x4] sm:$0xf] %v1770
        %1803 = vst [vmem:[%s234 + $0x8] sm:$0xf] %v1771
        %1804 = vst [vmem:[%s234 + $0xc] sm:$0xf] %v1772
        %1805 = vst [vmem:[%s234 + $0x10] sm:$0xf] %v1773
        %1806 = vst [vmem:[%s234 + $0x14] sm:$0xf] %v1774
        %1807 = vst [vmem:[%s234 + $0x18] sm:$0xf] %v1775
        %1808 = vst [vmem:[%s234 + $0x1c] sm:$0xf] %v1776
        %1809 = vst [vmem:[%s234 + $0x20] sm:$0xf] %v1777
        %1810 = vst [vmem:[%s234 + $0x24] sm:$0xf] %v1778
        %1811 = vst [vmem:[%s234 + $0x28] sm:$0xf] %v1779
        %1812 = vst [vmem:[%s234 + $0x2c] sm:$0xf] %v1780
        %1813 = vst [vmem:[%s234 + $0x30] sm:$0xf] %v1781
        %1814 = vst [vmem:[%s234 + $0x34] sm:$0xf] %v1782
        %1815 = vst [vmem:[%s234 + $0x38] sm:$0xf] %v1783
        %1816 = vst [vmem:[%s234 + $0x3c] sm:$0xf] %v1784
        %1817 = vst [vmem:[%s234 + $0x40] sm:$0xf] %v1785
        %1818 = vst [vmem:[%s234 + $0x44] sm:$0xf] %v1786
        %1819 = vst [vmem:[%s234 + $0x48] sm:$0xf] %v1787
        %1820 = vst [vmem:[%s234 + $0x4c] sm:$0xf] %v1788
        %1821 = vst [vmem:[%s234 + $0x50] sm:$0xf] %v1789
        %1822 = vst [vmem:[%s234 + $0x54] sm:$0xf] %v1790
        %1823 = vst [vmem:[%s234 + $0x58] sm:$0xf] %v1791
        %1824 = vst [vmem:[%s234 + $0x5c] sm:$0xf] %v1792
        %1825 = vst [vmem:[%s234 + $0x60] sm:$0xf] %v1793
        %1826 = vst [vmem:[%s234 + $0x64] sm:$0xf] %v1794
        %1827 = vst [vmem:[%s234 + $0x68] sm:$0xf] %v1795
        %1828 = vst [vmem:[%s234 + $0x6c] sm:$0xf] %v1796
        %1829 = vst [vmem:[%s234 + $0x70] sm:$0xf] %v1797
        %1830 = vst [vmem:[%s234 + $0x74] sm:$0xf] %v1798
        %1831 = vst [vmem:[%s234 + $0x78] sm:$0xf] %v1799
        %1832 = vst [vmem:[%s234 + $0x7c] sm:$0xf] %v1800
        %s1833 = sand.u32 %s142, 1
        %s1834 = scalar_lea.sflag [#allocation4], %s1833
        %s1835 = sand.u32 %s142, 1
        %s1836 = smul.addr %s1835, 128
        %s1837 = scalar_lea.vmem [#allocation3], %s1836
        // Predicated region
        $region41: #{tpu_custom_call.1} parent=39 // pred_check
          %p1838 = pneg %p152
        $region42: #{tpu_custom_call.1} parent=39 // pred_check_branch
          %1840 = sbr.rel (%p1838) target = $region44
        $region43: #{tpu_custom_call.1} parent=39 // pred_region
          %s1841 = smul.u32 32, %s19
          %1843 = vsyncadd %s1834, 0
          %s1844 = smul.addr %s1841, 4
          %s1845 = scalar_lea.hbm %s5, %s1844
          %s1846 = sshll.u32 %s1837, 4
          %s1847 = int_to_ptr.vmem [resolvable:$true] %s1846
          %s1848 = sshll.u32 %s1845, 4
          %s1849 = int_to_ptr.hbm [resolvable:$true] %s1848
          %1854 = dma.vmem_to_hbm [thread:$0]  %s1847, 2048, %s1849, %s1834, 64, 64, 4
        $region44: #{tpu_custom_call.1} parent=39 // pred_fallthru
          _
      $region40: #{tpu_custom_call.1} parent=5 // pred_fallthru
        _
      %p1855 = scmp.le.s32.totalorder 2, %s14
      // Predicated region
      $region45: #{tpu_custom_call.1} parent=5 // pred_check
        %p1856 = pneg %p1855
      $region46: #{tpu_custom_call.1} parent=5 // pred_check_branch
        %1858 = sbr.rel (%p1856) target = $region48
      $region47: #{tpu_custom_call.1} parent=5 // pred_region
        %s1859 = ssub.s32 %s14, 2
        // Predicated region
        $region49: #{tpu_custom_call.1} parent=47 // pred_check
          %p1860 = pneg %p158
        $region50: #{tpu_custom_call.1} parent=47 // pred_check_branch
          %1862 = sbr.rel (%p1860) target = $region52
        $region51: #{tpu_custom_call.1} parent=47 // pred_region
          %s1863 = sand.u32 %s143, 1
          %s1864 = scalar_lea.sflag [#allocation4], %s1863
          %s1865 = sand.u32 %s143, 1
          %s1866 = smul.addr %s1865, 128
          %s1867 = scalar_lea.vmem [#allocation3], %s1866
          %1869 = dma.done %s1864, 2048
        $region52: #{tpu_custom_call.1} parent=47 // pred_fallthru
          _
      $region48: #{tpu_custom_call.1} parent=5 // pred_fallthru
        _
    $region6: #{tpu_custom_call.1} parent=1 // loop_footer
      %s18 = sadd.s32 1, %s14
    $region7: #{tpu_custom_call.1} parent=1 // loop_footer_branch
      %13 = sbr.rel target = $region3
    $region8: #{tpu_custom_call.1} parent=1 // loop_exit
      _
    %1870 = vsyncpa [#allocation4], 1
    %s1871 = scalar_lea.sflag [#allocation4], 1
    %1872 = vsyncpa %s1871, 1

// kernel: tpu_custom_call.1
$region0: #{tpu_custom_call.1}
  #allocation0 [shape = 'u32[]', space=smem, size = 0x4, offset = 0x4, fixed_abs, tag = 'smem constant byte address 0x4 - core index']
  #allocation1 [shape = 'u32[72,128]{1,0:T(1,128)}', space=vmem, size = 0x9000, scoped, tag = 'internal scratch']
  #allocation2 [shape = 'bf16[256,256]{1,0:T(8,128)(2,1)}', space=vmem, size = 0x20000, scoped, tag = 'scratch operand']
  %s0 = inlined_call_operand.vmem [shape: bf16[512,8], index: 0, kind: input, shape index: {}]
  %s1 = inlined_call_operand.vmem [shape: bf16[512,8], index: 1, kind: input, shape index: {}]
  %s2 = inlined_call_operand.vmem [shape: bf16[8,256], index: 2, kind: input, shape index: {}]
  %s3 = inlined_call_operand.vmem [shape: bf16[8,256], index: 3, kind: input, shape index: {}]
  %s4 = inlined_call_operand.vmem [shape: bf16[256,128], index: 4, kind: input, shape index: {}]
  %s5 = inlined_call_operand.hbm [shape: bf16[512,128], index: 5, kind: output, shape index: {}]
  %s6 = sld [smem:[#allocation0]]
  $region53: #{tpu_custom_call.1} parent=0
    _
  %s8 = ssub.s32 1, %s6
  %s9 = scalar_select 0, %s8, %s6
  $region1: #{tpu_custom_call.1} parent=0
    #allocation3 [shape = 'u8[131072]{0}', space=vmem, size = 0x20000, scoped, tag = 'output window, operand 0']
    #allocation4 [shape = 's32[2]{0}', space=sflag, size = 0x8, scoped, tag = 'scoped memory for tpu_custom_call.1']
    %10 = vsyncpa [#allocation4], 0
    %s11 = scalar_lea.sflag [#allocation4], 1
    %12 = vsyncpa %s11, 0
    loop: start=0, step=1, limit=4
    $region2: #{tpu_custom_call.1} parent=1 // loop_pre_header
      _
    $region3: #{tpu_custom_call.1} parent=1 // loop_header
      %s14 = sphi 0, %s18
      %p15 = scmp.ge.s32.totalorder %s14, 4
      %s24 = sphi 0, %s26
      %s27 = sphi 0, %s24
      %s28 = sphi 0, %s27
      %s44 = sphi 0, %s28
      %s50 = sphi 0, %s52
      %s53 = sphi 0, %s50
      %s54 = sphi 0, %s53
      %s70 = sphi 0, %s54
      %s74 = sphi 0, %s74
      %s76 = sphi 0, %s74
      %s77 = sphi 0, %s76
      %s91 = sphi 0, %s77
      %s95 = sphi 0, %s95
      %s97 = sphi 0, %s95
      %s98 = sphi 0, %s97
      %s112 = sphi 0, %s98
      %s116 = sphi 0, %s116
      %s118 = sphi 0, %s116
      %s119 = sphi 0, %s118
      %s133 = sphi 0, %s119
      %s139 = sphi 0, %s141
      %s142 = sphi 0, %s139
      %s143 = sphi 0, %s142
      %s159 = sphi 0, %s143
    $region4: #{tpu_custom_call.1} parent=1 // loop_header_branch
      %17 = sbr.rel (%p15) target = $region8
    $region5: #{tpu_custom_call.1} parent=1 // loop_body
      %s19 = ssub.s32 %s14, 1
      %s20 = ssub.s32 %s14, 2
      %s21 = sadd.s32 %s14, 1
      %s22 = ssub.s32 %s14, %s21
      %p23 = scmp.eq.s32.totalorder %s22, 0
      %s25 = sadd.s32 %s24, 1
      %s26 = scalar_select %p23, %s24, %s25
      %p29 = pneg %p23
      %p30 = scmp.eq.s32.totalorder %s14, 1
      %p31 = por %p29, %p30
      %p32 = scmp.ne.s32.totalorder %s24, %s27
      %p33 = scmp.eq.s32.totalorder %s14, 0
      %p34 = por %p32, %p33
      %p35 = scmp.ne.s32.totalorder %s24, %s27
      %p36 = scmp.eq.s32.totalorder %s19, 1
      %p37 = por %p35, %p36
      %p38 = scmp.ne.s32.totalorder %s27, %s28
      %p39 = scmp.eq.s32.totalorder %s19, 0
      %p40 = por %p38, %p39
      %p41 = scmp.ne.s32.totalorder %s27, %s28
      %p42 = scmp.eq.s32.totalorder %s20, 1
      %p43 = por %p41, %p42
      %p45 = scmp.ne.s32.totalorder %s28, %s44
      %p46 = scmp.eq.s32.totalorder %s20, 0
      %p47 = por %p45, %p46
      %s48 = ssub.s32 %s14, %s21
      %p49 = scmp.eq.s32.totalorder %s48, 0
      %s51 = sadd.s32 %s50, 1
      %s52 = scalar_select %p49, %s50, %s51
      %p55 = pneg %p49
      %p56 = scmp.eq.s32.totalorder %s14, 1
      %p57 = por %p55, %p56
      %p58 = scmp.ne.s32.totalorder %s50, %s53
      %p59 = scmp.eq.s32.totalorder %s14, 0
      %p60 = por %p58, %p59
      %p61 = scmp.ne.s32.totalorder %s50, %s53
      %p62 = scmp.eq.s32.totalorder %s19, 1
      %p63 = por %p61, %p62
      %p64 = scmp.ne.s32.totalorder %s53, %s54
      %p65 = scmp.eq.s32.totalorder %s19, 0
      %p66 = por %p64, %p65
      %p67 = scmp.ne.s32.totalorder %s53, %s54
      %p68 = scmp.eq.s32.totalorder %s20, 1
      %p69 = por %p67, %p68
      %p71 = scmp.ne.s32.totalorder %s54, %s70
      %p72 = scmp.eq.s32.totalorder %s20, 0
      %p73 = por %p71, %p72
      %s75 = sadd.s32 %s74, 1
      %p78 = scmp.eq.s32.totalorder %s14, 1
      %p79 = scmp.ne.s32.totalorder %s74, %s76
      %p80 = scmp.eq.s32.totalorder %s14, 0
      %p81 = por %p79, %p80
      %p82 = scmp.ne.s32.totalorder %s74, %s76
      %p83 = scmp.eq.s32.totalorder %s19, 1
      %p84 = por %p82, %p83
      %p85 = scmp.ne.s32.totalorder %s76, %s77
      %p86 = scmp.eq.s32.totalorder %s19, 0
      %p87 = por %p85, %p86
      %p88 = scmp.ne.s32.totalorder %s76, %s77
      %p89 = scmp.eq.s32.totalorder %s20, 1
      %p90 = por %p88, %p89
      %p92 = scmp.ne.s32.totalorder %s77, %s91
      %p93 = scmp.eq.s32.totalorder %s20, 0
      %p94 = por %p92, %p93
      %s96 = sadd.s32 %s95, 1
      %p99 = scmp.eq.s32.totalorder %s14, 1
      %p100 = scmp.ne.s32.totalorder %s95, %s97
      %p101 = scmp.eq.s32.totalorder %s14, 0
      %p102 = por %p100, %p101
      %p103 = scmp.ne.s32.totalorder %s95, %s97
      %p104 = scmp.eq.s32.totalorder %s19, 1
      %p105 = por %p103, %p104
      %p106 = scmp.ne.s32.totalorder %s97, %s98
      %p107 = scmp.eq.s32.totalorder %s19, 0
      %p108 = por %p106, %p107
      %p109 = scmp.ne.s32.totalorder %s97, %s98
      %p110 = scmp.eq.s32.totalorder %s20, 1
      %p111 = por %p109, %p110
      %p113 = scmp.ne.s32.totalorder %s98, %s112
      %p114 = scmp.eq.s32.totalorder %s20, 0
      %p115 = por %p113, %p114
      %s117 = sadd.s32 %s116, 1
      %p120 = scmp.eq.s32.totalorder %s14, 1
      %p121 = scmp.ne.s32.totalorder %s116, %s118
      %p122 = scmp.eq.s32.totalorder %s14, 0
      %p123 = por %p121, %p122
      %p124 = scmp.ne.s32.totalorder %s116, %s118
      %p125 = scmp.eq.s32.totalorder %s19, 1
      %p126 = por %p124, %p125
      %p127 = scmp.ne.s32.totalorder %s118, %s119
      %p128 = scmp.eq.s32.totalorder %s19, 0
      %p129 = por %p127, %p128
      %p130 = scmp.ne.s32.totalorder %s118, %s119
      %p131 = scmp.eq.s32.totalorder %s20, 1
      %p132 = por %p130, %p131
      %p134 = scmp.ne.s32.totalorder %s119, %s133
      %p135 = scmp.eq.s32.totalorder %s20, 0
      %p136 = por %p134, %p135
      %s137 = ssub.s32 %s14, %s21
      %p138 = scmp.eq.s32.totalorder %s137, 0
      %s140 = sadd.s32 %s139, 1
      %s141 = scalar_select %p138, %s139, %s140
      %p144 = pneg %p138
      %p145 = scmp.eq.s32.totalorder %s14, 1
      %p146 = por %p144, %p145
      %p147 = scmp.ne.s32.totalorder %s139, %s142
      %p148 = scmp.eq.s32.totalorder %s14, 0
      %p149 = por %p147, %p148
      %p150 = scmp.ne.s32.totalorder %s139, %s142
      %p151 = scmp.eq.s32.totalorder %s19, 1
      %p152 = por %p150, %p151
      %p153 = scmp.ne.s32.totalorder %s142, %s143
      %p154 = scmp.eq.s32.totalorder %s19, 0
      %p155 = por %p153, %p154
      %p156 = scmp.ne.s32.totalorder %s142, %s143
      %p157 = scmp.eq.s32.totalorder %s20, 1
      %p158 = por %p156, %p157
      %p160 = scmp.ne.s32.totalorder %s143, %s159
      %p161 = scmp.eq.s32.totalorder %s20, 0
      %p162 = por %p160, %p161
      %p163 = scmp.le.s32.totalorder 1, %s14
      %p164 = scmp.lt.s32.totalorder %s14, 3
      %p165 = pnand %p163, %p164
      %p166 = pneg %p165
      // Predicated region
      $region9: #{tpu_custom_call.1} parent=5 // pred_check
        _
      $region10: #{tpu_custom_call.1} parent=5 // pred_check_branch
        %168 = sbr.rel (%p165) target = $region12
      $region11: #{tpu_custom_call.1} parent=5 // pred_region
        %s169 = ssub.s32 %s14, 1
        // Predicated region
        $region13: #{tpu_custom_call.1} parent=11 // pred_check
          %p170 = pneg %p87
        $region14: #{tpu_custom_call.1} parent=11 // pred_check_branch
          %172 = sbr.rel (%p170) target = $region16
        $region15: #{tpu_custom_call.1} parent=11 // pred_region
          _
        $region16: #{tpu_custom_call.1} parent=11 // pred_fallthru
          _
        // Predicated region
        $region17: #{tpu_custom_call.1} parent=11 // pred_check
          %p173 = pneg %p108
        $region18: #{tpu_custom_call.1} parent=11 // pred_check_branch
          %175 = sbr.rel (%p173) target = $region20
        $region19: #{tpu_custom_call.1} parent=11 // pred_region
          _
        $region20: #{tpu_custom_call.1} parent=11 // pred_fallthru
          _
        // Predicated region
        $region21: #{tpu_custom_call.1} parent=11 // pred_check
          %p176 = pneg %p129
        $region22: #{tpu_custom_call.1} parent=11 // pred_check_branch
          %178 = sbr.rel (%p176) target = $region24
        $region23: #{tpu_custom_call.1} parent=11 // pred_region
          _
        $region24: #{tpu_custom_call.1} parent=11 // pred_fallthru
          _
      $region12: #{tpu_custom_call.1} parent=5 // pred_fallthru
        _
      %p179 = scmp.lt.s32.totalorder %s14, 2
      // Predicated region
      $region25: #{tpu_custom_call.1} parent=5 // pred_check
        %p180 = pneg %p179
      $region26: #{tpu_custom_call.1} parent=5 // pred_check_branch
        %182 = sbr.rel (%p180) target = $region28
      $region27: #{tpu_custom_call.1} parent=5 // pred_region
        // Predicated region
        $region29: #{tpu_custom_call.1} parent=27 // pred_check
          %p183 = pneg %p34
        $region30: #{tpu_custom_call.1} parent=27 // pred_check_branch
          %185 = sbr.rel (%p183) target = $region32
        $region31: #{tpu_custom_call.1} parent=27 // pred_region
          %s186 = smul.u32 32, %s14
          %p187 = scmp.lt.s32.totalorder %s186, 63
          %s188 = scalar_select %p187, %s186, 63
          %s189 = smul.addr %s188, 4
          %s190 = scalar_lea.vmem %s0, %s189
          %s191 = smul.u32 32, %s14
        $region32: #{tpu_custom_call.1} parent=27 // pred_fallthru
          _
        // Predicated region
        $region33: #{tpu_custom_call.1} parent=27 // pred_check
          %p192 = pneg %p60
        $region34: #{tpu_custom_call.1} parent=27 // pred_check_branch
          %194 = sbr.rel (%p192) target = $region36
        $region35: #{tpu_custom_call.1} parent=27 // pred_region
          %s195 = smul.u32 32, %s14
          %p196 = scmp.lt.s32.totalorder %s195, 63
          %s197 = scalar_select %p196, %s195, 63
          %s198 = smul.addr %s197, 4
          %s199 = scalar_lea.vmem %s1, %s198
          %s200 = smul.u32 32, %s14
        $region36: #{tpu_custom_call.1} parent=27 // pred_fallthru
          _
      $region28: #{tpu_custom_call.1} parent=5 // pred_fallthru
        _
      %p201 = scmp.le.s32.totalorder 1, %s14
      %p202 = scmp.lt.s32.totalorder %s14, 3
      %p203 = pnand %p201, %p202
      %p204 = pneg %p203
      // Predicated region
      $region37: #{tpu_custom_call.1} parent=5 // pred_check
        _
      $region38: #{tpu_custom_call.1} parent=5 // pred_check_branch
        %206 = sbr.rel (%p203) target = $region40
      $region39: #{tpu_custom_call.1} parent=5 // pred_region
        %s207 = ssub.s32 %s14, 1
        %s208 = smul.u32 32, %s19
        %p209 = scmp.lt.s32.totalorder %s208, 63
        %s210 = scalar_select %p209, %s208, 63
        %s211 = smul.addr %s210, 4
        %s212 = scalar_lea.vmem %s0, %s211
        %p213 = pneg %p40
        %p214 = pneg %p37
        %s215 = smul.u32 32, %s19
        %p216 = scmp.lt.s32.totalorder %s215, 63
        %s217 = scalar_select %p216, %s215, 63
        %s218 = smul.addr %s217, 4
        %s219 = scalar_lea.vmem %s1, %s218
        %p220 = pneg %p66
        %p221 = pneg %p63
        %p222 = pneg %p87
        %p223 = pneg %p84
        %p224 = pneg %p108
        %p225 = pneg %p105
        %p226 = pneg %p129
        %p227 = pneg %p126
        %p228 = pneg %p155
        %p229 = pneg %p152
        %s230 = sand.u32 %s142, 1
        %s231 = scalar_lea.sflag [#allocation4], %s230
        %s232 = sand.u32 %s142, 1
        %s233 = smul.addr %s232, 128
        %s234 = scalar_lea.vmem [#allocation3], %s233
        %s235 = smul.u32 32, %s19
        %p236 = scmp.lt.s32.totalorder %s235, 63
        %s237 = scalar_select %p236, %s235, 63
        %s238 = smul.addr %s237, 4
        %s239 = scalar_lea.vmem %s0, %s238
        %s240 = smul.u32 32, %s19
        %s241 = smul.u32 32, %s19
        %p242 = scmp.lt.s32.totalorder %s241, 63
        %s243 = scalar_select %p242, %s241, 63
        %s244 = smul.addr %s243, 4
        %s245 = scalar_lea.vmem %s1, %s244
        %s246 = smul.u32 32, %s19
        %s247 = smul.u32 32, %s19
        %v249 = vld [vmem:[%s239] sm:$0xf]
        %v250 = vld [vmem:[%s239 + $0x4] sm:$0xf]
        %v251 = vld [vmem:[%s239 + $0x8] sm:$0xf]
        %v252 = vld [vmem:[%s239 + $0xc] sm:$0xf]
        %v253 = vld [vmem:[%s239 + $0x10] sm:$0xf]
        %v254 = vld [vmem:[%s239 + $0x14] sm:$0xf]
        %v255 = vld [vmem:[%s239 + $0x18] sm:$0xf]
        %v256 = vld [vmem:[%s239 + $0x1c] sm:$0xf]
        %v257 = vld [vmem:[%s239 + $0x20] sm:$0xf]
        %v258 = vld [vmem:[%s239 + $0x24] sm:$0xf]
        %v259 = vld [vmem:[%s239 + $0x28] sm:$0xf]
        %v260 = vld [vmem:[%s239 + $0x2c] sm:$0xf]
        %v261 = vld [vmem:[%s239 + $0x30] sm:$0xf]
        %v262 = vld [vmem:[%s239 + $0x34] sm:$0xf]
        %v263 = vld [vmem:[%s239 + $0x38] sm:$0xf]
        %v264 = vld [vmem:[%s239 + $0x3c] sm:$0xf]
        %v265 = vld [vmem:[%s239 + $0x40] sm:$0xf]
        %v266 = vld [vmem:[%s239 + $0x44] sm:$0xf]
        %v267 = vld [vmem:[%s239 + $0x48] sm:$0xf]
        %v268 = vld [vmem:[%s239 + $0x4c] sm:$0xf]
        %v269 = vld [vmem:[%s239 + $0x50] sm:$0xf]
        %v270 = vld [vmem:[%s239 + $0x54] sm:$0xf]
        %v271 = vld [vmem:[%s239 + $0x58] sm:$0xf]
        %v272 = vld [vmem:[%s239 + $0x5c] sm:$0xf]
        %v273 = vld [vmem:[%s239 + $0x60] sm:$0xf]
        %v274 = vld [vmem:[%s239 + $0x64] sm:$0xf]
        %v275 = vld [vmem:[%s239 + $0x68] sm:$0xf]
        %v276 = vld [vmem:[%s239 + $0x6c] sm:$0xf]
        %v277 = vld [vmem:[%s239 + $0x70] sm:$0xf]
        %v278 = vld [vmem:[%s239 + $0x74] sm:$0xf]
        %v279 = vld [vmem:[%s239 + $0x78] sm:$0xf]
        %v280 = vld [vmem:[%s239 + $0x7c] sm:$0xf]
        %v281 = vld [vmem:[%s245] sm:$0xf]
        %v282 = vld [vmem:[%s245 + $0x4] sm:$0xf]
        %v283 = vld [vmem:[%s245 + $0x8] sm:$0xf]
        %v284 = vld [vmem:[%s245 + $0xc] sm:$0xf]
        %v285 = vld [vmem:[%s245 + $0x10] sm:$0xf]
        %v286 = vld [vmem:[%s245 + $0x14] sm:$0xf]
        %v287 = vld [vmem:[%s245 + $0x18] sm:$0xf]
        %v288 = vld [vmem:[%s245 + $0x1c] sm:$0xf]
        %v289 = vld [vmem:[%s245 + $0x20] sm:$0xf]
        %v290 = vld [vmem:[%s245 + $0x24] sm:$0xf]
        %v291 = vld [vmem:[%s245 + $0x28] sm:$0xf]
        %v292 = vld [vmem:[%s245 + $0x2c] sm:$0xf]
        %v293 = vld [vmem:[%s245 + $0x30] sm:$0xf]
        %v294 = vld [vmem:[%s245 + $0x34] sm:$0xf]
        %v295 = vld [vmem:[%s245 + $0x38] sm:$0xf]
        %v296 = vld [vmem:[%s245 + $0x3c] sm:$0xf]
        %v297 = vld [vmem:[%s245 + $0x40] sm:$0xf]
        %v298 = vld [vmem:[%s245 + $0x44] sm:$0xf]
        %v299 = vld [vmem:[%s245 + $0x48] sm:$0xf]
        %v300 = vld [vmem:[%s245 + $0x4c] sm:$0xf]
        %v301 = vld [vmem:[%s245 + $0x50] sm:$0xf]
        %v302 = vld [vmem:[%s245 + $0x54] sm:$0xf]
        %v303 = vld [vmem:[%s245 + $0x58] sm:$0xf]
        %v304 = vld [vmem:[%s245 + $0x5c] sm:$0xf]
        %v305 = vld [vmem:[%s245 + $0x60] sm:$0xf]
        %v306 = vld [vmem:[%s245 + $0x64] sm:$0xf]
        %v307 = vld [vmem:[%s245 + $0x68] sm:$0xf]
        %v308 = vld [vmem:[%s245 + $0x6c] sm:$0xf]
        %v309 = vld [vmem:[%s245 + $0x70] sm:$0xf]
        %v310 = vld [vmem:[%s245 + $0x74] sm:$0xf]
        %v311 = vld [vmem:[%s245 + $0x78] sm:$0xf]
        %v312 = vld [vmem:[%s245 + $0x7c] sm:$0xf]
        %v313 = vld [vmem:[%s2] sm:$0xff]
        %v314 = vld [vmem:[%s3] sm:$0xff]
        %v315 = vld [vmem:[%s4] sm:$0xf]
        %v316 = vld [vmem:[%s4 + $0x4] sm:$0xf]
        %v317 = vld [vmem:[%s4 + $0x8] sm:$0xf]
        %v318 = vld [vmem:[%s4 + $0xc] sm:$0xf]
        %v319 = vld [vmem:[%s4 + $0x10] sm:$0xf]
        %v320 = vld [vmem:[%s4 + $0x14] sm:$0xf]
        %v321 = vld [vmem:[%s4 + $0x18] sm:$0xf]
        %v322 = vld [vmem:[%s4 + $0x1c] sm:$0xf]
        %v323 = vld [vmem:[%s4 + $0x20] sm:$0xf]
        %v324 = vld [vmem:[%s4 + $0x24] sm:$0xf]
        %v325 = vld [vmem:[%s4 + $0x28] sm:$0xf]
        %v326 = vld [vmem:[%s4 + $0x2c] sm:$0xf]
        %v327 = vld [vmem:[%s4 + $0x30] sm:$0xf]
        %v328 = vld [vmem:[%s4 + $0x34] sm:$0xf]
        %v329 = vld [vmem:[%s4 + $0x38] sm:$0xf]
        %v330 = vld [vmem:[%s4 + $0x3c] sm:$0xf]
        %v331 = vld [vmem:[%s4 + $0x40] sm:$0xf]
        %v332 = vld [vmem:[%s4 + $0x44] sm:$0xf]
        %v333 = vld [vmem:[%s4 + $0x48] sm:$0xf]
        %v334 = vld [vmem:[%s4 + $0x4c] sm:$0xf]
        %v335 = vld [vmem:[%s4 + $0x50] sm:$0xf]
        %v336 = vld [vmem:[%s4 + $0x54] sm:$0xf]
        %v337 = vld [vmem:[%s4 + $0x58] sm:$0xf]
        %v338 = vld [vmem:[%s4 + $0x5c] sm:$0xf]
        %v339 = vld [vmem:[%s4 + $0x60] sm:$0xf]
        %v340 = vld [vmem:[%s4 + $0x64] sm:$0xf]
        %v341 = vld [vmem:[%s4 + $0x68] sm:$0xf]
        %v342 = vld [vmem:[%s4 + $0x6c] sm:$0xf]
        %v343 = vld [vmem:[%s4 + $0x70] sm:$0xf]
        %v344 = vld [vmem:[%s4 + $0x74] sm:$0xf]
        %v345 = vld [vmem:[%s4 + $0x78] sm:$0xf]
        %v346 = vld [vmem:[%s4 + $0x7c] sm:$0xf]
        %v379 = vunpack.c.l.b16 %v249
        %v380 = vunpack.c.l.b16 %v250
        %v381 = vunpack.c.l.b16 %v251
        %v382 = vunpack.c.l.b16 %v252
        %v383 = vunpack.c.l.b16 %v253
        %v384 = vunpack.c.l.b16 %v254
        %v385 = vunpack.c.l.b16 %v255
        %v386 = vunpack.c.l.b16 %v256
        %v387 = vunpack.c.l.b16 %v257
        %v388 = vunpack.c.l.b16 %v258
        %v389 = vunpack.c.l.b16 %v259
        %v390 = vunpack.c.l.b16 %v260
        %v391 = vunpack.c.l.b16 %v261
        %v392 = vunpack.c.l.b16 %v262
        %v393 = vunpack.c.l.b16 %v263
        %v394 = vunpack.c.l.b16 %v264
        %v395 = vunpack.c.l.b16 %v265
        %v396 = vunpack.c.l.b16 %v266
        %v397 = vunpack.c.l.b16 %v267
        %v398 = vunpack.c.l.b16 %v268
        %v399 = vunpack.c.l.b16 %v269
        %v400 = vunpack.c.l.b16 %v270
        %v401 = vunpack.c.l.b16 %v271
        %v402 = vunpack.c.l.b16 %v272
        %v403 = vunpack.c.l.b16 %v273
        %v404 = vunpack.c.l.b16 %v274
        %v405 = vunpack.c.l.b16 %v275
        %v406 = vunpack.c.l.b16 %v276
        %v407 = vunpack.c.l.b16 %v277
        %v408 = vunpack.c.l.b16 %v278
        %v409 = vunpack.c.l.b16 %v279
        %v410 = vunpack.c.l.b16 %v280
        %v411 = vpack.c.b16 %v380, %v379
        %v412 = vpack.c.b16 %v382, %v381
        %v413 = vpack.c.b16 %v384, %v383
        %v414 = vpack.c.b16 %v386, %v385
        %v415 = vpack.c.b16 %v388, %v387
        %v416 = vpack.c.b16 %v390, %v389
        %v417 = vpack.c.b16 %v392, %v391
        %v418 = vpack.c.b16 %v394, %v393
        %v419 = vpack.c.b16 %v396, %v395
        %v420 = vpack.c.b16 %v398, %v397
        %v421 = vpack.c.b16 %v400, %v399
        %v422 = vpack.c.b16 %v402, %v401
        %v423 = vpack.c.b16 %v404, %v403
        %v424 = vpack.c.b16 %v406, %v405
        %v425 = vpack.c.b16 %v408, %v407
        %v426 = vpack.c.b16 %v410, %v409
        %v428 = vunpack.c.l.b16 %v313
        %v429 = vunpack.c.h.b16 %v313
        %v430 = vpack.c.b16 %v428, %v428
        %v431 = vpack.c.b16 %v429, %v429
        %vm432 = vcmask 64512
        %v434 = vsel %vm432, %v411, 0
        %v437 = vsel %vm432, %v412, 0
        %v440 = vsel %vm432, %v413, 0
        %v443 = vsel %vm432, %v414, 0
        %v446 = vsel %vm432, %v415, 0
        %v449 = vsel %vm432, %v416, 0
        %v452 = vsel %vm432, %v417, 0
        %v455 = vsel %vm432, %v418, 0
        %v458 = vsel %vm432, %v419, 0
        %v461 = vsel %vm432, %v420, 0
        %v464 = vsel %vm432, %v421, 0
        %v467 = vsel %vm432, %v422, 0
        %v470 = vsel %vm432, %v423, 0
        %v473 = vsel %vm432, %v424, 0
        %v476 = vsel %vm432, %v425, 0
        %v479 = vsel %vm432, %v426, 0
        %vm481 = vcmask 1043456
        %v483 = vsel %vm481, %v430, 0
        %v486 = vsel %vm481, %v431, 0
        %488 = vmatpush.bf16.msra.mxu0 0
        %489 = vmatpush.bf16.msra.mxu0 0
        %490 = vmatpush.bf16.msra.mxu0 0
        %491 = vmatpush.bf16.msra.mxu0 0
        %492 = vmatpush.bf16.msra.mxu0 0
        %493 = vmatpush.bf16.msra.mxu0 0
        %494 = vmatpush.bf16.msra.mxu0 0
        %495 = vmatpush.bf16.msra.mxu0 %v483
        %496 = vmatmul.bf16.gmra.mxu0 %v434
        %v497 = vpop.f32.mrf.mxu0
        %v498 = vadd.f32 0.0, %v497
        %v499 = vpop.f32.mrf.mxu0
        %v500 = vadd.f32 0.0, %v499
        %501 = vmatmul.bf16.gmra.mxu0 %v437
        %v502 = vpop.f32.mrf.mxu0
        %v503 = vadd.f32 0.0, %v502
        %v504 = vpop.f32.mrf.mxu0
        %v505 = vadd.f32 0.0, %v504
        %506 = vmatmul.bf16.gmra.mxu0 %v440
        %v507 = vpop.f32.mrf.mxu0
        %v508 = vadd.f32 0.0, %v507
        %v509 = vpop.f32.mrf.mxu0
        %v510 = vadd.f32 0.0, %v509
        %511 = vmatmul.bf16.gmra.mxu0 %v443
        %v512 = vpop.f32.mrf.mxu0
        %v513 = vadd.f32 0.0, %v512
        %v514 = vpop.f32.mrf.mxu0
        %v515 = vadd.f32 0.0, %v514
        %516 = vmatmul.bf16.gmra.mxu0 %v446
        %v517 = vpop.f32.mrf.mxu0
        %v518 = vadd.f32 0.0, %v517
        %v519 = vpop.f32.mrf.mxu0
        %v520 = vadd.f32 0.0, %v519
        %521 = vmatmul.bf16.gmra.mxu0 %v449
        %v522 = vpop.f32.mrf.mxu0
        %v523 = vadd.f32 0.0, %v522
        %v524 = vpop.f32.mrf.mxu0
        %v525 = vadd.f32 0.0, %v524
        %526 = vmatmul.bf16.gmra.mxu0 %v452
        %v527 = vpop.f32.mrf.mxu0
        %v528 = vadd.f32 0.0, %v527
        %v529 = vpop.f32.mrf.mxu0
        %v530 = vadd.f32 0.0, %v529
        %531 = vmatmul.bf16.gmra.mxu0 %v455
        %v532 = vpop.f32.mrf.mxu0
        %v533 = vadd.f32 0.0, %v532
        %v534 = vpop.f32.mrf.mxu0
        %v535 = vadd.f32 0.0, %v534
        %536 = vmatmul.bf16.gmra.mxu0 %v458
        %v537 = vpop.f32.mrf.mxu0
        %v538 = vadd.f32 0.0, %v537
        %v539 = vpop.f32.mrf.mxu0
        %v540 = vadd.f32 0.0, %v539
        %541 = vmatmul.bf16.gmra.mxu0 %v461
        %v542 = vpop.f32.mrf.mxu0
        %v543 = vadd.f32 0.0, %v542
        %v544 = vpop.f32.mrf.mxu0
        %v545 = vadd.f32 0.0, %v544
        %546 = vmatmul.bf16.gmra.mxu0 %v464
        %v547 = vpop.f32.mrf.mxu0
        %v548 = vadd.f32 0.0, %v547
        %v549 = vpop.f32.mrf.mxu0
        %v550 = vadd.f32 0.0, %v549
        %551 = vmatmul.bf16.gmra.mxu0 %v467
        %v552 = vpop.f32.mrf.mxu0
        %v553 = vadd.f32 0.0, %v552
        %v554 = vpop.f32.mrf.mxu0
        %v555 = vadd.f32 0.0, %v554
        %556 = vmatmul.bf16.gmra.mxu0 %v470
        %v557 = vpop.f32.mrf.mxu0
        %v558 = vadd.f32 0.0, %v557
        %v559 = vpop.f32.mrf.mxu0
        %v560 = vadd.f32 0.0, %v559
        %561 = vmatmul.bf16.gmra.mxu0 %v473
        %v562 = vpop.f32.mrf.mxu0
        %v563 = vadd.f32 0.0, %v562
        %v564 = vpop.f32.mrf.mxu0
        %v565 = vadd.f32 0.0, %v564
        %566 = vmatmul.bf16.gmra.mxu0 %v476
        %v567 = vpop.f32.mrf.mxu0
        %v568 = vadd.f32 0.0, %v567
        %v569 = vpop.f32.mrf.mxu0
        %v570 = vadd.f32 0.0, %v569
        %571 = vmatmul.bf16.gmra.mxu0 %v479
        %v572 = vpop.f32.mrf.mxu0
        %v573 = vadd.f32 0.0, %v572
        %v574 = vpop.f32.mrf.mxu0
        %v575 = vadd.f32 0.0, %v574
        %576 = vdwg.mxu0
        %577 = vmatpush.bf16.msra.mxu0 0
        %578 = vmatpush.bf16.msra.mxu0 0
        %579 = vmatpush.bf16.msra.mxu0 0
        %580 = vmatpush.bf16.msra.mxu0 0
        %581 = vmatpush.bf16.msra.mxu0 0
        %582 = vmatpush.bf16.msra.mxu0 0
        %583 = vmatpush.bf16.msra.mxu0 0
        %584 = vmatpush.bf16.msra.mxu0 %v486
        %585 = vmatmul.bf16.gmra.mxu0 %v434
        %v586 = vpop.f32.mrf.mxu0
        %v587 = vadd.f32 0.0, %v586
        %v588 = vpop.f32.mrf.mxu0
        %v589 = vadd.f32 0.0, %v588
        %590 = vmatmul.bf16.gmra.mxu0 %v437
        %v591 = vpop.f32.mrf.mxu0
        %v592 = vadd.f32 0.0, %v591
        %v593 = vpop.f32.mrf.mxu0
        %v594 = vadd.f32 0.0, %v593
        %595 = vmatmul.bf16.gmra.mxu0 %v440
        %v596 = vpop.f32.mrf.mxu0
        %v597 = vadd.f32 0.0, %v596
        %v598 = vpop.f32.mrf.mxu0
        %v599 = vadd.f32 0.0, %v598
        %600 = vmatmul.bf16.gmra.mxu0 %v443
        %v601 = vpop.f32.mrf.mxu0
        %v602 = vadd.f32 0.0, %v601
        %v603 = vpop.f32.mrf.mxu0
        %v604 = vadd.f32 0.0, %v603
        %605 = vmatmul.bf16.gmra.mxu0 %v446
        %v606 = vpop.f32.mrf.mxu0
        %v607 = vadd.f32 0.0, %v606
        %v608 = vpop.f32.mrf.mxu0
        %v609 = vadd.f32 0.0, %v608
        %610 = vmatmul.bf16.gmra.mxu0 %v449
        %v611 = vpop.f32.mrf.mxu0
        %v612 = vadd.f32 0.0, %v611
        %v613 = vpop.f32.mrf.mxu0
        %v614 = vadd.f32 0.0, %v613
        %615 = vmatmul.bf16.gmra.mxu0 %v452
        %v616 = vpop.f32.mrf.mxu0
        %v617 = vadd.f32 0.0, %v616
        %v618 = vpop.f32.mrf.mxu0
        %v619 = vadd.f32 0.0, %v618
        %620 = vmatmul.bf16.gmra.mxu0 %v455
        %v621 = vpop.f32.mrf.mxu0
        %v622 = vadd.f32 0.0, %v621
        %v623 = vpop.f32.mrf.mxu0
        %v624 = vadd.f32 0.0, %v623
        %625 = vmatmul.bf16.gmra.mxu0 %v458
        %v626 = vpop.f32.mrf.mxu0
        %v627 = vadd.f32 0.0, %v626
        %v628 = vpop.f32.mrf.mxu0
        %v629 = vadd.f32 0.0, %v628
        %630 = vmatmul.bf16.gmra.mxu0 %v461
        %v631 = vpop.f32.mrf.mxu0
        %v632 = vadd.f32 0.0, %v631
        %v633 = vpop.f32.mrf.mxu0
        %v634 = vadd.f32 0.0, %v633
        %635 = vmatmul.bf16.gmra.mxu0 %v464
        %v636 = vpop.f32.mrf.mxu0
        %v637 = vadd.f32 0.0, %v636
        %v638 = vpop.f32.mrf.mxu0
        %v639 = vadd.f32 0.0, %v638
        %640 = vmatmul.bf16.gmra.mxu0 %v467
        %v641 = vpop.f32.mrf.mxu0
        %v642 = vadd.f32 0.0, %v641
        %v643 = vpop.f32.mrf.mxu0
        %v644 = vadd.f32 0.0, %v643
        %645 = vmatmul.bf16.gmra.mxu0 %v470
        %v646 = vpop.f32.mrf.mxu0
        %v647 = vadd.f32 0.0, %v646
        %v648 = vpop.f32.mrf.mxu0
        %v649 = vadd.f32 0.0, %v648
        %650 = vmatmul.bf16.gmra.mxu0 %v473
        %v651 = vpop.f32.mrf.mxu0
        %v652 = vadd.f32 0.0, %v651
        %v653 = vpop.f32.mrf.mxu0
        %v654 = vadd.f32 0.0, %v653
        %655 = vmatmul.bf16.gmra.mxu0 %v476
        %v656 = vpop.f32.mrf.mxu0
        %v657 = vadd.f32 0.0, %v656
        %v658 = vpop.f32.mrf.mxu0
        %v659 = vadd.f32 0.0, %v658
        %660 = vmatmul.bf16.gmra.mxu0 %v479
        %v661 = vpop.f32.mrf.mxu0
        %v662 = vadd.f32 0.0, %v661
        %v663 = vpop.f32.mrf.mxu0
        %v664 = vadd.f32 0.0, %v663
        %665 = vdwg.mxu0
        %v698 = vunpack.c.l.b16 %v281
        %v699 = vunpack.c.l.b16 %v282
        %v700 = vunpack.c.l.b16 %v283
        %v701 = vunpack.c.l.b16 %v284
        %v702 = vunpack.c.l.b16 %v285
        %v703 = vunpack.c.l.b16 %v286
        %v704 = vunpack.c.l.b16 %v287
        %v705 = vunpack.c.l.b16 %v288
        %v706 = vunpack.c.l.b16 %v289
        %v707 = vunpack.c.l.b16 %v290
        %v708 = vunpack.c.l.b16 %v291
        %v709 = vunpack.c.l.b16 %v292
        %v710 = vunpack.c.l.b16 %v293
        %v711 = vunpack.c.l.b16 %v294
        %v712 = vunpack.c.l.b16 %v295
        %v713 = vunpack.c.l.b16 %v296
        %v714 = vunpack.c.l.b16 %v297
        %v715 = vunpack.c.l.b16 %v298
        %v716 = vunpack.c.l.b16 %v299
        %v717 = vunpack.c.l.b16 %v300
        %v718 = vunpack.c.l.b16 %v301
        %v719 = vunpack.c.l.b16 %v302
        %v720 = vunpack.c.l.b16 %v303
        %v721 = vunpack.c.l.b16 %v304
        %v722 = vunpack.c.l.b16 %v305
        %v723 = vunpack.c.l.b16 %v306
        %v724 = vunpack.c.l.b16 %v307
        %v725 = vunpack.c.l.b16 %v308
        %v726 = vunpack.c.l.b16 %v309
        %v727 = vunpack.c.l.b16 %v310
        %v728 = vunpack.c.l.b16 %v311
        %v729 = vunpack.c.l.b16 %v312
        %v730 = vpack.c.b16 %v699, %v698
        %v731 = vpack.c.b16 %v701, %v700
        %v732 = vpack.c.b16 %v703, %v702
        %v733 = vpack.c.b16 %v705, %v704
        %v734 = vpack.c.b16 %v707, %v706
        %v735 = vpack.c.b16 %v709, %v708
        %v736 = vpack.c.b16 %v711, %v710
        %v737 = vpack.c.b16 %v713, %v712
        %v738 = vpack.c.b16 %v715, %v714
        %v739 = vpack.c.b16 %v717, %v716
        %v740 = vpack.c.b16 %v719, %v718
        %v741 = vpack.c.b16 %v721, %v720
        %v742 = vpack.c.b16 %v723, %v722
        %v743 = vpack.c.b16 %v725, %v724
        %v744 = vpack.c.b16 %v727, %v726
        %v745 = vpack.c.b16 %v729, %v728
        %v747 = vunpack.c.l.b16 %v314
        %v748 = vunpack.c.h.b16 %v314
        %v749 = vpack.c.b16 %v747, %v747
        %v750 = vpack.c.b16 %v748, %v748
        %v752 = vsel %vm432, %v730, 0
        %v755 = vsel %vm432, %v731, 0
        %v758 = vsel %vm432, %v732, 0
        %v761 = vsel %vm432, %v733, 0
        %v764 = vsel %vm432, %v734, 0
        %v767 = vsel %vm432, %v735, 0
        %v770 = vsel %vm432, %v736, 0
        %v773 = vsel %vm432, %v737, 0
        %v776 = vsel %vm432, %v738, 0
        %v779 = vsel %vm432, %v739, 0
        %v782 = vsel %vm432, %v740, 0
        %v785 = vsel %vm432, %v741, 0
        %v788 = vsel %vm432, %v742, 0
        %v791 = vsel %vm432, %v743, 0
        %v794 = vsel %vm432, %v744, 0
        %v797 = vsel %vm432, %v745, 0
        %v800 = vsel %vm481, %v749, 0
        %v803 = vsel %vm481, %v750, 0
        %805 = vmatpush.bf16.msra.mxu0 0
        %806 = vmatpush.bf16.msra.mxu0 0
        %807 = vmatpush.bf16.msra.mxu0 0
        %808 = vmatpush.bf16.msra.mxu0 0
        %809 = vmatpush.bf16.msra.mxu0 0
        %810 = vmatpush.bf16.msra.mxu0 0
        %811 = vmatpush.bf16.msra.mxu0 0
        %812 = vmatpush.bf16.msra.mxu0 %v800
        %813 = vmatmul.bf16.gmra.mxu0 %v752
        %v814 = vpop.f32.mrf.mxu0
        %v815 = vadd.f32 0.0, %v814
        %v816 = vpop.f32.mrf.mxu0
        %v817 = vadd.f32 0.0, %v816
        %818 = vmatmul.bf16.gmra.mxu0 %v755
        %v819 = vpop.f32.mrf.mxu0
        %v820 = vadd.f32 0.0, %v819
        %v821 = vpop.f32.mrf.mxu0
        %v822 = vadd.f32 0.0, %v821
        %823 = vmatmul.bf16.gmra.mxu0 %v758
        %v824 = vpop.f32.mrf.mxu0
        %v825 = vadd.f32 0.0, %v824
        %v826 = vpop.f32.mrf.mxu0
        %v827 = vadd.f32 0.0, %v826
        %828 = vmatmul.bf16.gmra.mxu0 %v761
        %v829 = vpop.f32.mrf.mxu0
        %v830 = vadd.f32 0.0, %v829
        %v831 = vpop.f32.mrf.mxu0
        %v832 = vadd.f32 0.0, %v831
        %833 = vmatmul.bf16.gmra.mxu0 %v764
        %v834 = vpop.f32.mrf.mxu0
        %v835 = vadd.f32 0.0, %v834
        %v836 = vpop.f32.mrf.mxu0
        %v837 = vadd.f32 0.0, %v836
        %838 = vmatmul.bf16.gmra.mxu0 %v767
        %v839 = vpop.f32.mrf.mxu0
        %v840 = vadd.f32 0.0, %v839
        %v841 = vpop.f32.mrf.mxu0
        %v842 = vadd.f32 0.0, %v841
        %843 = vmatmul.bf16.gmra.mxu0 %v770
        %v844 = vpop.f32.mrf.mxu0
        %v845 = vadd.f32 0.0, %v844
        %v846 = vpop.f32.mrf.mxu0
        %v847 = vadd.f32 0.0, %v846
        %848 = vmatmul.bf16.gmra.mxu0 %v773
        %v849 = vpop.f32.mrf.mxu0
        %v850 = vadd.f32 0.0, %v849
        %v851 = vpop.f32.mrf.mxu0
        %v852 = vadd.f32 0.0, %v851
        %853 = vmatmul.bf16.gmra.mxu0 %v776
        %v854 = vpop.f32.mrf.mxu0
        %v855 = vadd.f32 0.0, %v854
        %v856 = vpop.f32.mrf.mxu0
        %v857 = vadd.f32 0.0, %v856
        %858 = vmatmul.bf16.gmra.mxu0 %v779
        %v859 = vpop.f32.mrf.mxu0
        %v860 = vadd.f32 0.0, %v859
        %v861 = vpop.f32.mrf.mxu0
        %v862 = vadd.f32 0.0, %v861
        %863 = vmatmul.bf16.gmra.mxu0 %v782
        %v864 = vpop.f32.mrf.mxu0
        %v865 = vadd.f32 0.0, %v864
        %v866 = vpop.f32.mrf.mxu0
        %v867 = vadd.f32 0.0, %v866
        %868 = vmatmul.bf16.gmra.mxu0 %v785
        %v869 = vpop.f32.mrf.mxu0
        %v870 = vadd.f32 0.0, %v869
        %v871 = vpop.f32.mrf.mxu0
        %v872 = vadd.f32 0.0, %v871
        %873 = vmatmul.bf16.gmra.mxu0 %v788
        %v874 = vpop.f32.mrf.mxu0
        %v875 = vadd.f32 0.0, %v874
        %v876 = vpop.f32.mrf.mxu0
        %v877 = vadd.f32 0.0, %v876
        %878 = vmatmul.bf16.gmra.mxu0 %v791
        %v879 = vpop.f32.mrf.mxu0
        %v880 = vadd.f32 0.0, %v879
        %v881 = vpop.f32.mrf.mxu0
        %v882 = vadd.f32 0.0, %v881
        %883 = vmatmul.bf16.gmra.mxu0 %v794
        %v884 = vpop.f32.mrf.mxu0
        %v885 = vadd.f32 0.0, %v884
        %v886 = vpop.f32.mrf.mxu0
        %v887 = vadd.f32 0.0, %v886
        %888 = vmatmul.bf16.gmra.mxu0 %v797
        %v889 = vpop.f32.mrf.mxu0
        %v890 = vadd.f32 0.0, %v889
        %v891 = vpop.f32.mrf.mxu0
        %v892 = vadd.f32 0.0, %v891
        %893 = vdwg.mxu0
        %894 = vmatpush.bf16.msra.mxu0 0
        %895 = vmatpush.bf16.msra.mxu0 0
        %896 = vmatpush.bf16.msra.mxu0 0
        %897 = vmatpush.bf16.msra.mxu0 0
        %898 = vmatpush.bf16.msra.mxu0 0
        %899 = vmatpush.bf16.msra.mxu0 0
        %900 = vmatpush.bf16.msra.mxu0 0
        %901 = vmatpush.bf16.msra.mxu0 %v803
        %902 = vmatmul.bf16.gmra.mxu0 %v752
        %v903 = vpop.f32.mrf.mxu0
        %v904 = vadd.f32 0.0, %v903
        %v905 = vpop.f32.mrf.mxu0
        %v906 = vadd.f32 0.0, %v905
        %907 = vmatmul.bf16.gmra.mxu0 %v755
        %v908 = vpop.f32.mrf.mxu0
        %v909 = vadd.f32 0.0, %v908
        %v910 = vpop.f32.mrf.mxu0
        %v911 = vadd.f32 0.0, %v910
        %912 = vmatmul.bf16.gmra.mxu0 %v758
        %v913 = vpop.f32.mrf.mxu0
        %v914 = vadd.f32 0.0, %v913
        %v915 = vpop.f32.mrf.mxu0
        %v916 = vadd.f32 0.0, %v915
        %917 = vmatmul.bf16.gmra.mxu0 %v761
        %v918 = vpop.f32.mrf.mxu0
        %v919 = vadd.f32 0.0, %v918
        %v920 = vpop.f32.mrf.mxu0
        %v921 = vadd.f32 0.0, %v920
        %922 = vmatmul.bf16.gmra.mxu0 %v764
        %v923 = vpop.f32.mrf.mxu0
        %v924 = vadd.f32 0.0, %v923
        %v925 = vpop.f32.mrf.mxu0
        %v926 = vadd.f32 0.0, %v925
        %927 = vmatmul.bf16.gmra.mxu0 %v767
        %v928 = vpop.f32.mrf.mxu0
        %v929 = vadd.f32 0.0, %v928
        %v930 = vpop.f32.mrf.mxu0
        %v931 = vadd.f32 0.0, %v930
        %932 = vmatmul.bf16.gmra.mxu0 %v770
        %v933 = vpop.f32.mrf.mxu0
        %v934 = vadd.f32 0.0, %v933
        %v935 = vpop.f32.mrf.mxu0
        %v936 = vadd.f32 0.0, %v935
        %937 = vmatmul.bf16.gmra.mxu0 %v773
        %v938 = vpop.f32.mrf.mxu0
        %v939 = vadd.f32 0.0, %v938
        %v940 = vpop.f32.mrf.mxu0
        %v941 = vadd.f32 0.0, %v940
        %942 = vmatmul.bf16.gmra.mxu0 %v776
        %v943 = vpop.f32.mrf.mxu0
        %v944 = vadd.f32 0.0, %v943
        %v945 = vpop.f32.mrf.mxu0
        %v946 = vadd.f32 0.0, %v945
        %947 = vmatmul.bf16.gmra.mxu0 %v779
        %v948 = vpop.f32.mrf.mxu0
        %v949 = vadd.f32 0.0, %v948
        %v950 = vpop.f32.mrf.mxu0
        %v951 = vadd.f32 0.0, %v950
        %952 = vmatmul.bf16.gmra.mxu0 %v782
        %v953 = vpop.f32.mrf.mxu0
        %v954 = vadd.f32 0.0, %v953
        %v955 = vpop.f32.mrf.mxu0
        %v956 = vadd.f32 0.0, %v955
        %957 = vmatmul.bf16.gmra.mxu0 %v785
        %v958 = vpop.f32.mrf.mxu0
        %v959 = vadd.f32 0.0, %v958
        %v960 = vpop.f32.mrf.mxu0
        %v961 = vadd.f32 0.0, %v960
        %962 = vmatmul.bf16.gmra.mxu0 %v788
        %v963 = vpop.f32.mrf.mxu0
        %v964 = vadd.f32 0.0, %v963
        %v965 = vpop.f32.mrf.mxu0
        %v966 = vadd.f32 0.0, %v965
        %967 = vmatmul.bf16.gmra.mxu0 %v791
        %v968 = vpop.f32.mrf.mxu0
        %v969 = vadd.f32 0.0, %v968
        %v970 = vpop.f32.mrf.mxu0
        %v971 = vadd.f32 0.0, %v970
        %972 = vmatmul.bf16.gmra.mxu0 %v794
        %v973 = vpop.f32.mrf.mxu0
        %v974 = vadd.f32 0.0, %v973
        %v975 = vpop.f32.mrf.mxu0
        %v976 = vadd.f32 0.0, %v975
        %977 = vmatmul.bf16.gmra.mxu0 %v797
        %v978 = vpop.f32.mrf.mxu0
        %v979 = vadd.f32 0.0, %v978
        %v980 = vpop.f32.mrf.mxu0
        %v981 = vadd.f32 0.0, %v980
        %982 = vdwg.mxu0
        %v983 = vmul.f32 %v498, %v815
        %v984 = vmul.f32 %v500, %v817
        %v985 = vmul.f32 %v503, %v820
        %v986 = vmul.f32 %v505, %v822
        %v987 = vmul.f32 %v508, %v825
        %v988 = vmul.f32 %v510, %v827
        %v989 = vmul.f32 %v513, %v830
        %v990 = vmul.f32 %v515, %v832
        %v991 = vmul.f32 %v518, %v835
        %v992 = vmul.f32 %v520, %v837
        %v993 = vmul.f32 %v523, %v840
        %v994 = vmul.f32 %v525, %v842
        %v995 = vmul.f32 %v528, %v845
        %v996 = vmul.f32 %v530, %v847
        %v997 = vmul.f32 %v533, %v850
        %v998 = vmul.f32 %v535, %v852
        %v999 = vmul.f32 %v538, %v855
        %v1000 = vmul.f32 %v540, %v857
        %v1001 = vmul.f32 %v543, %v860
        %v1002 = vmul.f32 %v545, %v862
        %v1003 = vmul.f32 %v548, %v865
        %v1004 = vmul.f32 %v550, %v867
        %v1005 = vmul.f32 %v553, %v870
        %v1006 = vmul.f32 %v555, %v872
        %v1007 = vmul.f32 %v558, %v875
        %v1008 = vmul.f32 %v560, %v877
        %v1009 = vmul.f32 %v563, %v880
        %v1010 = vmul.f32 %v565, %v882
        %v1011 = vmul.f32 %v568, %v885
        %v1012 = vmul.f32 %v570, %v887
        %v1013 = vmul.f32 %v573, %v890
        %v1014 = vmul.f32 %v575, %v892
        %v1015 = vmul.f32 %v587, %v904
        %v1016 = vmul.f32 %v589, %v906
        %v1017 = vmul.f32 %v592, %v909
        %v1018 = vmul.f32 %v594, %v911
        %v1019 = vmul.f32 %v597, %v914
        %v1020 = vmul.f32 %v599, %v916
        %v1021 = vmul.f32 %v602, %v919
        %v1022 = vmul.f32 %v604, %v921
        %v1023 = vmul.f32 %v607, %v924
        %v1024 = vmul.f32 %v609, %v926
        %v1025 = vmul.f32 %v612, %v929
        %v1026 = vmul.f32 %v614, %v931
        %v1027 = vmul.f32 %v617, %v934
        %v1028 = vmul.f32 %v619, %v936
        %v1029 = vmul.f32 %v622, %v939
        %v1030 = vmul.f32 %v624, %v941
        %v1031 = vmul.f32 %v627, %v944
        %v1032 = vmul.f32 %v629, %v946
        %v1033 = vmul.f32 %v632, %v949
        %v1034 = vmul.f32 %v634, %v951
        %v1035 = vmul.f32 %v637, %v954
        %v1036 = vmul.f32 %v639, %v956
        %v1037 = vmul.f32 %v642, %v959
        %v1038 = vmul.f32 %v644, %v961
        %v1039 = vmul.f32 %v647, %v964
        %v1040 = vmul.f32 %v649, %v966
        %v1041 = vmul.f32 %v652, %v969
        %v1042 = vmul.f32 %v654, %v971
        %v1043 = vmul.f32 %v657, %v974
        %v1044 = vmul.f32 %v659, %v976
        %v1045 = vmul.f32 %v662, %v979
        %v1046 = vmul.f32 %v664, %v981
        %v1047 = vsub.f32 %v983, %v1015
        %v1048 = vsub.f32 %v984, %v1016
        %v1049 = vsub.f32 %v985, %v1017
        %v1050 = vsub.f32 %v986, %v1018
        %v1051 = vsub.f32 %v987, %v1019
        %v1052 = vsub.f32 %v988, %v1020
        %v1053 = vsub.f32 %v989, %v1021
        %v1054 = vsub.f32 %v990, %v1022
        %v1055 = vsub.f32 %v991, %v1023
        %v1056 = vsub.f32 %v992, %v1024
        %v1057 = vsub.f32 %v993, %v1025
        %v1058 = vsub.f32 %v994, %v1026
        %v1059 = vsub.f32 %v995, %v1027
        %v1060 = vsub.f32 %v996, %v1028
        %v1061 = vsub.f32 %v997, %v1029
        %v1062 = vsub.f32 %v998, %v1030
        %v1063 = vsub.f32 %v999, %v1031
        %v1064 = vsub.f32 %v1000, %v1032
        %v1065 = vsub.f32 %v1001, %v1033
        %v1066 = vsub.f32 %v1002, %v1034
        %v1067 = vsub.f32 %v1003, %v1035
        %v1068 = vsub.f32 %v1004, %v1036
        %v1069 = vsub.f32 %v1005, %v1037
        %v1070 = vsub.f32 %v1006, %v1038
        %v1071 = vsub.f32 %v1007, %v1039
        %v1072 = vsub.f32 %v1008, %v1040
        %v1073 = vsub.f32 %v1009, %v1041
        %v1074 = vsub.f32 %v1010, %v1042
        %v1075 = vsub.f32 %v1011, %v1043
        %v1076 = vsub.f32 %v1012, %v1044
        %v1077 = vsub.f32 %v1013, %v1045
        %v1078 = vsub.f32 %v1014, %v1046
        %v1079 = vmul.f32 %v498, %v904
        %v1080 = vmul.f32 %v500, %v906
        %v1081 = vmul.f32 %v503, %v909
        %v1082 = vmul.f32 %v505, %v911
        %v1083 = vmul.f32 %v508, %v914
        %v1084 = vmul.f32 %v510, %v916
        %v1085 = vmul.f32 %v513, %v919
        %v1086 = vmul.f32 %v515, %v921
        %v1087 = vmul.f32 %v518, %v924
        %v1088 = vmul.f32 %v520, %v926
        %v1089 = vmul.f32 %v523, %v929
        %v1090 = vmul.f32 %v525, %v931
        %v1091 = vmul.f32 %v528, %v934
        %v1092 = vmul.f32 %v530, %v936
        %v1093 = vmul.f32 %v533, %v939
        %v1094 = vmul.f32 %v535, %v941
        %v1095 = vmul.f32 %v538, %v944
        %v1096 = vmul.f32 %v540, %v946
        %v1097 = vmul.f32 %v543, %v949
        %v1098 = vmul.f32 %v545, %v951
        %v1099 = vmul.f32 %v548, %v954
        %v1100 = vmul.f32 %v550, %v956
        %v1101 = vmul.f32 %v553, %v959
        %v1102 = vmul.f32 %v555, %v961
        %v1103 = vmul.f32 %v558, %v964
        %v1104 = vmul.f32 %v560, %v966
        %v1105 = vmul.f32 %v563, %v969
        %v1106 = vmul.f32 %v565, %v971
        %v1107 = vmul.f32 %v568, %v974
        %v1108 = vmul.f32 %v570, %v976
        %v1109 = vmul.f32 %v573, %v979
        %v1110 = vmul.f32 %v575, %v981
        %v1111 = vmul.f32 %v587, %v815
        %v1112 = vmul.f32 %v589, %v817
        %v1113 = vmul.f32 %v592, %v820
        %v1114 = vmul.f32 %v594, %v822
        %v1115 = vmul.f32 %v597, %v825
        %v1116 = vmul.f32 %v599, %v827
        %v1117 = vmul.f32 %v602, %v830
        %v1118 = vmul.f32 %v604, %v832
        %v1119 = vmul.f32 %v607, %v835
        %v1120 = vmul.f32 %v609, %v837
        %v1121 = vmul.f32 %v612, %v840
        %v1122 = vmul.f32 %v614, %v842
        %v1123 = vmul.f32 %v617, %v845
        %v1124 = vmul.f32 %v619, %v847
        %v1125 = vmul.f32 %v622, %v850
        %v1126 = vmul.f32 %v624, %v852
        %v1127 = vmul.f32 %v627, %v855
        %v1128 = vmul.f32 %v629, %v857
        %v1129 = vmul.f32 %v632, %v860
        %v1130 = vmul.f32 %v634, %v862
        %v1131 = vmul.f32 %v637, %v865
        %v1132 = vmul.f32 %v639, %v867
        %v1133 = vmul.f32 %v642, %v870
        %v1134 = vmul.f32 %v644, %v872
        %v1135 = vmul.f32 %v647, %v875
        %v1136 = vmul.f32 %v649, %v877
        %v1137 = vmul.f32 %v652, %v880
        %v1138 = vmul.f32 %v654, %v882
        %v1139 = vmul.f32 %v657, %v885
        %v1140 = vmul.f32 %v659, %v887
        %v1141 = vmul.f32 %v662, %v890
        %v1142 = vmul.f32 %v664, %v892
        %v1143 = vadd.f32 %v1079, %v1111
        %v1144 = vadd.f32 %v1080, %v1112
        %v1145 = vadd.f32 %v1081, %v1113
        %v1146 = vadd.f32 %v1082, %v1114
        %v1147 = vadd.f32 %v1083, %v1115
        %v1148 = vadd.f32 %v1084, %v1116
        %v1149 = vadd.f32 %v1085, %v1117
        %v1150 = vadd.f32 %v1086, %v1118
        %v1151 = vadd.f32 %v1087, %v1119
        %v1152 = vadd.f32 %v1088, %v1120
        %v1153 = vadd.f32 %v1089, %v1121
        %v1154 = vadd.f32 %v1090, %v1122
        %v1155 = vadd.f32 %v1091, %v1123
        %v1156 = vadd.f32 %v1092, %v1124
        %v1157 = vadd.f32 %v1093, %v1125
        %v1158 = vadd.f32 %v1094, %v1126
        %v1159 = vadd.f32 %v1095, %v1127
        %v1160 = vadd.f32 %v1096, %v1128
        %v1161 = vadd.f32 %v1097, %v1129
        %v1162 = vadd.f32 %v1098, %v1130
        %v1163 = vadd.f32 %v1099, %v1131
        %v1164 = vadd.f32 %v1100, %v1132
        %v1165 = vadd.f32 %v1101, %v1133
        %v1166 = vadd.f32 %v1102, %v1134
        %v1167 = vadd.f32 %v1103, %v1135
        %v1168 = vadd.f32 %v1104, %v1136
        %v1169 = vadd.f32 %v1105, %v1137
        %v1170 = vadd.f32 %v1106, %v1138
        %v1171 = vadd.f32 %v1107, %v1139
        %v1172 = vadd.f32 %v1108, %v1140
        %v1173 = vadd.f32 %v1109, %v1141
        %v1174 = vadd.f32 %v1110, %v1142
        %v1175 = vpack.c.bf16 %v1047, %v1047
        %v1176 = vpack.c.bf16 %v1048, %v1048
        %v1177 = vpack.c.bf16 %v1049, %v1049
        %v1178 = vpack.c.bf16 %v1050, %v1050
        %v1179 = vpack.c.bf16 %v1051, %v1051
        %v1180 = vpack.c.bf16 %v1052, %v1052
        %v1181 = vpack.c.bf16 %v1053, %v1053
        %v1182 = vpack.c.bf16 %v1054, %v1054
        %v1183 = vpack.c.bf16 %v1055, %v1055
        %v1184 = vpack.c.bf16 %v1056, %v1056
        %v1185 = vpack.c.bf16 %v1057, %v1057
        %v1186 = vpack.c.bf16 %v1058, %v1058
        %v1187 = vpack.c.bf16 %v1059, %v1059
        %v1188 = vpack.c.bf16 %v1060, %v1060
        %v1189 = vpack.c.bf16 %v1061, %v1061
        %v1190 = vpack.c.bf16 %v1062, %v1062
        %v1191 = vpack.c.bf16 %v1063, %v1063
        %v1192 = vpack.c.bf16 %v1064, %v1064
        %v1193 = vpack.c.bf16 %v1065, %v1065
        %v1194 = vpack.c.bf16 %v1066, %v1066
        %v1195 = vpack.c.bf16 %v1067, %v1067
        %v1196 = vpack.c.bf16 %v1068, %v1068
        %v1197 = vpack.c.bf16 %v1069, %v1069
        %v1198 = vpack.c.bf16 %v1070, %v1070
        %v1199 = vpack.c.bf16 %v1071, %v1071
        %v1200 = vpack.c.bf16 %v1072, %v1072
        %v1201 = vpack.c.bf16 %v1073, %v1073
        %v1202 = vpack.c.bf16 %v1074, %v1074
        %v1203 = vpack.c.bf16 %v1075, %v1075
        %v1204 = vpack.c.bf16 %v1076, %v1076
        %v1205 = vpack.c.bf16 %v1077, %v1077
        %v1206 = vpack.c.bf16 %v1078, %v1078
        %1207 = vst [vmem:[#allocation2] sm:$0xf] %v1175
        %1208 = vst [vmem:[#allocation2 + $0x8] sm:$0xf] %v1176
        %1209 = vst [vmem:[#allocation2 + $0x10] sm:$0xf] %v1177
        %1210 = vst [vmem:[#allocation2 + $0x18] sm:$0xf] %v1178
        %1211 = vst [vmem:[#allocation2 + $0x20] sm:$0xf] %v1179
        %1212 = vst [vmem:[#allocation2 + $0x28] sm:$0xf] %v1180
        %1213 = vst [vmem:[#allocation2 + $0x30] sm:$0xf] %v1181
        %1214 = vst [vmem:[#allocation2 + $0x38] sm:$0xf] %v1182
        %1215 = vst [vmem:[#allocation2 + $0x40] sm:$0xf] %v1183
        %1216 = vst [vmem:[#allocation2 + $0x48] sm:$0xf] %v1184
        %1217 = vst [vmem:[#allocation2 + $0x50] sm:$0xf] %v1185
        %1218 = vst [vmem:[#allocation2 + $0x58] sm:$0xf] %v1186
        %1219 = vst [vmem:[#allocation2 + $0x60] sm:$0xf] %v1187
        %1220 = vst [vmem:[#allocation2 + $0x68] sm:$0xf] %v1188
        %1221 = vst [vmem:[#allocation2 + $0x70] sm:$0xf] %v1189
        %1222 = vst [vmem:[#allocation2 + $0x78] sm:$0xf] %v1190
        %1223 = vst [vmem:[#allocation2 + $0x80] sm:$0xf] %v1191
        %1224 = vst [vmem:[#allocation2 + $0x88] sm:$0xf] %v1192
        %1225 = vst [vmem:[#allocation2 + $0x90] sm:$0xf] %v1193
        %1226 = vst [vmem:[#allocation2 + $0x98] sm:$0xf] %v1194
        %1227 = vst [vmem:[#allocation2 + $0xa0] sm:$0xf] %v1195
        %1228 = vst [vmem:[#allocation2 + $0xa8] sm:$0xf] %v1196
        %1229 = vst [vmem:[#allocation2 + $0xb0] sm:$0xf] %v1197
        %1230 = vst [vmem:[#allocation2 + $0xb8] sm:$0xf] %v1198
        %1231 = vst [vmem:[#allocation2 + $0xc0] sm:$0xf] %v1199
        %1232 = vst [vmem:[#allocation2 + $0xc8] sm:$0xf] %v1200
        %1233 = vst [vmem:[#allocation2 + $0xd0] sm:$0xf] %v1201
        %1234 = vst [vmem:[#allocation2 + $0xd8] sm:$0xf] %v1202
        %1235 = vst [vmem:[#allocation2 + $0xe0] sm:$0xf] %v1203
        %1236 = vst [vmem:[#allocation2 + $0xe8] sm:$0xf] %v1204
        %1237 = vst [vmem:[#allocation2 + $0xf0] sm:$0xf] %v1205
        %1238 = vst [vmem:[#allocation2 + $0xf8] sm:$0xf] %v1206
        %v1239 = vpack.c.bf16 %v1143, %v1143
        %v1240 = vpack.c.bf16 %v1144, %v1144
        %v1241 = vpack.c.bf16 %v1145, %v1145
        %v1242 = vpack.c.bf16 %v1146, %v1146
        %v1243 = vpack.c.bf16 %v1147, %v1147
        %v1244 = vpack.c.bf16 %v1148, %v1148
        %v1245 = vpack.c.bf16 %v1149, %v1149
        %v1246 = vpack.c.bf16 %v1150, %v1150
        %v1247 = vpack.c.bf16 %v1151, %v1151
        %v1248 = vpack.c.bf16 %v1152, %v1152
        %v1249 = vpack.c.bf16 %v1153, %v1153
        %v1250 = vpack.c.bf16 %v1154, %v1154
        %v1251 = vpack.c.bf16 %v1155, %v1155
        %v1252 = vpack.c.bf16 %v1156, %v1156
        %v1253 = vpack.c.bf16 %v1157, %v1157
        %v1254 = vpack.c.bf16 %v1158, %v1158
        %v1255 = vpack.c.bf16 %v1159, %v1159
        %v1256 = vpack.c.bf16 %v1160, %v1160
        %v1257 = vpack.c.bf16 %v1161, %v1161
        %v1258 = vpack.c.bf16 %v1162, %v1162
        %v1259 = vpack.c.bf16 %v1163, %v1163
        %v1260 = vpack.c.bf16 %v1164, %v1164
        %v1261 = vpack.c.bf16 %v1165, %v1165
        %v1262 = vpack.c.bf16 %v1166, %v1166
        %v1263 = vpack.c.bf16 %v1167, %v1167
        %v1264 = vpack.c.bf16 %v1168, %v1168
        %v1265 = vpack.c.bf16 %v1169, %v1169
        %v1266 = vpack.c.bf16 %v1170, %v1170
        %v1267 = vpack.c.bf16 %v1171, %v1171
        %v1268 = vpack.c.bf16 %v1172, %v1172
        %v1269 = vpack.c.bf16 %v1173, %v1173
        %v1270 = vpack.c.bf16 %v1174, %v1174
        %1271 = vst [vmem:[#allocation2 + $0x4] sm:$0xf] %v1239
        %1272 = vst [vmem:[#allocation2 + $0xc] sm:$0xf] %v1240
        %1273 = vst [vmem:[#allocation2 + $0x14] sm:$0xf] %v1241
        %1274 = vst [vmem:[#allocation2 + $0x1c] sm:$0xf] %v1242
        %1275 = vst [vmem:[#allocation2 + $0x24] sm:$0xf] %v1243
        %1276 = vst [vmem:[#allocation2 + $0x2c] sm:$0xf] %v1244
        %1277 = vst [vmem:[#allocation2 + $0x34] sm:$0xf] %v1245
        %1278 = vst [vmem:[#allocation2 + $0x3c] sm:$0xf] %v1246
        %1279 = vst [vmem:[#allocation2 + $0x44] sm:$0xf] %v1247
        %1280 = vst [vmem:[#allocation2 + $0x4c] sm:$0xf] %v1248
        %1281 = vst [vmem:[#allocation2 + $0x54] sm:$0xf] %v1249
        %1282 = vst [vmem:[#allocation2 + $0x5c] sm:$0xf] %v1250
        %1283 = vst [vmem:[#allocation2 + $0x64] sm:$0xf] %v1251
        %1284 = vst [vmem:[#allocation2 + $0x6c] sm:$0xf] %v1252
        %1285 = vst [vmem:[#allocation2 + $0x74] sm:$0xf] %v1253
        %1286 = vst [vmem:[#allocation2 + $0x7c] sm:$0xf] %v1254
        %1287 = vst [vmem:[#allocation2 + $0x84] sm:$0xf] %v1255
        %1288 = vst [vmem:[#allocation2 + $0x8c] sm:$0xf] %v1256
        %1289 = vst [vmem:[#allocation2 + $0x94] sm:$0xf] %v1257
        %1290 = vst [vmem:[#allocation2 + $0x9c] sm:$0xf] %v1258
        %1291 = vst [vmem:[#allocation2 + $0xa4] sm:$0xf] %v1259
        %1292 = vst [vmem:[#allocation2 + $0xac] sm:$0xf] %v1260
        %1293 = vst [vmem:[#allocation2 + $0xb4] sm:$0xf] %v1261
        %1294 = vst [vmem:[#allocation2 + $0xbc] sm:$0xf] %v1262
        %1295 = vst [vmem:[#allocation2 + $0xc4] sm:$0xf] %v1263
        %1296 = vst [vmem:[#allocation2 + $0xcc] sm:$0xf] %v1264
        %1297 = vst [vmem:[#allocation2 + $0xd4] sm:$0xf] %v1265
        %1298 = vst [vmem:[#allocation2 + $0xdc] sm:$0xf] %v1266
        %1299 = vst [vmem:[#allocation2 + $0xe4] sm:$0xf] %v1267
        %1300 = vst [vmem:[#allocation2 + $0xec] sm:$0xf] %v1268
        %1301 = vst [vmem:[#allocation2 + $0xf4] sm:$0xf] %v1269
        %1302 = vst [vmem:[#allocation2 + $0xfc] sm:$0xf] %v1270
        %v1303 = vld [vmem:[#allocation2] sm:$0xff]
        %v1304 = vld [vmem:[#allocation2 + $0x8] sm:$0xff]
        %v1305 = vld [vmem:[#allocation2 + $0x10] sm:$0xff]
        %v1306 = vld [vmem:[#allocation2 + $0x18] sm:$0xff]
        %v1307 = vld [vmem:[#allocation2 + $0x20] sm:$0xff]
        %v1308 = vld [vmem:[#allocation2 + $0x28] sm:$0xff]
        %v1309 = vld [vmem:[#allocation2 + $0x30] sm:$0xff]
        %v1310 = vld [vmem:[#allocation2 + $0x38] sm:$0xff]
        %v1311 = vld [vmem:[#allocation2 + $0x40] sm:$0xff]
        %v1312 = vld [vmem:[#allocation2 + $0x48] sm:$0xff]
        %v1313 = vld [vmem:[#allocation2 + $0x50] sm:$0xff]
        %v1314 = vld [vmem:[#allocation2 + $0x58] sm:$0xff]
        %v1315 = vld [vmem:[#allocation2 + $0x60] sm:$0xff]
        %v1316 = vld [vmem:[#allocation2 + $0x68] sm:$0xff]
        %v1317 = vld [vmem:[#allocation2 + $0x70] sm:$0xff]
        %v1318 = vld [vmem:[#allocation2 + $0x78] sm:$0xff]
        %v1319 = vld [vmem:[#allocation2 + $0x80] sm:$0xff]
        %v1320 = vld [vmem:[#allocation2 + $0x88] sm:$0xff]
        %v1321 = vld [vmem:[#allocation2 + $0x90] sm:$0xff]
        %v1322 = vld [vmem:[#allocation2 + $0x98] sm:$0xff]
        %v1323 = vld [vmem:[#allocation2 + $0xa0] sm:$0xff]
        %v1324 = vld [vmem:[#allocation2 + $0xa8] sm:$0xff]
        %v1325 = vld [vmem:[#allocation2 + $0xb0] sm:$0xff]
        %v1326 = vld [vmem:[#allocation2 + $0xb8] sm:$0xff]
        %v1327 = vld [vmem:[#allocation2 + $0xc0] sm:$0xff]
        %v1328 = vld [vmem:[#allocation2 + $0xc8] sm:$0xff]
        %v1329 = vld [vmem:[#allocation2 + $0xd0] sm:$0xff]
        %v1330 = vld [vmem:[#allocation2 + $0xd8] sm:$0xff]
        %v1331 = vld [vmem:[#allocation2 + $0xe0] sm:$0xff]
        %v1332 = vld [vmem:[#allocation2 + $0xe8] sm:$0xff]
        %v1333 = vld [vmem:[#allocation2 + $0xf0] sm:$0xff]
        %v1334 = vld [vmem:[#allocation2 + $0xf8] sm:$0xff]
        %v1367 = vunpack.c.l.b16 %v1303
        %v1368 = vunpack.c.h.b16 %v1303
        %v1369 = vunpack.c.l.b16 %v1304
        %v1370 = vunpack.c.h.b16 %v1304
        %v1371 = vunpack.c.l.b16 %v1305
        %v1372 = vunpack.c.h.b16 %v1305
        %v1373 = vunpack.c.l.b16 %v1306
        %v1374 = vunpack.c.h.b16 %v1306
        %v1375 = vunpack.c.l.b16 %v1307
        %v1376 = vunpack.c.h.b16 %v1307
        %v1377 = vunpack.c.l.b16 %v1308
        %v1378 = vunpack.c.h.b16 %v1308
        %v1379 = vunpack.c.l.b16 %v1309
        %v1380 = vunpack.c.h.b16 %v1309
        %v1381 = vunpack.c.l.b16 %v1310
        %v1382 = vunpack.c.h.b16 %v1310
        %v1383 = vunpack.c.l.b16 %v1311
        %v1384 = vunpack.c.h.b16 %v1311
        %v1385 = vunpack.c.l.b16 %v1312
        %v1386 = vunpack.c.h.b16 %v1312
        %v1387 = vunpack.c.l.b16 %v1313
        %v1388 = vunpack.c.h.b16 %v1313
        %v1389 = vunpack.c.l.b16 %v1314
        %v1390 = vunpack.c.h.b16 %v1314
        %v1391 = vunpack.c.l.b16 %v1315
        %v1392 = vunpack.c.h.b16 %v1315
        %v1393 = vunpack.c.l.b16 %v1316
        %v1394 = vunpack.c.h.b16 %v1316
        %v1395 = vunpack.c.l.b16 %v1317
        %v1396 = vunpack.c.h.b16 %v1317
        %v1397 = vunpack.c.l.b16 %v1318
        %v1398 = vunpack.c.h.b16 %v1318
        %v1399 = vunpack.c.l.b16 %v1319
        %v1400 = vunpack.c.h.b16 %v1319
        %v1401 = vunpack.c.l.b16 %v1320
        %v1402 = vunpack.c.h.b16 %v1320
        %v1403 = vunpack.c.l.b16 %v1321
        %v1404 = vunpack.c.h.b16 %v1321
        %v1405 = vunpack.c.l.b16 %v1322
        %v1406 = vunpack.c.h.b16 %v1322
        %v1407 = vunpack.c.l.b16 %v1323
        %v1408 = vunpack.c.h.b16 %v1323
        %v1409 = vunpack.c.l.b16 %v1324
        %v1410 = vunpack.c.h.b16 %v1324
        %v1411 = vunpack.c.l.b16 %v1325
        %v1412 = vunpack.c.h.b16 %v1325
        %v1413 = vunpack.c.l.b16 %v1326
        %v1414 = vunpack.c.h.b16 %v1326
        %v1415 = vunpack.c.l.b16 %v1327
        %v1416 = vunpack.c.h.b16 %v1327
        %v1417 = vunpack.c.l.b16 %v1328
        %v1418 = vunpack.c.h.b16 %v1328
        %v1419 = vunpack.c.l.b16 %v1329
        %v1420 = vunpack.c.h.b16 %v1329
        %v1421 = vunpack.c.l.b16 %v1330
        %v1422 = vunpack.c.h.b16 %v1330
        %v1423 = vunpack.c.l.b16 %v1331
        %v1424 = vunpack.c.h.b16 %v1331
        %v1425 = vunpack.c.l.b16 %v1332
        %v1426 = vunpack.c.h.b16 %v1332
        %v1427 = vunpack.c.l.b16 %v1333
        %v1428 = vunpack.c.h.b16 %v1333
        %v1429 = vunpack.c.l.b16 %v1334
        %v1430 = vunpack.c.h.b16 %v1334
        %v1431 = vpack.c.b16 %v1369, %v1367
        %v1432 = vpack.c.b16 %v1370, %v1368
        %v1433 = vpack.c.b16 %v1373, %v1371
        %v1434 = vpack.c.b16 %v1374, %v1372
        %v1435 = vpack.c.b16 %v1377, %v1375
        %v1436 = vpack.c.b16 %v1378, %v1376
        %v1437 = vpack.c.b16 %v1381, %v1379
        %v1438 = vpack.c.b16 %v1382, %v1380
        %v1439 = vpack.c.b16 %v1385, %v1383
        %v1440 = vpack.c.b16 %v1386, %v1384
        %v1441 = vpack.c.b16 %v1389, %v1387
        %v1442 = vpack.c.b16 %v1390, %v1388
        %v1443 = vpack.c.b16 %v1393, %v1391
        %v1444 = vpack.c.b16 %v1394, %v1392
        %v1445 = vpack.c.b16 %v1397, %v1395
        %v1446 = vpack.c.b16 %v1398, %v1396
        %v1447 = vpack.c.b16 %v1401, %v1399
        %v1448 = vpack.c.b16 %v1402, %v1400
        %v1449 = vpack.c.b16 %v1405, %v1403
        %v1450 = vpack.c.b16 %v1406, %v1404
        %v1451 = vpack.c.b16 %v1409, %v1407
        %v1452 = vpack.c.b16 %v1410, %v1408
        %v1453 = vpack.c.b16 %v1413, %v1411
        %v1454 = vpack.c.b16 %v1414, %v1412
        %v1455 = vpack.c.b16 %v1417, %v1415
        %v1456 = vpack.c.b16 %v1418, %v1416
        %v1457 = vpack.c.b16 %v1421, %v1419
        %v1458 = vpack.c.b16 %v1422, %v1420
        %v1459 = vpack.c.b16 %v1425, %v1423
        %v1460 = vpack.c.b16 %v1426, %v1424
        %v1461 = vpack.c.b16 %v1429, %v1427
        %v1462 = vpack.c.b16 %v1430, %v1428
        %v1527 = vunpack.c.l.b16 %v315
        %v1528 = vunpack.c.l.b16 %v316
        %v1529 = vunpack.c.l.b16 %v317
        %v1530 = vunpack.c.l.b16 %v318
        %v1531 = vunpack.c.l.b16 %v319
        %v1532 = vunpack.c.l.b16 %v320
        %v1533 = vunpack.c.l.b16 %v321
        %v1534 = vunpack.c.l.b16 %v322
        %v1535 = vunpack.c.l.b16 %v323
        %v1536 = vunpack.c.l.b16 %v324
        %v1537 = vunpack.c.l.b16 %v325
        %v1538 = vunpack.c.l.b16 %v326
        %v1539 = vunpack.c.l.b16 %v327
        %v1540 = vunpack.c.l.b16 %v328
        %v1541 = vunpack.c.l.b16 %v329
        %v1542 = vunpack.c.l.b16 %v330
        %v1543 = vunpack.c.l.b16 %v331
        %v1544 = vunpack.c.l.b16 %v332
        %v1545 = vunpack.c.l.b16 %v333
        %v1546 = vunpack.c.l.b16 %v334
        %v1547 = vunpack.c.l.b16 %v335
        %v1548 = vunpack.c.l.b16 %v336
        %v1549 = vunpack.c.l.b16 %v337
        %v1550 = vunpack.c.l.b16 %v338
        %v1551 = vunpack.c.l.b16 %v339
        %v1552 = vunpack.c.l.b16 %v340
        %v1553 = vunpack.c.l.b16 %v341
        %v1554 = vunpack.c.l.b16 %v342
        %v1555 = vunpack.c.l.b16 %v343
        %v1556 = vunpack.c.l.b16 %v344
        %v1557 = vunpack.c.l.b16 %v345
        %v1558 = vunpack.c.l.b16 %v346
        %v1559 = vpack.c.b16 %v1528, %v1527
        %v1560 = vpack.c.b16 %v1530, %v1529
        %v1561 = vpack.c.b16 %v1532, %v1531
        %v1562 = vpack.c.b16 %v1534, %v1533
        %v1563 = vpack.c.b16 %v1536, %v1535
        %v1564 = vpack.c.b16 %v1538, %v1537
        %v1565 = vpack.c.b16 %v1540, %v1539
        %v1566 = vpack.c.b16 %v1542, %v1541
        %v1567 = vpack.c.b16 %v1544, %v1543
        %v1568 = vpack.c.b16 %v1546, %v1545
        %v1569 = vpack.c.b16 %v1548, %v1547
        %v1570 = vpack.c.b16 %v1550, %v1549
        %v1571 = vpack.c.b16 %v1552, %v1551
        %v1572 = vpack.c.b16 %v1554, %v1553
        %v1573 = vpack.c.b16 %v1556, %v1555
        %v1574 = vpack.c.b16 %v1558, %v1557
        %1591 = vmatpush.bf16.msra.mxu0 %v1566
        %1592 = vmatpush.bf16.msra.mxu0 %v1565
        %1593 = vmatpush.bf16.msra.mxu0 %v1564
        %1594 = vmatpush.bf16.msra.mxu0 %v1563
        %1595 = vmatpush.bf16.msra.mxu0 %v1562
        %1596 = vmatpush.bf16.msra.mxu0 %v1561
        %1597 = vmatpush.bf16.msra.mxu0 %v1560
        %1598 = vmatpush.bf16.msra.mxu0 %v1559
        %1599 = vmatmul.bf16.gmra.mxu0 %v1431
        %v1600 = vpop.f32.mrf.mxu0
        %v1601 = vadd.f32 0.0, %v1600
        %v1602 = vpop.f32.mrf.mxu0
        %v1603 = vadd.f32 0.0, %v1602
        %1604 = vmatmul.bf16.gmra.mxu0 %v1433
        %v1605 = vpop.f32.mrf.mxu0
        %v1606 = vadd.f32 0.0, %v1605
        %v1607 = vpop.f32.mrf.mxu0
        %v1608 = vadd.f32 0.0, %v1607
        %1609 = vmatmul.bf16.gmra.mxu0 %v1435
        %v1610 = vpop.f32.mrf.mxu0
        %v1611 = vadd.f32 0.0, %v1610
        %v1612 = vpop.f32.mrf.mxu0
        %v1613 = vadd.f32 0.0, %v1612
        %1614 = vmatmul.bf16.gmra.mxu0 %v1437
        %v1615 = vpop.f32.mrf.mxu0
        %v1616 = vadd.f32 0.0, %v1615
        %v1617 = vpop.f32.mrf.mxu0
        %v1618 = vadd.f32 0.0, %v1617
        %1619 = vmatmul.bf16.gmra.mxu0 %v1439
        %v1620 = vpop.f32.mrf.mxu0
        %v1621 = vadd.f32 0.0, %v1620
        %v1622 = vpop.f32.mrf.mxu0
        %v1623 = vadd.f32 0.0, %v1622
        %1624 = vmatmul.bf16.gmra.mxu0 %v1441
        %v1625 = vpop.f32.mrf.mxu0
        %v1626 = vadd.f32 0.0, %v1625
        %v1627 = vpop.f32.mrf.mxu0
        %v1628 = vadd.f32 0.0, %v1627
        %1629 = vmatmul.bf16.gmra.mxu0 %v1443
        %v1630 = vpop.f32.mrf.mxu0
        %v1631 = vadd.f32 0.0, %v1630
        %v1632 = vpop.f32.mrf.mxu0
        %v1633 = vadd.f32 0.0, %v1632
        %1634 = vmatmul.bf16.gmra.mxu0 %v1445
        %v1635 = vpop.f32.mrf.mxu0
        %v1636 = vadd.f32 0.0, %v1635
        %v1637 = vpop.f32.mrf.mxu0
        %v1638 = vadd.f32 0.0, %v1637
        %1639 = vmatmul.bf16.gmra.mxu0 %v1447
        %v1640 = vpop.f32.mrf.mxu0
        %v1641 = vadd.f32 0.0, %v1640
        %v1642 = vpop.f32.mrf.mxu0
        %v1643 = vadd.f32 0.0, %v1642
        %1644 = vmatmul.bf16.gmra.mxu0 %v1449
        %v1645 = vpop.f32.mrf.mxu0
        %v1646 = vadd.f32 0.0, %v1645
        %v1647 = vpop.f32.mrf.mxu0
        %v1648 = vadd.f32 0.0, %v1647
        %1649 = vmatmul.bf16.gmra.mxu0 %v1451
        %v1650 = vpop.f32.mrf.mxu0
        %v1651 = vadd.f32 0.0, %v1650
        %v1652 = vpop.f32.mrf.mxu0
        %v1653 = vadd.f32 0.0, %v1652
        %1654 = vmatmul.bf16.gmra.mxu0 %v1453
        %v1655 = vpop.f32.mrf.mxu0
        %v1656 = vadd.f32 0.0, %v1655
        %v1657 = vpop.f32.mrf.mxu0
        %v1658 = vadd.f32 0.0, %v1657
        %1659 = vmatmul.bf16.gmra.mxu0 %v1455
        %v1660 = vpop.f32.mrf.mxu0
        %v1661 = vadd.f32 0.0, %v1660
        %v1662 = vpop.f32.mrf.mxu0
        %v1663 = vadd.f32 0.0, %v1662
        %1664 = vmatmul.bf16.gmra.mxu0 %v1457
        %v1665 = vpop.f32.mrf.mxu0
        %v1666 = vadd.f32 0.0, %v1665
        %v1667 = vpop.f32.mrf.mxu0
        %v1668 = vadd.f32 0.0, %v1667
        %1669 = vmatmul.bf16.gmra.mxu0 %v1459
        %v1670 = vpop.f32.mrf.mxu0
        %v1671 = vadd.f32 0.0, %v1670
        %v1672 = vpop.f32.mrf.mxu0
        %v1673 = vadd.f32 0.0, %v1672
        %1674 = vmatmul.bf16.gmra.mxu0 %v1461
        %v1675 = vpop.f32.mrf.mxu0
        %v1676 = vadd.f32 0.0, %v1675
        %v1677 = vpop.f32.mrf.mxu0
        %v1678 = vadd.f32 0.0, %v1677
        %1679 = vdwg.mxu0
        %1680 = vmatpush.bf16.msra.mxu0 %v1574
        %1681 = vmatpush.bf16.msra.mxu0 %v1573
        %1682 = vmatpush.bf16.msra.mxu0 %v1572
        %1683 = vmatpush.bf16.msra.mxu0 %v1571
        %1684 = vmatpush.bf16.msra.mxu0 %v1570
        %1685 = vmatpush.bf16.msra.mxu0 %v1569
        %1686 = vmatpush.bf16.msra.mxu0 %v1568
        %1687 = vmatpush.bf16.msra.mxu0 %v1567
        %1688 = vmatmul.bf16.gmra.mxu0 %v1432
        %v1689 = vpop.f32.mrf.mxu0
        %v1690 = vadd.f32 %v1601, %v1689
        %v1691 = vpop.f32.mrf.mxu0
        %v1692 = vadd.f32 %v1603, %v1691
        %1693 = vmatmul.bf16.gmra.mxu0 %v1434
        %v1694 = vpop.f32.mrf.mxu0
        %v1695 = vadd.f32 %v1606, %v1694
        %v1696 = vpop.f32.mrf.mxu0
        %v1697 = vadd.f32 %v1608, %v1696
        %1698 = vmatmul.bf16.gmra.mxu0 %v1436
        %v1699 = vpop.f32.mrf.mxu0
        %v1700 = vadd.f32 %v1611, %v1699
        %v1701 = vpop.f32.mrf.mxu0
        %v1702 = vadd.f32 %v1613, %v1701
        %1703 = vmatmul.bf16.gmra.mxu0 %v1438
        %v1704 = vpop.f32.mrf.mxu0
        %v1705 = vadd.f32 %v1616, %v1704
        %v1706 = vpop.f32.mrf.mxu0
        %v1707 = vadd.f32 %v1618, %v1706
        %1708 = vmatmul.bf16.gmra.mxu0 %v1440
        %v1709 = vpop.f32.mrf.mxu0
        %v1710 = vadd.f32 %v1621, %v1709
        %v1711 = vpop.f32.mrf.mxu0
        %v1712 = vadd.f32 %v1623, %v1711
        %1713 = vmatmul.bf16.gmra.mxu0 %v1442
        %v1714 = vpop.f32.mrf.mxu0
        %v1715 = vadd.f32 %v1626, %v1714
        %v1716 = vpop.f32.mrf.mxu0
        %v1717 = vadd.f32 %v1628, %v1716
        %1718 = vmatmul.bf16.gmra.mxu0 %v1444
        %v1719 = vpop.f32.mrf.mxu0
        %v1720 = vadd.f32 %v1631, %v1719
        %v1721 = vpop.f32.mrf.mxu0
        %v1722 = vadd.f32 %v1633, %v1721
        %1723 = vmatmul.bf16.gmra.mxu0 %v1446
        %v1724 = vpop.f32.mrf.mxu0
        %v1725 = vadd.f32 %v1636, %v1724
        %v1726 = vpop.f32.mrf.mxu0
        %v1727 = vadd.f32 %v1638, %v1726
        %1728 = vmatmul.bf16.gmra.mxu0 %v1448
        %v1729 = vpop.f32.mrf.mxu0
        %v1730 = vadd.f32 %v1641, %v1729
        %v1731 = vpop.f32.mrf.mxu0
        %v1732 = vadd.f32 %v1643, %v1731
        %1733 = vmatmul.bf16.gmra.mxu0 %v1450
        %v1734 = vpop.f32.mrf.mxu0
        %v1735 = vadd.f32 %v1646, %v1734
        %v1736 = vpop.f32.mrf.mxu0
        %v1737 = vadd.f32 %v1648, %v1736
        %1738 = vmatmul.bf16.gmra.mxu0 %v1452
        %v1739 = vpop.f32.mrf.mxu0
        %v1740 = vadd.f32 %v1651, %v1739
        %v1741 = vpop.f32.mrf.mxu0
        %v1742 = vadd.f32 %v1653, %v1741
        %1743 = vmatmul.bf16.gmra.mxu0 %v1454
        %v1744 = vpop.f32.mrf.mxu0
        %v1745 = vadd.f32 %v1656, %v1744
        %v1746 = vpop.f32.mrf.mxu0
        %v1747 = vadd.f32 %v1658, %v1746
        %1748 = vmatmul.bf16.gmra.mxu0 %v1456
        %v1749 = vpop.f32.mrf.mxu0
        %v1750 = vadd.f32 %v1661, %v1749
        %v1751 = vpop.f32.mrf.mxu0
        %v1752 = vadd.f32 %v1663, %v1751
        %1753 = vmatmul.bf16.gmra.mxu0 %v1458
        %v1754 = vpop.f32.mrf.mxu0
        %v1755 = vadd.f32 %v1666, %v1754
        %v1756 = vpop.f32.mrf.mxu0
        %v1757 = vadd.f32 %v1668, %v1756
        %1758 = vmatmul.bf16.gmra.mxu0 %v1460
        %v1759 = vpop.f32.mrf.mxu0
        %v1760 = vadd.f32 %v1671, %v1759
        %v1761 = vpop.f32.mrf.mxu0
        %v1762 = vadd.f32 %v1673, %v1761
        %1763 = vmatmul.bf16.gmra.mxu0 %v1462
        %v1764 = vpop.f32.mrf.mxu0
        %v1765 = vadd.f32 %v1676, %v1764
        %v1766 = vpop.f32.mrf.mxu0
        %v1767 = vadd.f32 %v1678, %v1766
        %1768 = vdwg.mxu0
        %v1769 = vpack.c.bf16 %v1690, %v1690
        %v1770 = vpack.c.bf16 %v1692, %v1692
        %v1771 = vpack.c.bf16 %v1695, %v1695
        %v1772 = vpack.c.bf16 %v1697, %v1697
        %v1773 = vpack.c.bf16 %v1700, %v1700
        %v1774 = vpack.c.bf16 %v1702, %v1702
        %v1775 = vpack.c.bf16 %v1705, %v1705
        %v1776 = vpack.c.bf16 %v1707, %v1707
        %v1777 = vpack.c.bf16 %v1710, %v1710
        %v1778 = vpack.c.bf16 %v1712, %v1712
        %v1779 = vpack.c.bf16 %v1715, %v1715
        %v1780 = vpack.c.bf16 %v1717, %v1717
        %v1781 = vpack.c.bf16 %v1720, %v1720
        %v1782 = vpack.c.bf16 %v1722, %v1722
        %v1783 = vpack.c.bf16 %v1725, %v1725
        %v1784 = vpack.c.bf16 %v1727, %v1727
        %v1785 = vpack.c.bf16 %v1730, %v1730
        %v1786 = vpack.c.bf16 %v1732, %v1732
        %v1787 = vpack.c.bf16 %v1735, %v1735
        %v1788 = vpack.c.bf16 %v1737, %v1737
        %v1789 = vpack.c.bf16 %v1740, %v1740
        %v1790 = vpack.c.bf16 %v1742, %v1742
        %v1791 = vpack.c.bf16 %v1745, %v1745
        %v1792 = vpack.c.bf16 %v1747, %v1747
        %v1793 = vpack.c.bf16 %v1750, %v1750
        %v1794 = vpack.c.bf16 %v1752, %v1752
        %v1795 = vpack.c.bf16 %v1755, %v1755
        %v1796 = vpack.c.bf16 %v1757, %v1757
        %v1797 = vpack.c.bf16 %v1760, %v1760
        %v1798 = vpack.c.bf16 %v1762, %v1762
        %v1799 = vpack.c.bf16 %v1765, %v1765
        %v1800 = vpack.c.bf16 %v1767, %v1767
        %1801 = vst [vmem:[%s234] sm:$0xf] %v1769
        %1802 = vst [vmem:[%s234 + $0x4] sm:$0xf] %v1770
        %1803 = vst [vmem:[%s234 + $0x8] sm:$0xf] %v1771
        %1804 = vst [vmem:[%s234 + $0xc] sm:$0xf] %v1772
        %1805 = vst [vmem:[%s234 + $0x10] sm:$0xf] %v1773
        %1806 = vst [vmem:[%s234 + $0x14] sm:$0xf] %v1774
        %1807 = vst [vmem:[%s234 + $0x18] sm:$0xf] %v1775
        %1808 = vst [vmem:[%s234 + $0x1c] sm:$0xf] %v1776
        %1809 = vst [vmem:[%s234 + $0x20] sm:$0xf] %v1777
        %1810 = vst [vmem:[%s234 + $0x24] sm:$0xf] %v1778
        %1811 = vst [vmem:[%s234 + $0x28] sm:$0xf] %v1779
        %1812 = vst [vmem:[%s234 + $0x2c] sm:$0xf] %v1780
        %1813 = vst [vmem:[%s234 + $0x30] sm:$0xf] %v1781
        %1814 = vst [vmem:[%s234 + $0x34] sm:$0xf] %v1782
        %1815 = vst [vmem:[%s234 + $0x38] sm:$0xf] %v1783
        %1816 = vst [vmem:[%s234 + $0x3c] sm:$0xf] %v1784
        %1817 = vst [vmem:[%s234 + $0x40] sm:$0xf] %v1785
        %1818 = vst [vmem:[%s234 + $0x44] sm:$0xf] %v1786
        %1819 = vst [vmem:[%s234 + $0x48] sm:$0xf] %v1787
        %1820 = vst [vmem:[%s234 + $0x4c] sm:$0xf] %v1788
        %1821 = vst [vmem:[%s234 + $0x50] sm:$0xf] %v1789
        %1822 = vst [vmem:[%s234 + $0x54] sm:$0xf] %v1790
        %1823 = vst [vmem:[%s234 + $0x58] sm:$0xf] %v1791
        %1824 = vst [vmem:[%s234 + $0x5c] sm:$0xf] %v1792
        %1825 = vst [vmem:[%s234 + $0x60] sm:$0xf] %v1793
        %1826 = vst [vmem:[%s234 + $0x64] sm:$0xf] %v1794
        %1827 = vst [vmem:[%s234 + $0x68] sm:$0xf] %v1795
        %1828 = vst [vmem:[%s234 + $0x6c] sm:$0xf] %v1796
        %1829 = vst [vmem:[%s234 + $0x70] sm:$0xf] %v1797
        %1830 = vst [vmem:[%s234 + $0x74] sm:$0xf] %v1798
        %1831 = vst [vmem:[%s234 + $0x78] sm:$0xf] %v1799
        %1832 = vst [vmem:[%s234 + $0x7c] sm:$0xf] %v1800
        %s1833 = sand.u32 %s142, 1
        %s1834 = scalar_lea.sflag [#allocation4], %s1833
        %s1835 = sand.u32 %s142, 1
        %s1836 = smul.addr %s1835, 128
        %s1837 = scalar_lea.vmem [#allocation3], %s1836
        // Predicated region
        $region41: #{tpu_custom_call.1} parent=39 // pred_check
          %p1838 = pneg %p152
        $region42: #{tpu_custom_call.1} parent=39 // pred_check_branch
          %1840 = sbr.rel (%p1838) target = $region44
        $region43: #{tpu_custom_call.1} parent=39 // pred_region
          %s1841 = smul.u32 32, %s19
          %1843 = vsyncadd %s1834, 0
          %s1844 = smul.addr %s1841, 4
          %s1845 = scalar_lea.hbm %s5, %s1844
          %s1846 = sshll.u32 %s1837, 4
          %s1847 = int_to_ptr.vmem [resolvable:$true] %s1846
          %s1848 = sshll.u32 %s1845, 4
          %s1849 = int_to_ptr.hbm [resolvable:$true] %s1848
          %1854 = dma.vmem_to_hbm [thread:$0]  %s1847, 2048, %s1849, %s1834, 64, 64, 4
        $region44: #{tpu_custom_call.1} parent=39 // pred_fallthru
          _
      $region40: #{tpu_custom_call.1} parent=5 // pred_fallthru
        _
      %p1855 = scmp.le.s32.totalorder 2, %s14
      // Predicated region
      $region45: #{tpu_custom_call.1} parent=5 // pred_check
        %p1856 = pneg %p1855
      $region46: #{tpu_custom_call.1} parent=5 // pred_check_branch
        %1858 = sbr.rel (%p1856) target = $region48
      $region47: #{tpu_custom_call.1} parent=5 // pred_region
        %s1859 = ssub.s32 %s14, 2
        // Predicated region
        $region49: #{tpu_custom_call.1} parent=47 // pred_check
          %p1860 = pneg %p158
        $region50: #{tpu_custom_call.1} parent=47 // pred_check_branch
          %1862 = sbr.rel (%p1860) target = $region52
        $region51: #{tpu_custom_call.1} parent=47 // pred_region
          %s1863 = sand.u32 %s143, 1
          %s1864 = scalar_lea.sflag [#allocation4], %s1863
          %s1865 = sand.u32 %s143, 1
          %s1866 = smul.addr %s1865, 128
          %s1867 = scalar_lea.vmem [#allocation3], %s1866
          %1869 = dma.done %s1864, 2048
        $region52: #{tpu_custom_call.1} parent=47 // pred_fallthru
          _
      $region48: #{tpu_custom_call.1} parent=5 // pred_fallthru
        _
    $region6: #{tpu_custom_call.1} parent=1 // loop_footer
      %s18 = sadd.s32 1, %s14
    $region7: #{tpu_custom_call.1} parent=1 // loop_footer_branch
      %13 = sbr.rel target = $region3
    $region8: #{tpu_custom_call.1} parent=1 // loop_exit
      _
    %1870 = vsyncpa [#allocation4], 1
    %s1871 = scalar_lea.sflag [#allocation4], 1
    %1872 = vsyncpa %s1871, 1

</llo_original>
